<compile_context>
chip_gen: v7x
topology: tpu7x:2x2x1
jax: 0.10.0
libtpu: 0.0.40
codegen_flags: <defaults>
</compile_context>

<pallas_src>
import numpy as np

import jax
import jax.numpy as jnp
from jax.experimental import pallas as pl
from jax.experimental.pallas import tpu as pltpu


_CONV_SPECS = [  # (KH, KW, Cin, Cout, stride)
    (3, 3, 1, 4, 1),
    (3, 3, 4, 16, 2),
    (3, 3, 16, 32, 2),
    (3, 3, 32, 64, 1),
]
_IN_HW = 28              # only spatial size for which the flatten gives 576 features
_FC_IN, _FC_OUT = 576, 10
_BT = 8                  # images per grid step (batch tile)


# --------------------------------------------------------------------------
# One-time host-side parameter packing (off the hot path).
#
# For a tile of `bt` images whose rows are stacked as A[b*H + h, w*Cin + ci],
# each valid conv (W[kh,kw,cin,cout], bias, stride s) becomes
#
#     out = sum_di  R_di @ (A @ M_di)  + bias_row
#     M_di[w*Cin+ci, q*Cout+co] = W[di, w - s*q, ci, co]      (0 outside tap)
#     R_di[b*oh+o,  b'*H+h]     = (b==b') & (h == s*o + di)   (block-diag 0/1)
#     bias_row[0, q*Cout+co]    = bias[co]
#
# so the im2col is implicit and every layer is 6 plain 2-D MXU dots per tile.
# The fc layer is packed in exactly the same 3-tap form, with PyTorch's NCHW
# flatten order (c,h,w) absorbed into the weight permutation.
# --------------------------------------------------------------------------
def pack_params(conv_params, fc_w, fc_b, bt=_BT):
    layers = []
    H = W = _IN_HW
    for (w, b), (kh, kw, cin, cout, s) in zip(conv_params, _CONV_SPECS):
        w_np = np.asarray(w, dtype=np.float32)            # (kh, kw, cin, cout)
        b_np = np.asarray(b, dtype=np.float32)
        oh = (H - kh) // s + 1
        ow = (W - kw) // s + 1

        M = np.zeros((kh, W * cin, ow * cout), np.float32)
        for di in range(kh):
            for dj in range(kw):
                for q in range(ow):
                    col = s * q + dj
                    M[di, col * cin:(col + 1) * cin,
                          q * cout:(q + 1) * cout] = w_np[di, dj]

        R1 = np.zeros((kh, oh, H), np.float32)
        for di in range(kh):
            R1[di, np.arange(oh), s * np.arange(oh) + di] = 1.0
        R = np.stack([np.kron(np.eye(bt, dtype=np.float32), R1[di])
                      for di in range(kh)])               # (kh, bt*oh, bt*H)

        bias_row = np.tile(b_np, ow).reshape(1, ow * cout)
        layers.append((jnp.asarray(M), jnp.asarray(R), jnp.asarray(bias_row)))
        H, W = oh, ow

    # fc as a 3-tap layer.  PyTorch flattens NCHW as f = c*9 + h*3 + w; the
    # in-kernel conv4 layout is [b*3 + h, w*64 + c] -> permute the fc weight.
    cout = _CONV_SPECS[-1][3]                             # 64
    fc_w_np = np.asarray(fc_w, dtype=np.float32)          # (576, 10)
    wfc = fc_w_np.reshape(cout, H, W, _FC_OUT)            # [c, h, w, n]
    wfc = np.transpose(wfc, (1, 2, 0, 3)).reshape(H, W * cout, _FC_OUT)  # (3,192,10)
    Sf = np.zeros((H, bt, bt * H), np.float32)            # Sf[h, b, b*3+h] = 1
    for h in range(H):
        Sf[h, np.arange(bt), H * np.arange(bt) + h] = 1.0
    bfc = np.asarray(fc_b, dtype=np.float32).reshape(1, _FC_OUT)
    layers.append((jnp.asarray(wfc), jnp.asarray(Sf), jnp.asarray(bfc)))
    return tuple(layers)


# --------------------------------------------------------------------------
# The fused kernel: one grid step == one tile of BT images.
# --------------------------------------------------------------------------
def _fused_forward_kernel(x_ref, *refs):
    o_ref = refs[-1]
    params = refs[:-1]                                   # 5 layers x (M, R, bias)

    a = x_ref[...]                                       # (BT*28, 28) stacked rows
    for li in range(5):                                  # 4 convs + fc, same form
        m_ref, r_ref, b_ref = params[3 * li:3 * li + 3]
        acc = b_ref[...]                                 # (1, N): broadcasts over rows
        for di in range(3):                              # unrolled row taps
            x_di = jnp.dot(a, m_ref[di], preferred_element_type=jnp.float32)
            acc = acc + jnp.dot(r_ref[di], x_di, preferred_element_type=jnp.float32)
        a = acc

    # numerically-stable sigmoid (no inf intermediate); tanh uses the EUP slot
    o_ref[...] = 0.5 * (jnp.tanh(0.5 * a) + 1.0)


def _resident_spec(arr):
    nd = arr.ndim
    return pl.BlockSpec(arr.shape, lambda b, _nd=nd: (0,) * _nd)


@jax.jit
def conv_stack_model(x_nchw, packed):
    """Fused forward of ConvStackModel.  x_nchw: (B, 1, 28, 28) float32."""
    B, C, H, W = x_nchw.shape
    assert C == 1 and H == _IN_HW and W == _IN_HW, "model requires (B,1,28,28) input"
    bt = packed[-1][1].shape[1]                          # batch tile baked into Sf

    flat_params = [a for layer in packed for a in layer]

    # Stack image rows on the sublane axis (contiguity-preserving reshape),
    # pad the batch to a multiple of the tile.
    b_pad = -(-B // bt) * bt
    x2 = x_nchw.reshape(B * H, W)
    if b_pad != B:
        x2 = jnp.concatenate(
            [x2, jnp.zeros(((b_pad - B) * H, W), x2.dtype)], axis=0)

    in_specs = [pl.BlockSpec((bt * H, W), lambda b: (b, 0))]
    in_specs += [_resident_spec(a) for a in flat_params]

    out = pl.pallas_call(
        _fused_forward_kernel,
        out_shape=jax.ShapeDtypeStruct((b_pad, _FC_OUT), jnp.float32),
        grid_spec=pltpu.PrefetchScalarGridSpec(
            num_scalar_prefetch=0,
            grid=(b_pad // bt,),
            in_specs=in_specs,
            out_specs=pl.BlockSpec((bt, _FC_OUT), lambda b: (b, 0)),
        ),
        compiler_params=pltpu.CompilerParams(
            dimension_semantics=("parallel",),           # v7x: tiles split across 2 TCs
        ),
    )(x2, *flat_params)

    out = out[:B]
    if B == 1:
        return out.reshape(-1)                           # torch .flatten(start_dim=0) path
    return out


# --------------------------------------------------------------------------
# Synthetic parameters + pure-JAX reference (correctness check).
# --------------------------------------------------------------------------
def init_params(key):
    keys = jax.random.split(key, 2 * len(_CONV_SPECS) + 2)
    conv_params = []
    k = 0
    for (kh, kw, cin, cout, _s) in _CONV_SPECS:
        bound = 1.0 / (kh * kw * cin) ** 0.5
        w = jax.random.uniform(keys[k], (kh, kw, cin, cout), jnp.float32,
                               -bound, bound); k += 1
        b = jax.random.uniform(keys[k], (cout,), jnp.float32,
                               -bound, bound); k += 1
        conv_params.append((w, b))
    bound = 1.0 / _FC_IN ** 0.5
    fc_w = jax.random.uniform(keys[k], (_FC_IN, _FC_OUT), jnp.float32,
                              -bound, bound); k += 1
    fc_b = jax.random.uniform(keys[k], (_FC_OUT,), jnp.float32, -bound, bound)
    return conv_params, fc_w, fc_b


def reference_forward(x_nchw, conv_params, fc_w, fc_b):
    h = jnp.transpose(x_nchw, (0, 2, 3, 1))              # NCHW -> NHWC
    for (w, b), (_, _, _, _, s) in zip(conv_params, _CONV_SPECS):
        h = jax.lax.conv_general_dilated(
            h, w, window_strides=(s, s), padding="VALID",
            dimension_numbers=("NHWC", "HWIO", "NHWC"),
            precision=jax.lax.Precision.HIGHEST) + b
    h = jnp.transpose(h, (0, 3, 1, 2)).reshape(x_nchw.shape[0], -1)   # (B, 576)
    logits = jnp.dot(h, fc_w, precision=jax.lax.Precision.HIGHEST) + fc_b
    return jax.nn.sigmoid(logits)


if __name__ == "__main__":
    key = jax.random.PRNGKey(0)
    k_param, k_x = jax.random.split(key)
    conv_params, fc_w, fc_b = init_params(k_param)
    packed = pack_params(conv_params, fc_w, fc_b)

    # batch=2, single channel, 28x28 (required so the flatten gives 576 features)
    x = jax.random.normal(k_x, (2, 1, 28, 28), jnp.float32)

    out = jax.block_until_ready(conv_stack_model(x, packed))
    assert out.shape == (2, 10), out.shape
    ref = jax.block_until_ready(reference_forward(x, conv_params, fc_w, fc_b))
    max_err = float(jnp.max(jnp.abs(out - ref)))
    assert max_err < 2e-3, f"mismatch vs reference: {max_err}"
    assert bool(jnp.all((out >= 0.0) & (out <= 1.0))), "sigmoid range violated"

    # batch==1 path (torch flattens to a 1-D vector in that case)
    out1 = jax.block_until_ready(conv_stack_model(x[:1], packed))
    assert out1.shape == (10,), out1.shape
    max_err1 = float(jnp.max(jnp.abs(out1 - ref[0])))
    assert max_err1 < 2e-3, f"mismatch vs reference (B=1): {max_err1}"

    print("KERNEL_OK")
</pallas_src>

<mosaic_0001>
module attributes {stable_mosaic.version = 11 : i64} {
  func.func @_fused_forward_kernel(%arg0: i32, %arg1: memref<224x28xf32, #tpu.memory_space<vmem>>, %arg2: memref<3x28x104xf32, #tpu.memory_space<vmem>>, %arg3: memref<3x208x224xf32, #tpu.memory_space<vmem>>, %arg4: memref<1x104xf32, #tpu.memory_space<vmem>>, %arg5: memref<3x104x192xf32, #tpu.memory_space<vmem>>, %arg6: memref<3x96x208xf32, #tpu.memory_space<vmem>>, %arg7: memref<1x192xf32, #tpu.memory_space<vmem>>, %arg8: memref<3x192x160xf32, #tpu.memory_space<vmem>>, %arg9: memref<3x40x96xf32, #tpu.memory_space<vmem>>, %arg10: memref<1x160xf32, #tpu.memory_space<vmem>>, %arg11: memref<3x160x192xf32, #tpu.memory_space<vmem>>, %arg12: memref<3x24x40xf32, #tpu.memory_space<vmem>>, %arg13: memref<1x192xf32, #tpu.memory_space<vmem>>, %arg14: memref<3x192x10xf32, #tpu.memory_space<vmem>>, %arg15: memref<3x8x24xf32, #tpu.memory_space<vmem>>, %arg16: memref<1x10xf32, #tpu.memory_space<vmem>>, %arg17: memref<8x10xf32, #tpu.memory_space<vmem>>) attributes {dimension_semantics = [#tpu.dimension_semantics<parallel>], iteration_bounds = array<i64: 1>, scalar_prefetch = 0 : i64, scratch_operands = 0 : i64, tpu.core_type = #tpu.core_type<tc>, window_params = [{transform_indices = @transform_0, window_bounds = array<i64: 224, 28>}, {pipeline_mode = #tpu.pipeline_mode<synchronous>, transform_indices = @transform_1, window_bounds = array<i64: 3, 28, 104>}, {pipeline_mode = #tpu.pipeline_mode<synchronous>, transform_indices = @transform_2, window_bounds = array<i64: 3, 208, 224>}, {pipeline_mode = #tpu.pipeline_mode<synchronous>, transform_indices = @transform_3, window_bounds = array<i64: 1, 104>}, {pipeline_mode = #tpu.pipeline_mode<synchronous>, transform_indices = @transform_4, window_bounds = array<i64: 3, 104, 192>}, {pipeline_mode = #tpu.pipeline_mode<synchronous>, transform_indices = @transform_5, window_bounds = array<i64: 3, 96, 208>}, {pipeline_mode = #tpu.pipeline_mode<synchronous>, transform_indices = @transform_6, window_bounds = array<i64: 1, 192>}, {pipeline_mode = #tpu.pipeline_mode<synchronous>, transform_indices = @transform_7, window_bounds = array<i64: 3, 192, 160>}, {pipeline_mode = #tpu.pipeline_mode<synchronous>, transform_indices = @transform_8, window_bounds = array<i64: 3, 40, 96>}, {pipeline_mode = #tpu.pipeline_mode<synchronous>, transform_indices = @transform_9, window_bounds = array<i64: 1, 160>}, {pipeline_mode = #tpu.pipeline_mode<synchronous>, transform_indices = @transform_10, window_bounds = array<i64: 3, 160, 192>}, {pipeline_mode = #tpu.pipeline_mode<synchronous>, transform_indices = @transform_11, window_bounds = array<i64: 3, 24, 40>}, {pipeline_mode = #tpu.pipeline_mode<synchronous>, transform_indices = @transform_12, window_bounds = array<i64: 1, 192>}, {pipeline_mode = #tpu.pipeline_mode<synchronous>, transform_indices = @transform_13, window_bounds = array<i64: 3, 192, 10>}, {pipeline_mode = #tpu.pipeline_mode<synchronous>, transform_indices = @transform_14, window_bounds = array<i64: 3, 8, 24>}, {pipeline_mode = #tpu.pipeline_mode<synchronous>, transform_indices = @transform_15, window_bounds = array<i64: 1, 10>}, {transform_indices = @transform_16, window_bounds = array<i64: 8, 10>}]} {
    %c0 = arith.constant 0 : index
    %c0_0 = arith.constant 0 : index
    %0 = vector.load %arg1[%c0, %c0_0] : memref<224x28xf32, #tpu.memory_space<vmem>>, vector<224x28xf32>
    %c0_1 = arith.constant 0 : index
    %c0_2 = arith.constant 0 : index
    %1 = vector.load %arg4[%c0_1, %c0_2] : memref<1x104xf32, #tpu.memory_space<vmem>>, vector<1x104xf32>
    %c0_3 = arith.constant 0 : index
    %c0_4 = arith.constant 0 : index
    %c0_5 = arith.constant 0 : index
    %2 = vector.load %arg2[%c0_3, %c0_4, %c0_5] : memref<3x28x104xf32, #tpu.memory_space<vmem>>, vector<1x28x104xf32>
    %3 = vector.shape_cast %2 : vector<1x28x104xf32> to vector<28x104xf32>
    %cst = arith.constant dense<0.000000e+00> : vector<224x104xf32>
    %4 = tpu.matmul %0, %3, %cst {dimension_numbers = #tpu.dot_dimension_numbers<[1], [0], [0], [1], [0, 0, 1, 1], [], []>} : vector<224x28xf32>, vector<28x104xf32>, vector<224x104xf32> -> vector<224x104xf32>
    %c0_6 = arith.constant 0 : index
    %c0_7 = arith.constant 0 : index
    %c0_8 = arith.constant 0 : index
    %5 = vector.load %arg3[%c0_6, %c0_7, %c0_8] : memref<3x208x224xf32, #tpu.memory_space<vmem>>, vector<1x208x224xf32>
    %6 = vector.shape_cast %5 : vector<1x208x224xf32> to vector<208x224xf32>
    %cst_9 = arith.constant dense<0.000000e+00> : vector<208x104xf32>
    %7 = tpu.matmul %6, %4, %cst_9 {dimension_numbers = #tpu.dot_dimension_numbers<[1], [0], [0], [1], [0, 0, 1, 1], [], []>} : vector<208x224xf32>, vector<224x104xf32>, vector<208x104xf32> -> vector<208x104xf32>
    %8 = vector.broadcast %1 : vector<1x104xf32> to vector<208x104xf32>
    %9 = arith.addf %8, %7 : vector<208x104xf32>
    %c1 = arith.constant 1 : index
    %c0_10 = arith.constant 0 : index
    %c0_11 = arith.constant 0 : index
    %10 = vector.load %arg2[%c1, %c0_10, %c0_11] : memref<3x28x104xf32, #tpu.memory_space<vmem>>, vector<1x28x104xf32>
    %11 = vector.shape_cast %10 : vector<1x28x104xf32> to vector<28x104xf32>
    %cst_12 = arith.constant dense<0.000000e+00> : vector<224x104xf32>
    %12 = tpu.matmul %0, %11, %cst_12 {dimension_numbers = #tpu.dot_dimension_numbers<[1], [0], [0], [1], [0, 0, 1, 1], [], []>} : vector<224x28xf32>, vector<28x104xf32>, vector<224x104xf32> -> vector<224x104xf32>
    %c1_13 = arith.constant 1 : index
    %c0_14 = arith.constant 0 : index
    %c0_15 = arith.constant 0 : index
    %13 = vector.load %arg3[%c1_13, %c0_14, %c0_15] : memref<3x208x224xf32, #tpu.memory_space<vmem>>, vector<1x208x224xf32>
    %14 = vector.shape_cast %13 : vector<1x208x224xf32> to vector<208x224xf32>
    %cst_16 = arith.constant dense<0.000000e+00> : vector<208x104xf32>
    %15 = tpu.matmul %14, %12, %cst_16 {dimension_numbers = #tpu.dot_dimension_numbers<[1], [0], [0], [1], [0, 0, 1, 1], [], []>} : vector<208x224xf32>, vector<224x104xf32>, vector<208x104xf32> -> vector<208x104xf32>
    %16 = arith.addf %9, %15 : vector<208x104xf32>
    %c2 = arith.constant 2 : index
    %c0_17 = arith.constant 0 : index
    %c0_18 = arith.constant 0 : index
    %17 = vector.load %arg2[%c2, %c0_17, %c0_18] : memref<3x28x104xf32, #tpu.memory_space<vmem>>, vector<1x28x104xf32>
    %18 = vector.shape_cast %17 : vector<1x28x104xf32> to vector<28x104xf32>
    %cst_19 = arith.constant dense<0.000000e+00> : vector<224x104xf32>
    %19 = tpu.matmul %0, %18, %cst_19 {dimension_numbers = #tpu.dot_dimension_numbers<[1], [0], [0], [1], [0, 0, 1, 1], [], []>} : vector<224x28xf32>, vector<28x104xf32>, vector<224x104xf32> -> vector<224x104xf32>
    %c2_20 = arith.constant 2 : index
    %c0_21 = arith.constant 0 : index
    %c0_22 = arith.constant 0 : index
    %20 = vector.load %arg3[%c2_20, %c0_21, %c0_22] : memref<3x208x224xf32, #tpu.memory_space<vmem>>, vector<1x208x224xf32>
    %21 = vector.shape_cast %20 : vector<1x208x224xf32> to vector<208x224xf32>
    %cst_23 = arith.constant dense<0.000000e+00> : vector<208x104xf32>
    %22 = tpu.matmul %21, %19, %cst_23 {dimension_numbers = #tpu.dot_dimension_numbers<[1], [0], [0], [1], [0, 0, 1, 1], [], []>} : vector<208x224xf32>, vector<224x104xf32>, vector<208x104xf32> -> vector<208x104xf32>
    %23 = arith.addf %16, %22 : vector<208x104xf32>
    %c0_24 = arith.constant 0 : index
    %c0_25 = arith.constant 0 : index
    %24 = vector.load %arg7[%c0_24, %c0_25] : memref<1x192xf32, #tpu.memory_space<vmem>>, vector<1x192xf32>
    %c0_26 = arith.constant 0 : index
    %c0_27 = arith.constant 0 : index
    %c0_28 = arith.constant 0 : index
    %25 = vector.load %arg5[%c0_26, %c0_27, %c0_28] : memref<3x104x192xf32, #tpu.memory_space<vmem>>, vector<1x104x192xf32>
    %26 = vector.shape_cast %25 : vector<1x104x192xf32> to vector<104x192xf32>
    %cst_29 = arith.constant dense<0.000000e+00> : vector<208x192xf32>
    %27 = tpu.matmul %23, %26, %cst_29 {dimension_numbers = #tpu.dot_dimension_numbers<[1], [0], [0], [1], [0, 0, 1, 1], [], []>} : vector<208x104xf32>, vector<104x192xf32>, vector<208x192xf32> -> vector<208x192xf32>
    %c0_30 = arith.constant 0 : index
    %c0_31 = arith.constant 0 : index
    %c0_32 = arith.constant 0 : index
    %28 = vector.load %arg6[%c0_30, %c0_31, %c0_32] : memref<3x96x208xf32, #tpu.memory_space<vmem>>, vector<1x96x208xf32>
    %29 = vector.shape_cast %28 : vector<1x96x208xf32> to vector<96x208xf32>
    %cst_33 = arith.constant dense<0.000000e+00> : vector<96x192xf32>
    %30 = tpu.matmul %29, %27, %cst_33 {dimension_numbers = #tpu.dot_dimension_numbers<[1], [0], [0], [1], [0, 0, 1, 1], [], []>} : vector<96x208xf32>, vector<208x192xf32>, vector<96x192xf32> -> vector<96x192xf32>
    %31 = vector.broadcast %24 : vector<1x192xf32> to vector<96x192xf32>
    %32 = arith.addf %31, %30 : vector<96x192xf32>
    %c1_34 = arith.constant 1 : index
    %c0_35 = arith.constant 0 : index
    %c0_36 = arith.constant 0 : index
    %33 = vector.load %arg5[%c1_34, %c0_35, %c0_36] : memref<3x104x192xf32, #tpu.memory_space<vmem>>, vector<1x104x192xf32>
    %34 = vector.shape_cast %33 : vector<1x104x192xf32> to vector<104x192xf32>
    %cst_37 = arith.constant dense<0.000000e+00> : vector<208x192xf32>
    %35 = tpu.matmul %23, %34, %cst_37 {dimension_numbers = #tpu.dot_dimension_numbers<[1], [0], [0], [1], [0, 0, 1, 1], [], []>} : vector<208x104xf32>, vector<104x192xf32>, vector<208x192xf32> -> vector<208x192xf32>
    %c1_38 = arith.constant 1 : index
    %c0_39 = arith.constant 0 : index
    %c0_40 = arith.constant 0 : index
    %36 = vector.load %arg6[%c1_38, %c0_39, %c0_40] : memref<3x96x208xf32, #tpu.memory_space<vmem>>, vector<1x96x208xf32>
    %37 = vector.shape_cast %36 : vector<1x96x208xf32> to vector<96x208xf32>
    %cst_41 = arith.constant dense<0.000000e+00> : vector<96x192xf32>
    %38 = tpu.matmul %37, %35, %cst_41 {dimension_numbers = #tpu.dot_dimension_numbers<[1], [0], [0], [1], [0, 0, 1, 1], [], []>} : vector<96x208xf32>, vector<208x192xf32>, vector<96x192xf32> -> vector<96x192xf32>
    %39 = arith.addf %32, %38 : vector<96x192xf32>
    %c2_42 = arith.constant 2 : index
    %c0_43 = arith.constant 0 : index
    %c0_44 = arith.constant 0 : index
    %40 = vector.load %arg5[%c2_42, %c0_43, %c0_44] : memref<3x104x192xf32, #tpu.memory_space<vmem>>, vector<1x104x192xf32>
    %41 = vector.shape_cast %40 : vector<1x104x192xf32> to vector<104x192xf32>
    %cst_45 = arith.constant dense<0.000000e+00> : vector<208x192xf32>
    %42 = tpu.matmul %23, %41, %cst_45 {dimension_numbers = #tpu.dot_dimension_numbers<[1], [0], [0], [1], [0, 0, 1, 1], [], []>} : vector<208x104xf32>, vector<104x192xf32>, vector<208x192xf32> -> vector<208x192xf32>
    %c2_46 = arith.constant 2 : index
    %c0_47 = arith.constant 0 : index
    %c0_48 = arith.constant 0 : index
    %43 = vector.load %arg6[%c2_46, %c0_47, %c0_48] : memref<3x96x208xf32, #tpu.memory_space<vmem>>, vector<1x96x208xf32>
    %44 = vector.shape_cast %43 : vector<1x96x208xf32> to vector<96x208xf32>
    %cst_49 = arith.constant dense<0.000000e+00> : vector<96x192xf32>
    %45 = tpu.matmul %44, %42, %cst_49 {dimension_numbers = #tpu.dot_dimension_numbers<[1], [0], [0], [1], [0, 0, 1, 1], [], []>} : vector<96x208xf32>, vector<208x192xf32>, vector<96x192xf32> -> vector<96x192xf32>
    %46 = arith.addf %39, %45 : vector<96x192xf32>
    %c0_50 = arith.constant 0 : index
    %c0_51 = arith.constant 0 : index
    %47 = vector.load %arg10[%c0_50, %c0_51] : memref<1x160xf32, #tpu.memory_space<vmem>>, vector<1x160xf32>
    %c0_52 = arith.constant 0 : index
    %c0_53 = arith.constant 0 : index
    %c0_54 = arith.constant 0 : index
    %48 = vector.load %arg8[%c0_52, %c0_53, %c0_54] : memref<3x192x160xf32, #tpu.memory_space<vmem>>, vector<1x192x160xf32>
    %49 = vector.shape_cast %48 : vector<1x192x160xf32> to vector<192x160xf32>
    %cst_55 = arith.constant dense<0.000000e+00> : vector<96x160xf32>
    %50 = tpu.matmul %46, %49, %cst_55 {dimension_numbers = #tpu.dot_dimension_numbers<[1], [0], [0], [1], [0, 0, 1, 1], [], []>} : vector<96x192xf32>, vector<192x160xf32>, vector<96x160xf32> -> vector<96x160xf32>
    %c0_56 = arith.constant 0 : index
    %c0_57 = arith.constant 0 : index
    %c0_58 = arith.constant 0 : index
    %51 = vector.load %arg9[%c0_56, %c0_57, %c0_58] : memref<3x40x96xf32, #tpu.memory_space<vmem>>, vector<1x40x96xf32>
    %52 = vector.shape_cast %51 : vector<1x40x96xf32> to vector<40x96xf32>
    %cst_59 = arith.constant dense<0.000000e+00> : vector<40x160xf32>
    %53 = tpu.matmul %52, %50, %cst_59 {dimension_numbers = #tpu.dot_dimension_numbers<[1], [0], [0], [1], [0, 0, 1, 1], [], []>} : vector<40x96xf32>, vector<96x160xf32>, vector<40x160xf32> -> vector<40x160xf32>
    %54 = vector.broadcast %47 : vector<1x160xf32> to vector<40x160xf32>
    %55 = arith.addf %54, %53 : vector<40x160xf32>
    %c1_60 = arith.constant 1 : index
    %c0_61 = arith.constant 0 : index
    %c0_62 = arith.constant 0 : index
    %56 = vector.load %arg8[%c1_60, %c0_61, %c0_62] : memref<3x192x160xf32, #tpu.memory_space<vmem>>, vector<1x192x160xf32>
    %57 = vector.shape_cast %56 : vector<1x192x160xf32> to vector<192x160xf32>
    %cst_63 = arith.constant dense<0.000000e+00> : vector<96x160xf32>
    %58 = tpu.matmul %46, %57, %cst_63 {dimension_numbers = #tpu.dot_dimension_numbers<[1], [0], [0], [1], [0, 0, 1, 1], [], []>} : vector<96x192xf32>, vector<192x160xf32>, vector<96x160xf32> -> vector<96x160xf32>
    %c1_64 = arith.constant 1 : index
    %c0_65 = arith.constant 0 : index
    %c0_66 = arith.constant 0 : index
    %59 = vector.load %arg9[%c1_64, %c0_65, %c0_66] : memref<3x40x96xf32, #tpu.memory_space<vmem>>, vector<1x40x96xf32>
    %60 = vector.shape_cast %59 : vector<1x40x96xf32> to vector<40x96xf32>
    %cst_67 = arith.constant dense<0.000000e+00> : vector<40x160xf32>
    %61 = tpu.matmul %60, %58, %cst_67 {dimension_numbers = #tpu.dot_dimension_numbers<[1], [0], [0], [1], [0, 0, 1, 1], [], []>} : vector<40x96xf32>, vector<96x160xf32>, vector<40x160xf32> -> vector<40x160xf32>
    %62 = arith.addf %55, %61 : vector<40x160xf32>
    %c2_68 = arith.constant 2 : index
    %c0_69 = arith.constant 0 : index
    %c0_70 = arith.constant 0 : index
    %63 = vector.load %arg8[%c2_68, %c0_69, %c0_70] : memref<3x192x160xf32, #tpu.memory_space<vmem>>, vector<1x192x160xf32>
    %64 = vector.shape_cast %63 : vector<1x192x160xf32> to vector<192x160xf32>
    %cst_71 = arith.constant dense<0.000000e+00> : vector<96x160xf32>
    %65 = tpu.matmul %46, %64, %cst_71 {dimension_numbers = #tpu.dot_dimension_numbers<[1], [0], [0], [1], [0, 0, 1, 1], [], []>} : vector<96x192xf32>, vector<192x160xf32>, vector<96x160xf32> -> vector<96x160xf32>
    %c2_72 = arith.constant 2 : index
    %c0_73 = arith.constant 0 : index
    %c0_74 = arith.constant 0 : index
    %66 = vector.load %arg9[%c2_72, %c0_73, %c0_74] : memref<3x40x96xf32, #tpu.memory_space<vmem>>, vector<1x40x96xf32>
    %67 = vector.shape_cast %66 : vector<1x40x96xf32> to vector<40x96xf32>
    %cst_75 = arith.constant dense<0.000000e+00> : vector<40x160xf32>
    %68 = tpu.matmul %67, %65, %cst_75 {dimension_numbers = #tpu.dot_dimension_numbers<[1], [0], [0], [1], [0, 0, 1, 1], [], []>} : vector<40x96xf32>, vector<96x160xf32>, vector<40x160xf32> -> vector<40x160xf32>
    %69 = arith.addf %62, %68 : vector<40x160xf32>
    %c0_76 = arith.constant 0 : index
    %c0_77 = arith.constant 0 : index
    %70 = vector.load %arg13[%c0_76, %c0_77] : memref<1x192xf32, #tpu.memory_space<vmem>>, vector<1x192xf32>
    %c0_78 = arith.constant 0 : index
    %c0_79 = arith.constant 0 : index
    %c0_80 = arith.constant 0 : index
    %71 = vector.load %arg11[%c0_78, %c0_79, %c0_80] : memref<3x160x192xf32, #tpu.memory_space<vmem>>, vector<1x160x192xf32>
    %72 = vector.shape_cast %71 : vector<1x160x192xf32> to vector<160x192xf32>
    %cst_81 = arith.constant dense<0.000000e+00> : vector<40x192xf32>
    %73 = tpu.matmul %69, %72, %cst_81 {dimension_numbers = #tpu.dot_dimension_numbers<[1], [0], [0], [1], [0, 0, 1, 1], [], []>} : vector<40x160xf32>, vector<160x192xf32>, vector<40x192xf32> -> vector<40x192xf32>
    %c0_82 = arith.constant 0 : index
    %c0_83 = arith.constant 0 : index
    %c0_84 = arith.constant 0 : index
    %74 = vector.load %arg12[%c0_82, %c0_83, %c0_84] : memref<3x24x40xf32, #tpu.memory_space<vmem>>, vector<1x24x40xf32>
    %75 = vector.shape_cast %74 : vector<1x24x40xf32> to vector<24x40xf32>
    %cst_85 = arith.constant dense<0.000000e+00> : vector<24x192xf32>
    %76 = tpu.matmul %75, %73, %cst_85 {dimension_numbers = #tpu.dot_dimension_numbers<[1], [0], [0], [1], [0, 0, 1, 1], [], []>} : vector<24x40xf32>, vector<40x192xf32>, vector<24x192xf32> -> vector<24x192xf32>
    %77 = vector.broadcast %70 : vector<1x192xf32> to vector<24x192xf32>
    %78 = arith.addf %77, %76 : vector<24x192xf32>
    %c1_86 = arith.constant 1 : index
    %c0_87 = arith.constant 0 : index
    %c0_88 = arith.constant 0 : index
    %79 = vector.load %arg11[%c1_86, %c0_87, %c0_88] : memref<3x160x192xf32, #tpu.memory_space<vmem>>, vector<1x160x192xf32>
    %80 = vector.shape_cast %79 : vector<1x160x192xf32> to vector<160x192xf32>
    %cst_89 = arith.constant dense<0.000000e+00> : vector<40x192xf32>
    %81 = tpu.matmul %69, %80, %cst_89 {dimension_numbers = #tpu.dot_dimension_numbers<[1], [0], [0], [1], [0, 0, 1, 1], [], []>} : vector<40x160xf32>, vector<160x192xf32>, vector<40x192xf32> -> vector<40x192xf32>
    %c1_90 = arith.constant 1 : index
    %c0_91 = arith.constant 0 : index
    %c0_92 = arith.constant 0 : index
    %82 = vector.load %arg12[%c1_90, %c0_91, %c0_92] : memref<3x24x40xf32, #tpu.memory_space<vmem>>, vector<1x24x40xf32>
    %83 = vector.shape_cast %82 : vector<1x24x40xf32> to vector<24x40xf32>
    %cst_93 = arith.constant dense<0.000000e+00> : vector<24x192xf32>
    %84 = tpu.matmul %83, %81, %cst_93 {dimension_numbers = #tpu.dot_dimension_numbers<[1], [0], [0], [1], [0, 0, 1, 1], [], []>} : vector<24x40xf32>, vector<40x192xf32>, vector<24x192xf32> -> vector<24x192xf32>
    %85 = arith.addf %78, %84 : vector<24x192xf32>
    %c2_94 = arith.constant 2 : index
    %c0_95 = arith.constant 0 : index
    %c0_96 = arith.constant 0 : index
    %86 = vector.load %arg11[%c2_94, %c0_95, %c0_96] : memref<3x160x192xf32, #tpu.memory_space<vmem>>, vector<1x160x192xf32>
    %87 = vector.shape_cast %86 : vector<1x160x192xf32> to vector<160x192xf32>
    %cst_97 = arith.constant dense<0.000000e+00> : vector<40x192xf32>
    %88 = tpu.matmul %69, %87, %cst_97 {dimension_numbers = #tpu.dot_dimension_numbers<[1], [0], [0], [1], [0, 0, 1, 1], [], []>} : vector<40x160xf32>, vector<160x192xf32>, vector<40x192xf32> -> vector<40x192xf32>
    %c2_98 = arith.constant 2 : index
    %c0_99 = arith.constant 0 : index
    %c0_100 = arith.constant 0 : index
    %89 = vector.load %arg12[%c2_98, %c0_99, %c0_100] : memref<3x24x40xf32, #tpu.memory_space<vmem>>, vector<1x24x40xf32>
    %90 = vector.shape_cast %89 : vector<1x24x40xf32> to vector<24x40xf32>
    %cst_101 = arith.constant dense<0.000000e+00> : vector<24x192xf32>
    %91 = tpu.matmul %90, %88, %cst_101 {dimension_numbers = #tpu.dot_dimension_numbers<[1], [0], [0], [1], [0, 0, 1, 1], [], []>} : vector<24x40xf32>, vector<40x192xf32>, vector<24x192xf32> -> vector<24x192xf32>
    %92 = arith.addf %85, %91 : vector<24x192xf32>
    %c0_102 = arith.constant 0 : index
    %c0_103 = arith.constant 0 : index
    %93 = vector.load %arg16[%c0_102, %c0_103] : memref<1x10xf32, #tpu.memory_space<vmem>>, vector<1x10xf32>
    %c0_104 = arith.constant 0 : index
    %c0_105 = arith.constant 0 : index
    %c0_106 = arith.constant 0 : index
    %94 = vector.load %arg14[%c0_104, %c0_105, %c0_106] : memref<3x192x10xf32, #tpu.memory_space<vmem>>, vector<1x192x10xf32>
    %95 = vector.shape_cast %94 : vector<1x192x10xf32> to vector<192x10xf32>
    %cst_107 = arith.constant dense<0.000000e+00> : vector<24x10xf32>
    %96 = tpu.matmul %92, %95, %cst_107 {dimension_numbers = #tpu.dot_dimension_numbers<[1], [0], [0], [1], [0, 0, 1, 1], [], []>} : vector<24x192xf32>, vector<192x10xf32>, vector<24x10xf32> -> vector<24x10xf32>
    %c0_108 = arith.constant 0 : index
    %c0_109 = arith.constant 0 : index
    %c0_110 = arith.constant 0 : index
    %97 = vector.load %arg15[%c0_108, %c0_109, %c0_110] : memref<3x8x24xf32, #tpu.memory_space<vmem>>, vector<1x8x24xf32>
    %98 = vector.shape_cast %97 : vector<1x8x24xf32> to vector<8x24xf32>
    %cst_111 = arith.constant dense<0.000000e+00> : vector<8x10xf32>
    %99 = tpu.matmul %98, %96, %cst_111 {dimension_numbers = #tpu.dot_dimension_numbers<[1], [0], [0], [1], [0, 0, 1, 1], [], []>} : vector<8x24xf32>, vector<24x10xf32>, vector<8x10xf32> -> vector<8x10xf32>
    %100 = vector.broadcast %93 : vector<1x10xf32> to vector<8x10xf32>
    %101 = arith.addf %100, %99 : vector<8x10xf32>
    %c1_112 = arith.constant 1 : index
    %c0_113 = arith.constant 0 : index
    %c0_114 = arith.constant 0 : index
    %102 = vector.load %arg14[%c1_112, %c0_113, %c0_114] : memref<3x192x10xf32, #tpu.memory_space<vmem>>, vector<1x192x10xf32>
    %103 = vector.shape_cast %102 : vector<1x192x10xf32> to vector<192x10xf32>
    %cst_115 = arith.constant dense<0.000000e+00> : vector<24x10xf32>
    %104 = tpu.matmul %92, %103, %cst_115 {dimension_numbers = #tpu.dot_dimension_numbers<[1], [0], [0], [1], [0, 0, 1, 1], [], []>} : vector<24x192xf32>, vector<192x10xf32>, vector<24x10xf32> -> vector<24x10xf32>
    %c1_116 = arith.constant 1 : index
    %c0_117 = arith.constant 0 : index
    %c0_118 = arith.constant 0 : index
    %105 = vector.load %arg15[%c1_116, %c0_117, %c0_118] : memref<3x8x24xf32, #tpu.memory_space<vmem>>, vector<1x8x24xf32>
    %106 = vector.shape_cast %105 : vector<1x8x24xf32> to vector<8x24xf32>
    %cst_119 = arith.constant dense<0.000000e+00> : vector<8x10xf32>
    %107 = tpu.matmul %106, %104, %cst_119 {dimension_numbers = #tpu.dot_dimension_numbers<[1], [0], [0], [1], [0, 0, 1, 1], [], []>} : vector<8x24xf32>, vector<24x10xf32>, vector<8x10xf32> -> vector<8x10xf32>
    %108 = arith.addf %101, %107 : vector<8x10xf32>
    %c2_120 = arith.constant 2 : index
    %c0_121 = arith.constant 0 : index
    %c0_122 = arith.constant 0 : index
    %109 = vector.load %arg14[%c2_120, %c0_121, %c0_122] : memref<3x192x10xf32, #tpu.memory_space<vmem>>, vector<1x192x10xf32>
    %110 = vector.shape_cast %109 : vector<1x192x10xf32> to vector<192x10xf32>
    %cst_123 = arith.constant dense<0.000000e+00> : vector<24x10xf32>
    %111 = tpu.matmul %92, %110, %cst_123 {dimension_numbers = #tpu.dot_dimension_numbers<[1], [0], [0], [1], [0, 0, 1, 1], [], []>} : vector<24x192xf32>, vector<192x10xf32>, vector<24x10xf32> -> vector<24x10xf32>
    %c2_124 = arith.constant 2 : index
    %c0_125 = arith.constant 0 : index
    %c0_126 = arith.constant 0 : index
    %112 = vector.load %arg15[%c2_124, %c0_125, %c0_126] : memref<3x8x24xf32, #tpu.memory_space<vmem>>, vector<1x8x24xf32>
    %113 = vector.shape_cast %112 : vector<1x8x24xf32> to vector<8x24xf32>
    %cst_127 = arith.constant dense<0.000000e+00> : vector<8x10xf32>
    %114 = tpu.matmul %113, %111, %cst_127 {dimension_numbers = #tpu.dot_dimension_numbers<[1], [0], [0], [1], [0, 0, 1, 1], [], []>} : vector<8x24xf32>, vector<24x10xf32>, vector<8x10xf32> -> vector<8x10xf32>
    %115 = arith.addf %108, %114 : vector<8x10xf32>
    %cst_128 = arith.constant 5.000000e-01 : f32
    %116 = vector.broadcast %cst_128 : f32 to vector<8x10xf32>
    %117 = arith.mulf %116, %115 : vector<8x10xf32>
    %118 = math.tanh %117 : vector<8x10xf32>
    %cst_129 = arith.constant 1.000000e+00 : f32
    %119 = vector.broadcast %cst_129 : f32 to vector<8x10xf32>
    %120 = arith.addf %118, %119 : vector<8x10xf32>
    %cst_130 = arith.constant 5.000000e-01 : f32
    %121 = vector.broadcast %cst_130 : f32 to vector<8x10xf32>
    %122 = arith.mulf %121, %120 : vector<8x10xf32>
    %c0_131 = arith.constant 0 : index
    %c0_132 = arith.constant 0 : index
    %123 = vector.load %arg17[%c0_131, %c0_132] : memref<8x10xf32, #tpu.memory_space<vmem>>, vector<8x10xf32>
    tpu.vector_store %arg17[%c0_131, %c0_132], %122 {strides = array<i32>} : memref<8x10xf32, #tpu.memory_space<vmem>>, vector<8x10xf32>,
    return
  }
  func.func @transform_0(%arg0: i32) -> (i32, i32) {
    %c0_i32 = arith.constant 0 : i32
    %c0_i32_0 = arith.constant 0 : i32
    return %arg0, %c0_i32 : i32, i32
  }
  func.func @transform_1(%arg0: i32) -> (i32, i32, i32) {
    %c0_i32 = arith.constant 0 : i32
    %c0_i32_0 = arith.constant 0 : i32
    %c0_i32_1 = arith.constant 0 : i32
    %c0_i32_2 = arith.constant 0 : i32
    return %c0_i32, %c0_i32_0, %c0_i32_1 : i32, i32, i32
  }
  func.func @transform_2(%arg0: i32) -> (i32, i32, i32) {
    %c0_i32 = arith.constant 0 : i32
    %c0_i32_0 = arith.constant 0 : i32
    %c0_i32_1 = arith.constant 0 : i32
    %c0_i32_2 = arith.constant 0 : i32
    return %c0_i32, %c0_i32_0, %c0_i32_1 : i32, i32, i32
  }
  func.func @transform_3(%arg0: i32) -> (i32, i32) {
    %c0_i32 = arith.constant 0 : i32
    %c0_i32_0 = arith.constant 0 : i32
    %c0_i32_1 = arith.constant 0 : i32
    return %c0_i32, %c0_i32_0 : i32, i32
  }
  func.func @transform_4(%arg0: i32) -> (i32, i32, i32) {
    %c0_i32 = arith.constant 0 : i32
    %c0_i32_0 = arith.constant 0 : i32
    %c0_i32_1 = arith.constant 0 : i32
    %c0_i32_2 = arith.constant 0 : i32
    return %c0_i32, %c0_i32_0, %c0_i32_1 : i32, i32, i32
  }
  func.func @transform_5(%arg0: i32) -> (i32, i32, i32) {
    %c0_i32 = arith.constant 0 : i32
    %c0_i32_0 = arith.constant 0 : i32
    %c0_i32_1 = arith.constant 0 : i32
    %c0_i32_2 = arith.constant 0 : i32
    return %c0_i32, %c0_i32_0, %c0_i32_1 : i32, i32, i32
  }
  func.func @transform_6(%arg0: i32) -> (i32, i32) {
    %c0_i32 = arith.constant 0 : i32
    %c0_i32_0 = arith.constant 0 : i32
    %c0_i32_1 = arith.constant 0 : i32
    return %c0_i32, %c0_i32_0 : i32, i32
  }
  func.func @transform_7(%arg0: i32) -> (i32, i32, i32) {
    %c0_i32 = arith.constant 0 : i32
    %c0_i32_0 = arith.constant 0 : i32
    %c0_i32_1 = arith.constant 0 : i32
    %c0_i32_2 = arith.constant 0 : i32
    return %c0_i32, %c0_i32_0, %c0_i32_1 : i32, i32, i32
  }
  func.func @transform_8(%arg0: i32) -> (i32, i32, i32) {
    %c0_i32 = arith.constant 0 : i32
    %c0_i32_0 = arith.constant 0 : i32
    %c0_i32_1 = arith.constant 0 : i32
    %c0_i32_2 = arith.constant 0 : i32
    return %c0_i32, %c0_i32_0, %c0_i32_1 : i32, i32, i32
  }
  func.func @transform_9(%arg0: i32) -> (i32, i32) {
    %c0_i32 = arith.constant 0 : i32
    %c0_i32_0 = arith.constant 0 : i32
    %c0_i32_1 = arith.constant 0 : i32
    return %c0_i32, %c0_i32_0 : i32, i32
  }
  func.func @transform_10(%arg0: i32) -> (i32, i32, i32) {
    %c0_i32 = arith.constant 0 : i32
    %c0_i32_0 = arith.constant 0 : i32
    %c0_i32_1 = arith.constant 0 : i32
    %c0_i32_2 = arith.constant 0 : i32
    return %c0_i32, %c0_i32_0, %c0_i32_1 : i32, i32, i32
  }
  func.func @transform_11(%arg0: i32) -> (i32, i32, i32) {
    %c0_i32 = arith.constant 0 : i32
    %c0_i32_0 = arith.constant 0 : i32
    %c0_i32_1 = arith.constant 0 : i32
    %c0_i32_2 = arith.constant 0 : i32
    return %c0_i32, %c0_i32_0, %c0_i32_1 : i32, i32, i32
  }
  func.func @transform_12(%arg0: i32) -> (i32, i32) {
    %c0_i32 = arith.constant 0 : i32
    %c0_i32_0 = arith.constant 0 : i32
    %c0_i32_1 = arith.constant 0 : i32
    return %c0_i32, %c0_i32_0 : i32, i32
  }
  func.func @transform_13(%arg0: i32) -> (i32, i32, i32) {
    %c0_i32 = arith.constant 0 : i32
    %c0_i32_0 = arith.constant 0 : i32
    %c0_i32_1 = arith.constant 0 : i32
    %c0_i32_2 = arith.constant 0 : i32
    return %c0_i32, %c0_i32_0, %c0_i32_1 : i32, i32, i32
  }
  func.func @transform_14(%arg0: i32) -> (i32, i32, i32) {
    %c0_i32 = arith.constant 0 : i32
    %c0_i32_0 = arith.constant 0 : i32
    %c0_i32_1 = arith.constant 0 : i32
    %c0_i32_2 = arith.constant 0 : i32
    return %c0_i32, %c0_i32_0, %c0_i32_1 : i32, i32, i32
  }
  func.func @transform_15(%arg0: i32) -> (i32, i32) {
    %c0_i32 = arith.constant 0 : i32
    %c0_i32_0 = arith.constant 0 : i32
    %c0_i32_1 = arith.constant 0 : i32
    return %c0_i32, %c0_i32_0 : i32, i32
  }
  func.func @transform_16(%arg0: i32) -> (i32, i32) {
    %c0_i32 = arith.constant 0 : i32
    %c0_i32_0 = arith.constant 0 : i32
    return %arg0, %c0_i32 : i32, i32
  }
}

</mosaic_0001>

<llo_original>
// kernel: conv_stack_model.1
$region0: #{conv_stack_model.1}
  #allocation0 [shape = 'u32[]', space=smem, size = 0x4, offset = 0x4, fixed_abs, tag = 'smem constant byte address 0x4 - core index']
  #allocation1 [shape = 'u32[144,128]{1,0:T(1,128)}', space=vmem, size = 0x12000, scoped, tag = 'internal scratch']
  %s0 = inlined_call_operand.vmem [shape: f32[224,28], index: 0, kind: input, shape index: {}]
  %s1 = inlined_call_operand.vmem [shape: f32[3,28,104], index: 1, kind: input, shape index: {}]
  %s2 = inlined_call_operand.vmem [shape: f32[3,208,224], index: 2, kind: input, shape index: {}]
  %s3 = inlined_call_operand.vmem [shape: f32[1,104], index: 3, kind: input, shape index: {}]
  %s4 = inlined_call_operand.vmem [shape: f32[3,104,192], index: 4, kind: input, shape index: {}]
  %s5 = inlined_call_operand.hbm [shape: f32[3,96,208], index: 5, kind: input, shape index: {}]
  %s6 = inlined_call_operand.vmem [shape: f32[1,192], index: 6, kind: input, shape index: {}]
  %s7 = inlined_call_operand.vmem [shape: f32[3,192,160], index: 7, kind: input, shape index: {}]
  %s8 = inlined_call_operand.vmem [shape: f32[3,40,96], index: 8, kind: input, shape index: {}]
  %s9 = inlined_call_operand.vmem [shape: f32[1,160], index: 9, kind: input, shape index: {}]
  %s10 = inlined_call_operand.vmem [shape: f32[3,160,192], index: 10, kind: input, shape index: {}]
  %s11 = inlined_call_operand.vmem [shape: f32[3,24,40], index: 11, kind: input, shape index: {}]
  %s12 = inlined_call_operand.vmem [shape: f32[1,192], index: 12, kind: input, shape index: {}]
  %s13 = inlined_call_operand.vmem [shape: f32[3,192,10], index: 13, kind: input, shape index: {}]
  %s14 = inlined_call_operand.vmem [shape: f32[3,8,24], index: 14, kind: input, shape index: {}]
  %s15 = inlined_call_operand.vmem [shape: f32[1,10], index: 15, kind: input, shape index: {}]
  %s16 = inlined_call_operand.vmem [shape: f32[8,10], index: 16, kind: output, shape index: {}]
  %s17 = sld [smem:[#allocation0]]
  $region78: #{conv_stack_model.1} parent=0
    _
  %s19 = ssub.s32 1, %s17
  %s20 = scalar_select 0, %s19, %s17
  $region1: #{conv_stack_model.1} parent=0
    #allocation2 [shape = 'u8[294912]{0}', space=vmem, size = 0x48000, scoped, tag = 'input window, operand 5, single buffered']
    #allocation3 [shape = 's32[1]{0}', space=sflag, size = 0x4, scoped, tag = 'scoped memory for conv_stack_model.1']
    %21 = vsyncpa [#allocation3], 0
    // Predicated region
    $region2: #{conv_stack_model.1} parent=1 // pred_check
      _
    $region3: #{conv_stack_model.1} parent=1 // pred_check_branch
      %23 = sbr.rel (0) target = $region5
    $region4: #{conv_stack_model.1} parent=1 // pred_region
      _
    $region5: #{conv_stack_model.1} parent=1 // pred_fallthru
      _
    // Predicated region
    $region6: #{conv_stack_model.1} parent=1 // pred_check
      _
    $region7: #{conv_stack_model.1} parent=1 // pred_check_branch
      %25 = sbr.rel (0) target = $region9
    $region8: #{conv_stack_model.1} parent=1 // pred_region
      _
    $region9: #{conv_stack_model.1} parent=1 // pred_fallthru
      _
    // Predicated region
    $region10: #{conv_stack_model.1} parent=1 // pred_check
      _
    $region11: #{conv_stack_model.1} parent=1 // pred_check_branch
      %27 = sbr.rel (0) target = $region13
    $region12: #{conv_stack_model.1} parent=1 // pred_region
      _
    $region13: #{conv_stack_model.1} parent=1 // pred_fallthru
      _
    // Predicated region
    $region14: #{conv_stack_model.1} parent=1 // pred_check
      _
    $region15: #{conv_stack_model.1} parent=1 // pred_check_branch
      %29 = sbr.rel (0) target = $region17
    $region16: #{conv_stack_model.1} parent=1 // pred_region
      _
    $region17: #{conv_stack_model.1} parent=1 // pred_fallthru
      _
    // Predicated region
    $region18: #{conv_stack_model.1} parent=1 // pred_check
      _
    $region19: #{conv_stack_model.1} parent=1 // pred_check_branch
      %31 = sbr.rel (0) target = $region21
    $region20: #{conv_stack_model.1} parent=1 // pred_region
      _
    $region21: #{conv_stack_model.1} parent=1 // pred_fallthru
      _
    // Predicated region
    $region22: #{conv_stack_model.1} parent=1 // pred_check
      _
    $region23: #{conv_stack_model.1} parent=1 // pred_check_branch
      %33 = sbr.rel (0) target = $region25
    $region24: #{conv_stack_model.1} parent=1 // pred_region
      %s35 = ssub.s32 9216, 9216
      %36 = vsyncadd [#allocation3], %s35
      %s37 = sshll.u32 [#allocation2], 4
      %s38 = int_to_ptr.vmem [resolvable:$true] %s37
      %43 = dma.hbm_to_vmem [thread:$0]  %s5, 9216, %s38, [#allocation3], 256, 256, 16
    $region25: #{conv_stack_model.1} parent=1 // pred_fallthru
      _
    // Predicated region
    $region26: #{conv_stack_model.1} parent=1 // pred_check
      _
    $region27: #{conv_stack_model.1} parent=1 // pred_check_branch
      %45 = sbr.rel (0) target = $region29
    $region28: #{conv_stack_model.1} parent=1 // pred_region
      _
    $region29: #{conv_stack_model.1} parent=1 // pred_fallthru
      _
    // Predicated region
    $region30: #{conv_stack_model.1} parent=1 // pred_check
      _
    $region31: #{conv_stack_model.1} parent=1 // pred_check_branch
      %47 = sbr.rel (0) target = $region33
    $region32: #{conv_stack_model.1} parent=1 // pred_region
      _
    $region33: #{conv_stack_model.1} parent=1 // pred_fallthru
      _
    // Predicated region
    $region34: #{conv_stack_model.1} parent=1 // pred_check
      _
    $region35: #{conv_stack_model.1} parent=1 // pred_check_branch
      %49 = sbr.rel (0) target = $region37
    $region36: #{conv_stack_model.1} parent=1 // pred_region
      _
    $region37: #{conv_stack_model.1} parent=1 // pred_fallthru
      _
    // Predicated region
    $region38: #{conv_stack_model.1} parent=1 // pred_check
      _
    $region39: #{conv_stack_model.1} parent=1 // pred_check_branch
      %51 = sbr.rel (0) target = $region41
    $region40: #{conv_stack_model.1} parent=1 // pred_region
      _
    $region41: #{conv_stack_model.1} parent=1 // pred_fallthru
      _
    // Predicated region
    $region42: #{conv_stack_model.1} parent=1 // pred_check
      _
    $region43: #{conv_stack_model.1} parent=1 // pred_check_branch
      %53 = sbr.rel (0) target = $region45
    $region44: #{conv_stack_model.1} parent=1 // pred_region
      _
    $region45: #{conv_stack_model.1} parent=1 // pred_fallthru
      _
    // Predicated region
    $region46: #{conv_stack_model.1} parent=1 // pred_check
      _
    $region47: #{conv_stack_model.1} parent=1 // pred_check_branch
      %55 = sbr.rel (0) target = $region49
    $region48: #{conv_stack_model.1} parent=1 // pred_region
      _
    $region49: #{conv_stack_model.1} parent=1 // pred_fallthru
      _
    // Predicated region
    $region50: #{conv_stack_model.1} parent=1 // pred_check
      _
    $region51: #{conv_stack_model.1} parent=1 // pred_check_branch
      %57 = sbr.rel (0) target = $region53
    $region52: #{conv_stack_model.1} parent=1 // pred_region
      _
    $region53: #{conv_stack_model.1} parent=1 // pred_fallthru
      _
    // Predicated region
    $region54: #{conv_stack_model.1} parent=1 // pred_check
      _
    $region55: #{conv_stack_model.1} parent=1 // pred_check_branch
      %59 = sbr.rel (0) target = $region57
    $region56: #{conv_stack_model.1} parent=1 // pred_region
      _
    $region57: #{conv_stack_model.1} parent=1 // pred_fallthru
      _
    // Predicated region
    $region58: #{conv_stack_model.1} parent=1 // pred_check
      _
    $region59: #{conv_stack_model.1} parent=1 // pred_check_branch
      %61 = sbr.rel (0) target = $region61
    $region60: #{conv_stack_model.1} parent=1 // pred_region
      _
    $region61: #{conv_stack_model.1} parent=1 // pred_fallthru
      _
    // Predicated region
    $region62: #{conv_stack_model.1} parent=1 // pred_check
      _
    $region63: #{conv_stack_model.1} parent=1 // pred_check_branch
      %63 = sbr.rel (0) target = $region65
    $region64: #{conv_stack_model.1} parent=1 // pred_region
      _
    $region65: #{conv_stack_model.1} parent=1 // pred_fallthru
      _
    // Predicated region
    $region66: #{conv_stack_model.1} parent=1 // pred_check
      _
    $region67: #{conv_stack_model.1} parent=1 // pred_check_branch
      %65 = sbr.rel (0) target = $region69
    $region68: #{conv_stack_model.1} parent=1 // pred_region
      %66 = dma.done [#allocation3], 9216
    $region69: #{conv_stack_model.1} parent=1 // pred_fallthru
      _
    %v67 = vld [vmem:[%s0] sm:$0xff]
    %v68 = vld [vmem:[%s0 + $0x8] sm:$0xff]
    %v69 = vld [vmem:[%s0 + $0x10] sm:$0xff]
    %v70 = vld [vmem:[%s0 + $0x18] sm:$0xff]
    %v71 = vld [vmem:[%s0 + $0x20] sm:$0xff]
    %v72 = vld [vmem:[%s0 + $0x28] sm:$0xff]
    %v73 = vld [vmem:[%s0 + $0x30] sm:$0xff]
    %v74 = vld [vmem:[%s0 + $0x38] sm:$0xff]
    %v75 = vld [vmem:[%s0 + $0x40] sm:$0xff]
    %v76 = vld [vmem:[%s0 + $0x48] sm:$0xff]
    %v77 = vld [vmem:[%s0 + $0x50] sm:$0xff]
    %v78 = vld [vmem:[%s0 + $0x58] sm:$0xff]
    %v79 = vld [vmem:[%s0 + $0x60] sm:$0xff]
    %v80 = vld [vmem:[%s0 + $0x68] sm:$0xff]
    %v81 = vld [vmem:[%s0 + $0x70] sm:$0xff]
    %v82 = vld [vmem:[%s0 + $0x78] sm:$0xff]
    %v83 = vld [vmem:[%s0 + $0x80] sm:$0xff]
    %v84 = vld [vmem:[%s0 + $0x88] sm:$0xff]
    %v85 = vld [vmem:[%s0 + $0x90] sm:$0xff]
    %v86 = vld [vmem:[%s0 + $0x98] sm:$0xff]
    %v87 = vld [vmem:[%s0 + $0xa0] sm:$0xff]
    %v88 = vld [vmem:[%s0 + $0xa8] sm:$0xff]
    %v89 = vld [vmem:[%s0 + $0xb0] sm:$0xff]
    %v90 = vld [vmem:[%s0 + $0xb8] sm:$0xff]
    %v91 = vld [vmem:[%s0 + $0xc0] sm:$0xff]
    %v92 = vld [vmem:[%s0 + $0xc8] sm:$0xff]
    %v93 = vld [vmem:[%s0 + $0xd0] sm:$0xff]
    %v94 = vld [vmem:[%s0 + $0xd8] sm:$0xff]
    %v95 = vld [vmem:[%s3] sm:$0x1]
    %v96 = vld [vmem:[%s1] sm:$0xff]
    %v97 = vld [vmem:[%s1 + $0x8] sm:$0xff]
    %v98 = vld [vmem:[%s1 + $0x10] sm:$0xff]
    %v99 = vld [vmem:[%s1 + $0x18] sm:$0xf]
    %vm100 = vcmask 228352
    %v102 = vsel %vm100, %v67, 0
    %v105 = vsel %vm100, %v68, 0
    %v108 = vsel %vm100, %v69, 0
    %v111 = vsel %vm100, %v70, 0
    %v114 = vsel %vm100, %v71, 0
    %v117 = vsel %vm100, %v72, 0
    %v120 = vsel %vm100, %v73, 0
    %v123 = vsel %vm100, %v74, 0
    %v126 = vsel %vm100, %v75, 0
    %v129 = vsel %vm100, %v76, 0
    %v132 = vsel %vm100, %v77, 0
    %v135 = vsel %vm100, %v78, 0
    %v138 = vsel %vm100, %v79, 0
    %v141 = vsel %vm100, %v80, 0
    %v144 = vsel %vm100, %v81, 0
    %v147 = vsel %vm100, %v82, 0
    %v150 = vsel %vm100, %v83, 0
    %v153 = vsel %vm100, %v84, 0
    %v156 = vsel %vm100, %v85, 0
    %v159 = vsel %vm100, %v86, 0
    %v162 = vsel %vm100, %v87, 0
    %v165 = vsel %vm100, %v88, 0
    %v168 = vsel %vm100, %v89, 0
    %v171 = vsel %vm100, %v90, 0
    %v174 = vsel %vm100, %v91, 0
    %v177 = vsel %vm100, %v92, 0
    %v180 = vsel %vm100, %v93, 0
    %v183 = vsel %vm100, %v94, 0
    %vm185 = vcmask 1043456
    %v187 = vsel %vm185, %v99, 0
    %189 = vmatprep.subr.mxu0 0.0
    %190 = vmatpush1.msra.mxu0 %v96
    %191 = vmatprep.subr.mxu0 0.0
    %192 = vmatpush1.msra.mxu0 %v97
    %193 = vmatprep.subr.mxu0 0.0
    %194 = vmatpush1.msra.mxu0 %v98
    %195 = vmatprep.subr.mxu0 0.0
    %196 = vmatpush1.msra.mxu0 %v187
    %197 = vmatprep.subr.mxu0 0.0
    %198 = vmatpush1.msra.mxu0 0.0
    %199 = vmatprep.subr.mxu0 0.0
    %200 = vmatpush1.msra.mxu0 0.0
    %201 = vmatprep.subr.mxu0 0.0
    %202 = vmatpush1.msra.mxu0 0.0
    %203 = vmatprep.subr.mxu0 0.0
    %204 = vmatpush1.msra.mxu0 0.0
    %205 = vmatprep.subr.mxu0 0.0
    %206 = vmatpush1.msra.mxu0 0.0
    %207 = vmatprep.subr.mxu0 0.0
    %208 = vmatpush1.msra.mxu0 0.0
    %209 = vmatprep.subr.mxu0 0.0
    %210 = vmatpush1.msra.mxu0 0.0
    %211 = vmatprep.subr.mxu0 0.0
    %212 = vmatpush1.msra.mxu0 0.0
    %213 = vmatprep.subr.mxu0 0.0
    %214 = vmatpush1.msra.mxu0 0.0
    %215 = vmatprep.subr.mxu0 0.0
    %216 = vmatpush1.msra.mxu0 0.0
    %217 = vmatprep.subr.mxu0 0.0
    %218 = vmatpush1.msra.mxu0 0.0
    %219 = vmatprep.subr.mxu0 0.0
    %220 = vmatpush1.msra.mxu0 0.0
    %221 = vmatprep.subr.mxu0 0.0
    %222 = vmatpush1.msra.mxu0 0.0
    %223 = vmatprep.subr.mxu0 0.0
    %224 = vmatpush1.msra.mxu0 0.0
    %225 = vmatprep.subr.mxu0 0.0
    %226 = vmatpush1.msra.mxu0 0.0
    %227 = vmatprep.subr.mxu0 0.0
    %228 = vmatpush1.msra.mxu0 0.0
    %229 = vmatprep.subr.mxu0 0.0
    %230 = vmatpush1.msra.mxu0 0.0
    %231 = vmatprep.subr.mxu0 0.0
    %232 = vmatpush1.msra.mxu0 0.0
    %233 = vmatprep.subr.mxu0 0.0
    %234 = vmatpush1.msra.mxu0 0.0
    %235 = vmatprep.subr.mxu0 0.0
    %236 = vmatpush1.msra.mxu0 0.0
    %237 = vmatprep.subr.mxu0 0.0
    %238 = vmatpush1.msra.mxu0 0.0
    %239 = vmatprep.subr.mxu0 0.0
    %240 = vmatpush1.msra.mxu0 0.0
    %241 = vmatprep.subr.mxu0 0.0
    %242 = vmatpush1.msra.mxu0 0.0
    %243 = vmatprep.subr.mxu0 0.0
    %244 = vmatpush1.msra.mxu0 0.0
    %245 = vmatprep.subr.mxu0 0.0
    %246 = vmatpush1.msra.mxu0 0.0
    %247 = vmatprep.subr.mxu0 0.0
    %248 = vmatpush1.msra.mxu0 0.0
    %249 = vmatprep.subr.mxu0 0.0
    %250 = vmatpush1.msra.mxu0 0.0
    %251 = vmatprep.subr.mxu0 0.0
    %252 = vmatpush1.msra.mxu0 0.0
    %253 = vmatprep.mubr.f32.mxu0 0.0
    %254 = vmatmul.mubr.f32.gmra.mrb[0].mxu0 %v102
    %v255 = vpop.f32.mrb[0].mxu0
    %v256 = vadd.f32 0.0, %v255
    %v257 = vpop.f32.mrb[0].mxu0
    %258 = vmatprep.mubr.f32.mxu0 0.0
    %259 = vmatmul.mubr.f32.gmra.mrb[0].mxu0 %v105
    %v260 = vpop.f32.mrb[0].mxu0
    %v261 = vadd.f32 0.0, %v260
    %v262 = vpop.f32.mrb[0].mxu0
    %263 = vmatprep.mubr.f32.mxu0 0.0
    %264 = vmatmul.mubr.f32.gmra.mrb[0].mxu0 %v108
    %v265 = vpop.f32.mrb[0].mxu0
    %v266 = vadd.f32 0.0, %v265
    %v267 = vpop.f32.mrb[0].mxu0
    %268 = vmatprep.mubr.f32.mxu0 0.0
    %269 = vmatmul.mubr.f32.gmra.mrb[0].mxu0 %v111
    %v270 = vpop.f32.mrb[0].mxu0
    %v271 = vadd.f32 0.0, %v270
    %v272 = vpop.f32.mrb[0].mxu0
    %273 = vmatprep.mubr.f32.mxu0 0.0
    %274 = vmatmul.mubr.f32.gmra.mrb[0].mxu0 %v114
    %v275 = vpop.f32.mrb[0].mxu0
    %v276 = vadd.f32 0.0, %v275
    %v277 = vpop.f32.mrb[0].mxu0
    %278 = vmatprep.mubr.f32.mxu0 0.0
    %279 = vmatmul.mubr.f32.gmra.mrb[0].mxu0 %v117
    %v280 = vpop.f32.mrb[0].mxu0
    %v281 = vadd.f32 0.0, %v280
    %v282 = vpop.f32.mrb[0].mxu0
    %283 = vmatprep.mubr.f32.mxu0 0.0
    %284 = vmatmul.mubr.f32.gmra.mrb[0].mxu0 %v120
    %v285 = vpop.f32.mrb[0].mxu0
    %v286 = vadd.f32 0.0, %v285
    %v287 = vpop.f32.mrb[0].mxu0
    %288 = vmatprep.mubr.f32.mxu0 0.0
    %289 = vmatmul.mubr.f32.gmra.mrb[0].mxu0 %v123
    %v290 = vpop.f32.mrb[0].mxu0
    %v291 = vadd.f32 0.0, %v290
    %v292 = vpop.f32.mrb[0].mxu0
    %293 = vmatprep.mubr.f32.mxu0 0.0
    %294 = vmatmul.mubr.f32.gmra.mrb[0].mxu0 %v126
    %v295 = vpop.f32.mrb[0].mxu0
    %v296 = vadd.f32 0.0, %v295
    %v297 = vpop.f32.mrb[0].mxu0
    %298 = vmatprep.mubr.f32.mxu0 0.0
    %299 = vmatmul.mubr.f32.gmra.mrb[0].mxu0 %v129
    %v300 = vpop.f32.mrb[0].mxu0
    %v301 = vadd.f32 0.0, %v300
    %v302 = vpop.f32.mrb[0].mxu0
    %303 = vmatprep.mubr.f32.mxu0 0.0
    %304 = vmatmul.mubr.f32.gmra.mrb[0].mxu0 %v132
    %v305 = vpop.f32.mrb[0].mxu0
    %v306 = vadd.f32 0.0, %v305
    %v307 = vpop.f32.mrb[0].mxu0
    %308 = vmatprep.mubr.f32.mxu0 0.0
    %309 = vmatmul.mubr.f32.gmra.mrb[0].mxu0 %v135
    %v310 = vpop.f32.mrb[0].mxu0
    %v311 = vadd.f32 0.0, %v310
    %v312 = vpop.f32.mrb[0].mxu0
    %313 = vmatprep.mubr.f32.mxu0 0.0
    %314 = vmatmul.mubr.f32.gmra.mrb[0].mxu0 %v138
    %v315 = vpop.f32.mrb[0].mxu0
    %v316 = vadd.f32 0.0, %v315
    %v317 = vpop.f32.mrb[0].mxu0
    %318 = vmatprep.mubr.f32.mxu0 0.0
    %319 = vmatmul.mubr.f32.gmra.mrb[0].mxu0 %v141
    %v320 = vpop.f32.mrb[0].mxu0
    %v321 = vadd.f32 0.0, %v320
    %v322 = vpop.f32.mrb[0].mxu0
    %323 = vmatprep.mubr.f32.mxu0 0.0
    %324 = vmatmul.mubr.f32.gmra.mrb[0].mxu0 %v144
    %v325 = vpop.f32.mrb[0].mxu0
    %v326 = vadd.f32 0.0, %v325
    %v327 = vpop.f32.mrb[0].mxu0
    %328 = vmatprep.mubr.f32.mxu0 0.0
    %329 = vmatmul.mubr.f32.gmra.mrb[0].mxu0 %v147
    %v330 = vpop.f32.mrb[0].mxu0
    %v331 = vadd.f32 0.0, %v330
    %v332 = vpop.f32.mrb[0].mxu0
    %333 = vmatprep.mubr.f32.mxu0 0.0
    %334 = vmatmul.mubr.f32.gmra.mrb[0].mxu0 %v150
    %v335 = vpop.f32.mrb[0].mxu0
    %v336 = vadd.f32 0.0, %v335
    %v337 = vpop.f32.mrb[0].mxu0
    %338 = vmatprep.mubr.f32.mxu0 0.0
    %339 = vmatmul.mubr.f32.gmra.mrb[0].mxu0 %v153
    %v340 = vpop.f32.mrb[0].mxu0
    %v341 = vadd.f32 0.0, %v340
    %v342 = vpop.f32.mrb[0].mxu0
    %343 = vmatprep.mubr.f32.mxu0 0.0
    %344 = vmatmul.mubr.f32.gmra.mrb[0].mxu0 %v156
    %v345 = vpop.f32.mrb[0].mxu0
    %v346 = vadd.f32 0.0, %v345
    %v347 = vpop.f32.mrb[0].mxu0
    %348 = vmatprep.mubr.f32.mxu0 0.0
    %349 = vmatmul.mubr.f32.gmra.mrb[0].mxu0 %v159
    %v350 = vpop.f32.mrb[0].mxu0
    %v351 = vadd.f32 0.0, %v350
    %v352 = vpop.f32.mrb[0].mxu0
    %353 = vmatprep.mubr.f32.mxu0 0.0
    %354 = vmatmul.mubr.f32.gmra.mrb[0].mxu0 %v162
    %v355 = vpop.f32.mrb[0].mxu0
    %v356 = vadd.f32 0.0, %v355
    %v357 = vpop.f32.mrb[0].mxu0
    %358 = vmatprep.mubr.f32.mxu0 0.0
    %359 = vmatmul.mubr.f32.gmra.mrb[0].mxu0 %v165
    %v360 = vpop.f32.mrb[0].mxu0
    %v361 = vadd.f32 0.0, %v360
    %v362 = vpop.f32.mrb[0].mxu0
    %363 = vmatprep.mubr.f32.mxu0 0.0
    %364 = vmatmul.mubr.f32.gmra.mrb[0].mxu0 %v168
    %v365 = vpop.f32.mrb[0].mxu0
    %v366 = vadd.f32 0.0, %v365
    %v367 = vpop.f32.mrb[0].mxu0
    %368 = vmatprep.mubr.f32.mxu0 0.0
    %369 = vmatmul.mubr.f32.gmra.mrb[0].mxu0 %v171
    %v370 = vpop.f32.mrb[0].mxu0
    %v371 = vadd.f32 0.0, %v370
    %v372 = vpop.f32.mrb[0].mxu0
    %373 = vmatprep.mubr.f32.mxu0 0.0
    %374 = vmatmul.mubr.f32.gmra.mrb[0].mxu0 %v174
    %v375 = vpop.f32.mrb[0].mxu0
    %v376 = vadd.f32 0.0, %v375
    %v377 = vpop.f32.mrb[0].mxu0
    %378 = vmatprep.mubr.f32.mxu0 0.0
    %379 = vmatmul.mubr.f32.gmra.mrb[0].mxu0 %v177
    %v380 = vpop.f32.mrb[0].mxu0
    %v381 = vadd.f32 0.0, %v380
    %v382 = vpop.f32.mrb[0].mxu0
    %383 = vmatprep.mubr.f32.mxu0 0.0
    %384 = vmatmul.mubr.f32.gmra.mrb[0].mxu0 %v180
    %v385 = vpop.f32.mrb[0].mxu0
    %v386 = vadd.f32 0.0, %v385
    %v387 = vpop.f32.mrb[0].mxu0
    %388 = vmatprep.mubr.f32.mxu0 0.0
    %389 = vmatmul.mubr.f32.gmra.mrb[0].mxu0 %v183
    %v390 = vpop.f32.mrb[0].mxu0
    %v391 = vadd.f32 0.0, %v390
    %v392 = vpop.f32.mrb[0].mxu0
    %393 = vdwg.mxu0
    %v394 = vld [vmem:[%s2] sm:$0xff]
    %v395 = vld [vmem:[%s2 + $0x8] sm:$0xff]
    %v396 = vld [vmem:[%s2 + $0x10] sm:$0xff]
    %v397 = vld [vmem:[%s2 + $0x18] sm:$0xff]
    %v398 = vld [vmem:[%s2 + $0x20] sm:$0xff]
    %v399 = vld [vmem:[%s2 + $0x28] sm:$0xff]
    %v400 = vld [vmem:[%s2 + $0x30] sm:$0xff]
    %v401 = vld [vmem:[%s2 + $0x38] sm:$0xff]
    %v402 = vld [vmem:[%s2 + $0x40] sm:$0xff]
    %v403 = vld [vmem:[%s2 + $0x48] sm:$0xff]
    %v404 = vld [vmem:[%s2 + $0x50] sm:$0xff]
    %v405 = vld [vmem:[%s2 + $0x58] sm:$0xff]
    %v406 = vld [vmem:[%s2 + $0x60] sm:$0xff]
    %v407 = vld [vmem:[%s2 + $0x68] sm:$0xff]
    %v408 = vld [vmem:[%s2 + $0x70] sm:$0xff]
    %v409 = vld [vmem:[%s2 + $0x78] sm:$0xff]
    %v410 = vld [vmem:[%s2 + $0x80] sm:$0xff]
    %v411 = vld [vmem:[%s2 + $0x88] sm:$0xff]
    %v412 = vld [vmem:[%s2 + $0x90] sm:$0xff]
    %v413 = vld [vmem:[%s2 + $0x98] sm:$0xff]
    %v414 = vld [vmem:[%s2 + $0xa0] sm:$0xff]
    %v415 = vld [vmem:[%s2 + $0xa8] sm:$0xff]
    %v416 = vld [vmem:[%s2 + $0xb0] sm:$0xff]
    %v417 = vld [vmem:[%s2 + $0xb8] sm:$0xff]
    %v418 = vld [vmem:[%s2 + $0xc0] sm:$0xff]
    %v419 = vld [vmem:[%s2 + $0xc8] sm:$0xff]
    %v420 = vld [vmem:[%s2 + $0xd0] sm:$0xff]
    %v421 = vld [vmem:[%s2 + $0xd8] sm:$0xff]
    %v422 = vld [vmem:[%s2 + $0xe0] sm:$0xff]
    %v423 = vld [vmem:[%s2 + $0xe8] sm:$0xff]
    %v424 = vld [vmem:[%s2 + $0xf0] sm:$0xff]
    %v425 = vld [vmem:[%s2 + $0xf8] sm:$0xff]
    %v426 = vld [vmem:[%s2 + $0x100] sm:$0xff]
    %v427 = vld [vmem:[%s2 + $0x108] sm:$0xff]
    %v428 = vld [vmem:[%s2 + $0x110] sm:$0xff]
    %v429 = vld [vmem:[%s2 + $0x118] sm:$0xff]
    %v430 = vld [vmem:[%s2 + $0x120] sm:$0xff]
    %v431 = vld [vmem:[%s2 + $0x128] sm:$0xff]
    %v432 = vld [vmem:[%s2 + $0x130] sm:$0xff]
    %v433 = vld [vmem:[%s2 + $0x138] sm:$0xff]
    %v434 = vld [vmem:[%s2 + $0x140] sm:$0xff]
    %v435 = vld [vmem:[%s2 + $0x148] sm:$0xff]
    %v436 = vld [vmem:[%s2 + $0x150] sm:$0xff]
    %v437 = vld [vmem:[%s2 + $0x158] sm:$0xff]
    %v438 = vld [vmem:[%s2 + $0x160] sm:$0xff]
    %v439 = vld [vmem:[%s2 + $0x168] sm:$0xff]
    %v440 = vld [vmem:[%s2 + $0x170] sm:$0xff]
    %v441 = vld [vmem:[%s2 + $0x178] sm:$0xff]
    %v442 = vld [vmem:[%s2 + $0x180] sm:$0xff]
    %v443 = vld [vmem:[%s2 + $0x188] sm:$0xff]
    %v444 = vld [vmem:[%s2 + $0x190] sm:$0xff]
    %v445 = vld [vmem:[%s2 + $0x198] sm:$0xff]
    %vm446 = vcmask 785408
    %v448 = vsel %vm446, %v395, 0
    %v451 = vsel %vm446, %v397, 0
    %v454 = vsel %vm446, %v399, 0
    %v457 = vsel %vm446, %v401, 0
    %v460 = vsel %vm446, %v403, 0
    %v463 = vsel %vm446, %v405, 0
    %v466 = vsel %vm446, %v407, 0
    %v469 = vsel %vm446, %v409, 0
    %v472 = vsel %vm446, %v411, 0
    %v475 = vsel %vm446, %v413, 0
    %v478 = vsel %vm446, %v415, 0
    %v481 = vsel %vm446, %v417, 0
    %v484 = vsel %vm446, %v419, 0
    %v487 = vsel %vm446, %v421, 0
    %v490 = vsel %vm446, %v423, 0
    %v493 = vsel %vm446, %v425, 0
    %v496 = vsel %vm446, %v427, 0
    %v499 = vsel %vm446, %v429, 0
    %v502 = vsel %vm446, %v431, 0
    %v505 = vsel %vm446, %v433, 0
    %v508 = vsel %vm446, %v435, 0
    %v511 = vsel %vm446, %v437, 0
    %v514 = vsel %vm446, %v439, 0
    %v517 = vsel %vm446, %v441, 0
    %v520 = vsel %vm446, %v443, 0
    %v523 = vsel %vm446, %v445, 0
    %525 = vmatprep.subr.mxu0 0.0
    %526 = vmatpush1.msra.mxu0 %v256
    %527 = vmatprep.subr.mxu0 0.0
    %528 = vmatpush1.msra.mxu0 %v261
    %529 = vmatprep.subr.mxu0 0.0
    %530 = vmatpush1.msra.mxu0 %v266
    %531 = vmatprep.subr.mxu0 0.0
    %532 = vmatpush1.msra.mxu0 %v271
    %533 = vmatprep.subr.mxu0 0.0
    %534 = vmatpush1.msra.mxu0 %v276
    %535 = vmatprep.subr.mxu0 0.0
    %536 = vmatpush1.msra.mxu0 %v281
    %537 = vmatprep.subr.mxu0 0.0
    %538 = vmatpush1.msra.mxu0 %v286
    %539 = vmatprep.subr.mxu0 0.0
    %540 = vmatpush1.msra.mxu0 %v291
    %541 = vmatprep.subr.mxu0 0.0
    %542 = vmatpush1.msra.mxu0 %v296
    %543 = vmatprep.subr.mxu0 0.0
    %544 = vmatpush1.msra.mxu0 %v301
    %545 = vmatprep.subr.mxu0 0.0
    %546 = vmatpush1.msra.mxu0 %v306
    %547 = vmatprep.subr.mxu0 0.0
    %548 = vmatpush1.msra.mxu0 %v311
    %549 = vmatprep.subr.mxu0 0.0
    %550 = vmatpush1.msra.mxu0 %v316
    %551 = vmatprep.subr.mxu0 0.0
    %552 = vmatpush1.msra.mxu0 %v321
    %553 = vmatprep.subr.mxu0 0.0
    %554 = vmatpush1.msra.mxu0 %v326
    %555 = vmatprep.subr.mxu0 0.0
    %556 = vmatpush1.msra.mxu0 %v331
    %557 = vmatprep.subr.mxu0 0.0
    %558 = vmatpush1.msra.mxu0 %v336
    %559 = vmatprep.subr.mxu0 0.0
    %560 = vmatpush1.msra.mxu0 %v341
    %561 = vmatprep.subr.mxu0 0.0
    %562 = vmatpush1.msra.mxu0 %v346
    %563 = vmatprep.subr.mxu0 0.0
    %564 = vmatpush1.msra.mxu0 %v351
    %565 = vmatprep.subr.mxu0 0.0
    %566 = vmatpush1.msra.mxu0 %v356
    %567 = vmatprep.subr.mxu0 0.0
    %568 = vmatpush1.msra.mxu0 %v361
    %569 = vmatprep.subr.mxu0 0.0
    %570 = vmatpush1.msra.mxu0 %v366
    %571 = vmatprep.subr.mxu0 0.0
    %572 = vmatpush1.msra.mxu0 %v371
    %573 = vmatprep.subr.mxu0 0.0
    %574 = vmatpush1.msra.mxu0 %v376
    %575 = vmatprep.subr.mxu0 0.0
    %576 = vmatpush1.msra.mxu0 %v381
    %577 = vmatprep.subr.mxu0 0.0
    %578 = vmatpush1.msra.mxu0 %v386
    %579 = vmatprep.subr.mxu0 0.0
    %580 = vmatpush1.msra.mxu0 %v391
    %581 = vmatprep.subr.mxu0 0.0
    %582 = vmatpush1.msra.mxu0 0.0
    %583 = vmatprep.subr.mxu0 0.0
    %584 = vmatpush1.msra.mxu0 0.0
    %585 = vmatprep.subr.mxu0 0.0
    %586 = vmatpush1.msra.mxu0 0.0
    %587 = vmatprep.subr.mxu0 0.0
    %588 = vmatpush1.msra.mxu0 0.0
    %589 = vmatprep.mubr.f32.mxu0 %v448
    %590 = vmatmul.mubr.f32.gmra.mrb[0].mxu0 %v394
    %v591 = vpop.f32.mrb[0].mxu0
    %v592 = vadd.f32 0.0, %v591
    %v593 = vpop.f32.mrb[0].mxu0
    %594 = vmatprep.mubr.f32.mxu0 %v451
    %595 = vmatmul.mubr.f32.gmra.mrb[0].mxu0 %v396
    %v596 = vpop.f32.mrb[0].mxu0
    %v597 = vadd.f32 0.0, %v596
    %v598 = vpop.f32.mrb[0].mxu0
    %599 = vmatprep.mubr.f32.mxu0 %v454
    %600 = vmatmul.mubr.f32.gmra.mrb[0].mxu0 %v398
    %v601 = vpop.f32.mrb[0].mxu0
    %v602 = vadd.f32 0.0, %v601
    %v603 = vpop.f32.mrb[0].mxu0
    %604 = vmatprep.mubr.f32.mxu0 %v457
    %605 = vmatmul.mubr.f32.gmra.mrb[0].mxu0 %v400
    %v606 = vpop.f32.mrb[0].mxu0
    %v607 = vadd.f32 0.0, %v606
    %v608 = vpop.f32.mrb[0].mxu0
    %609 = vmatprep.mubr.f32.mxu0 %v460
    %610 = vmatmul.mubr.f32.gmra.mrb[0].mxu0 %v402
    %v611 = vpop.f32.mrb[0].mxu0
    %v612 = vadd.f32 0.0, %v611
    %v613 = vpop.f32.mrb[0].mxu0
    %614 = vmatprep.mubr.f32.mxu0 %v463
    %615 = vmatmul.mubr.f32.gmra.mrb[0].mxu0 %v404
    %v616 = vpop.f32.mrb[0].mxu0
    %v617 = vadd.f32 0.0, %v616
    %v618 = vpop.f32.mrb[0].mxu0
    %619 = vmatprep.mubr.f32.mxu0 %v466
    %620 = vmatmul.mubr.f32.gmra.mrb[0].mxu0 %v406
    %v621 = vpop.f32.mrb[0].mxu0
    %v622 = vadd.f32 0.0, %v621
    %v623 = vpop.f32.mrb[0].mxu0
    %624 = vmatprep.mubr.f32.mxu0 %v469
    %625 = vmatmul.mubr.f32.gmra.mrb[0].mxu0 %v408
    %v626 = vpop.f32.mrb[0].mxu0
    %v627 = vadd.f32 0.0, %v626
    %v628 = vpop.f32.mrb[0].mxu0
    %629 = vmatprep.mubr.f32.mxu0 %v472
    %630 = vmatmul.mubr.f32.gmra.mrb[0].mxu0 %v410
    %v631 = vpop.f32.mrb[0].mxu0
    %v632 = vadd.f32 0.0, %v631
    %v633 = vpop.f32.mrb[0].mxu0
    %634 = vmatprep.mubr.f32.mxu0 %v475
    %635 = vmatmul.mubr.f32.gmra.mrb[0].mxu0 %v412
    %v636 = vpop.f32.mrb[0].mxu0
    %v637 = vadd.f32 0.0, %v636
    %v638 = vpop.f32.mrb[0].mxu0
    %639 = vmatprep.mubr.f32.mxu0 %v478
    %640 = vmatmul.mubr.f32.gmra.mrb[0].mxu0 %v414
    %v641 = vpop.f32.mrb[0].mxu0
    %v642 = vadd.f32 0.0, %v641
    %v643 = vpop.f32.mrb[0].mxu0
    %644 = vmatprep.mubr.f32.mxu0 %v481
    %645 = vmatmul.mubr.f32.gmra.mrb[0].mxu0 %v416
    %v646 = vpop.f32.mrb[0].mxu0
    %v647 = vadd.f32 0.0, %v646
    %v648 = vpop.f32.mrb[0].mxu0
    %649 = vmatprep.mubr.f32.mxu0 %v484
    %650 = vmatmul.mubr.f32.gmra.mrb[0].mxu0 %v418
    %v651 = vpop.f32.mrb[0].mxu0
    %v652 = vadd.f32 0.0, %v651
    %v653 = vpop.f32.mrb[0].mxu0
    %654 = vmatprep.mubr.f32.mxu0 %v487
    %655 = vmatmul.mubr.f32.gmra.mrb[0].mxu0 %v420
    %v656 = vpop.f32.mrb[0].mxu0
    %v657 = vadd.f32 0.0, %v656
    %v658 = vpop.f32.mrb[0].mxu0
    %659 = vmatprep.mubr.f32.mxu0 %v490
    %660 = vmatmul.mubr.f32.gmra.mrb[0].mxu0 %v422
    %v661 = vpop.f32.mrb[0].mxu0
    %v662 = vadd.f32 0.0, %v661
    %v663 = vpop.f32.mrb[0].mxu0
    %664 = vmatprep.mubr.f32.mxu0 %v493
    %665 = vmatmul.mubr.f32.gmra.mrb[0].mxu0 %v424
    %v666 = vpop.f32.mrb[0].mxu0
    %v667 = vadd.f32 0.0, %v666
    %v668 = vpop.f32.mrb[0].mxu0
    %669 = vmatprep.mubr.f32.mxu0 %v496
    %670 = vmatmul.mubr.f32.gmra.mrb[0].mxu0 %v426
    %v671 = vpop.f32.mrb[0].mxu0
    %v672 = vadd.f32 0.0, %v671
    %v673 = vpop.f32.mrb[0].mxu0
    %674 = vmatprep.mubr.f32.mxu0 %v499
    %675 = vmatmul.mubr.f32.gmra.mrb[0].mxu0 %v428
    %v676 = vpop.f32.mrb[0].mxu0
    %v677 = vadd.f32 0.0, %v676
    %v678 = vpop.f32.mrb[0].mxu0
    %679 = vmatprep.mubr.f32.mxu0 %v502
    %680 = vmatmul.mubr.f32.gmra.mrb[0].mxu0 %v430
    %v681 = vpop.f32.mrb[0].mxu0
    %v682 = vadd.f32 0.0, %v681
    %v683 = vpop.f32.mrb[0].mxu0
    %684 = vmatprep.mubr.f32.mxu0 %v505
    %685 = vmatmul.mubr.f32.gmra.mrb[0].mxu0 %v432
    %v686 = vpop.f32.mrb[0].mxu0
    %v687 = vadd.f32 0.0, %v686
    %v688 = vpop.f32.mrb[0].mxu0
    %689 = vmatprep.mubr.f32.mxu0 %v508
    %690 = vmatmul.mubr.f32.gmra.mrb[0].mxu0 %v434
    %v691 = vpop.f32.mrb[0].mxu0
    %v692 = vadd.f32 0.0, %v691
    %v693 = vpop.f32.mrb[0].mxu0
    %694 = vmatprep.mubr.f32.mxu0 %v511
    %695 = vmatmul.mubr.f32.gmra.mrb[0].mxu0 %v436
    %v696 = vpop.f32.mrb[0].mxu0
    %v697 = vadd.f32 0.0, %v696
    %v698 = vpop.f32.mrb[0].mxu0
    %699 = vmatprep.mubr.f32.mxu0 %v514
    %700 = vmatmul.mubr.f32.gmra.mrb[0].mxu0 %v438
    %v701 = vpop.f32.mrb[0].mxu0
    %v702 = vadd.f32 0.0, %v701
    %v703 = vpop.f32.mrb[0].mxu0
    %704 = vmatprep.mubr.f32.mxu0 %v517
    %705 = vmatmul.mubr.f32.gmra.mrb[0].mxu0 %v440
    %v706 = vpop.f32.mrb[0].mxu0
    %v707 = vadd.f32 0.0, %v706
    %v708 = vpop.f32.mrb[0].mxu0
    %709 = vmatprep.mubr.f32.mxu0 %v520
    %710 = vmatmul.mubr.f32.gmra.mrb[0].mxu0 %v442
    %v711 = vpop.f32.mrb[0].mxu0
    %v712 = vadd.f32 0.0, %v711
    %v713 = vpop.f32.mrb[0].mxu0
    %714 = vmatprep.mubr.f32.mxu0 %v523
    %715 = vmatmul.mubr.f32.gmra.mrb[0].mxu0 %v444
    %v716 = vpop.f32.mrb[0].mxu0
    %v717 = vadd.f32 0.0, %v716
    %v718 = vpop.f32.mrb[0].mxu0
    %719 = vdwg.mxu0
    %v721 = vlaneseq
    %v722 = vshrl.u32 %v721, 7
    %v723 = vsub.s32 0, %v722
    %v724 = vrot.slane %v95, %v723
    %v726 = vadd.f32 %v724, %v592
    %v727 = vadd.f32 %v724, %v597
    %v728 = vadd.f32 %v724, %v602
    %v729 = vadd.f32 %v724, %v607
    %v730 = vadd.f32 %v724, %v612
    %v731 = vadd.f32 %v724, %v617
    %v732 = vadd.f32 %v724, %v622
    %v733 = vadd.f32 %v724, %v627
    %v734 = vadd.f32 %v724, %v632
    %v735 = vadd.f32 %v724, %v637
    %v736 = vadd.f32 %v724, %v642
    %v737 = vadd.f32 %v724, %v647
    %v738 = vadd.f32 %v724, %v652
    %v739 = vadd.f32 %v724, %v657
    %v740 = vadd.f32 %v724, %v662
    %v741 = vadd.f32 %v724, %v667
    %v742 = vadd.f32 %v724, %v672
    %v743 = vadd.f32 %v724, %v677
    %v744 = vadd.f32 %v724, %v682
    %v745 = vadd.f32 %v724, %v687
    %v746 = vadd.f32 %v724, %v692
    %v747 = vadd.f32 %v724, %v697
    %v748 = vadd.f32 %v724, %v702
    %v749 = vadd.f32 %v724, %v707
    %v750 = vadd.f32 %v724, %v712
    %v751 = vadd.f32 %v724, %v717
    %s752 = scalar_lea.vmem %s1, 32
    %v753 = vld [vmem:[%s752] sm:$0xff]
    %v754 = vld [vmem:[%s752 + $0x8] sm:$0xff]
    %v755 = vld [vmem:[%s752 + $0x10] sm:$0xff]
    %v756 = vld [vmem:[%s752 + $0x18] sm:$0xf]
    %v758 = vsel %vm185, %v756, 0
    %760 = vmatprep.subr.mxu0 0.0
    %761 = vmatpush1.msra.mxu0 %v753
    %762 = vmatprep.subr.mxu0 0.0
    %763 = vmatpush1.msra.mxu0 %v754
    %764 = vmatprep.subr.mxu0 0.0
    %765 = vmatpush1.msra.mxu0 %v755
    %766 = vmatprep.subr.mxu0 0.0
    %767 = vmatpush1.msra.mxu0 %v758
    %768 = vmatprep.subr.mxu0 0.0
    %769 = vmatpush1.msra.mxu0 0.0
    %770 = vmatprep.subr.mxu0 0.0
    %771 = vmatpush1.msra.mxu0 0.0
    %772 = vmatprep.subr.mxu0 0.0
    %773 = vmatpush1.msra.mxu0 0.0
    %774 = vmatprep.subr.mxu0 0.0
    %775 = vmatpush1.msra.mxu0 0.0
    %776 = vmatprep.subr.mxu0 0.0
    %777 = vmatpush1.msra.mxu0 0.0
    %778 = vmatprep.subr.mxu0 0.0
    %779 = vmatpush1.msra.mxu0 0.0
    %780 = vmatprep.subr.mxu0 0.0
    %781 = vmatpush1.msra.mxu0 0.0
    %782 = vmatprep.subr.mxu0 0.0
    %783 = vmatpush1.msra.mxu0 0.0
    %784 = vmatprep.subr.mxu0 0.0
    %785 = vmatpush1.msra.mxu0 0.0
    %786 = vmatprep.subr.mxu0 0.0
    %787 = vmatpush1.msra.mxu0 0.0
    %788 = vmatprep.subr.mxu0 0.0
    %789 = vmatpush1.msra.mxu0 0.0
    %790 = vmatprep.subr.mxu0 0.0
    %791 = vmatpush1.msra.mxu0 0.0
    %792 = vmatprep.subr.mxu0 0.0
    %793 = vmatpush1.msra.mxu0 0.0
    %794 = vmatprep.subr.mxu0 0.0
    %795 = vmatpush1.msra.mxu0 0.0
    %796 = vmatprep.subr.mxu0 0.0
    %797 = vmatpush1.msra.mxu0 0.0
    %798 = vmatprep.subr.mxu0 0.0
    %799 = vmatpush1.msra.mxu0 0.0
    %800 = vmatprep.subr.mxu0 0.0
    %801 = vmatpush1.msra.mxu0 0.0
    %802 = vmatprep.subr.mxu0 0.0
    %803 = vmatpush1.msra.mxu0 0.0
    %804 = vmatprep.subr.mxu0 0.0
    %805 = vmatpush1.msra.mxu0 0.0
    %806 = vmatprep.subr.mxu0 0.0
    %807 = vmatpush1.msra.mxu0 0.0
    %808 = vmatprep.subr.mxu0 0.0
    %809 = vmatpush1.msra.mxu0 0.0
    %810 = vmatprep.subr.mxu0 0.0
    %811 = vmatpush1.msra.mxu0 0.0
    %812 = vmatprep.subr.mxu0 0.0
    %813 = vmatpush1.msra.mxu0 0.0
    %814 = vmatprep.subr.mxu0 0.0
    %815 = vmatpush1.msra.mxu0 0.0
    %816 = vmatprep.subr.mxu0 0.0
    %817 = vmatpush1.msra.mxu0 0.0
    %818 = vmatprep.subr.mxu0 0.0
    %819 = vmatpush1.msra.mxu0 0.0
    %820 = vmatprep.subr.mxu0 0.0
    %821 = vmatpush1.msra.mxu0 0.0
    %822 = vmatprep.subr.mxu0 0.0
    %823 = vmatpush1.msra.mxu0 0.0
    %824 = vmatprep.mubr.f32.mxu0 0.0
    %825 = vmatmul.mubr.f32.gmra.mrb[0].mxu0 %v102
    %v826 = vpop.f32.mrb[0].mxu0
    %v827 = vadd.f32 0.0, %v826
    %v828 = vpop.f32.mrb[0].mxu0
    %829 = vmatprep.mubr.f32.mxu0 0.0
    %830 = vmatmul.mubr.f32.gmra.mrb[0].mxu0 %v105
    %v831 = vpop.f32.mrb[0].mxu0
    %v832 = vadd.f32 0.0, %v831
    %v833 = vpop.f32.mrb[0].mxu0
    %834 = vmatprep.mubr.f32.mxu0 0.0
    %835 = vmatmul.mubr.f32.gmra.mrb[0].mxu0 %v108
    %v836 = vpop.f32.mrb[0].mxu0
    %v837 = vadd.f32 0.0, %v836
    %v838 = vpop.f32.mrb[0].mxu0
    %839 = vmatprep.mubr.f32.mxu0 0.0
    %840 = vmatmul.mubr.f32.gmra.mrb[0].mxu0 %v111
    %v841 = vpop.f32.mrb[0].mxu0
    %v842 = vadd.f32 0.0, %v841
    %v843 = vpop.f32.mrb[0].mxu0
    %844 = vmatprep.mubr.f32.mxu0 0.0
    %845 = vmatmul.mubr.f32.gmra.mrb[0].mxu0 %v114
    %v846 = vpop.f32.mrb[0].mxu0
    %v847 = vadd.f32 0.0, %v846
    %v848 = vpop.f32.mrb[0].mxu0
    %849 = vmatprep.mubr.f32.mxu0 0.0
    %850 = vmatmul.mubr.f32.gmra.mrb[0].mxu0 %v117
    %v851 = vpop.f32.mrb[0].mxu0
    %v852 = vadd.f32 0.0, %v851
    %v853 = vpop.f32.mrb[0].mxu0
    %854 = vmatprep.mubr.f32.mxu0 0.0
    %855 = vmatmul.mubr.f32.gmra.mrb[0].mxu0 %v120
    %v856 = vpop.f32.mrb[0].mxu0
    %v857 = vadd.f32 0.0, %v856
    %v858 = vpop.f32.mrb[0].mxu0
    %859 = vmatprep.mubr.f32.mxu0 0.0
    %860 = vmatmul.mubr.f32.gmra.mrb[0].mxu0 %v123
    %v861 = vpop.f32.mrb[0].mxu0
    %v862 = vadd.f32 0.0, %v861
    %v863 = vpop.f32.mrb[0].mxu0
    %864 = vmatprep.mubr.f32.mxu0 0.0
    %865 = vmatmul.mubr.f32.gmra.mrb[0].mxu0 %v126
    %v866 = vpop.f32.mrb[0].mxu0
    %v867 = vadd.f32 0.0, %v866
    %v868 = vpop.f32.mrb[0].mxu0
    %869 = vmatprep.mubr.f32.mxu0 0.0
    %870 = vmatmul.mubr.f32.gmra.mrb[0].mxu0 %v129
    %v871 = vpop.f32.mrb[0].mxu0
    %v872 = vadd.f32 0.0, %v871
    %v873 = vpop.f32.mrb[0].mxu0
    %874 = vmatprep.mubr.f32.mxu0 0.0
    %875 = vmatmul.mubr.f32.gmra.mrb[0].mxu0 %v132
    %v876 = vpop.f32.mrb[0].mxu0
    %v877 = vadd.f32 0.0, %v876
    %v878 = vpop.f32.mrb[0].mxu0
    %879 = vmatprep.mubr.f32.mxu0 0.0
    %880 = vmatmul.mubr.f32.gmra.mrb[0].mxu0 %v135
    %v881 = vpop.f32.mrb[0].mxu0
    %v882 = vadd.f32 0.0, %v881
    %v883 = vpop.f32.mrb[0].mxu0
    %884 = vmatprep.mubr.f32.mxu0 0.0
    %885 = vmatmul.mubr.f32.gmra.mrb[0].mxu0 %v138
    %v886 = vpop.f32.mrb[0].mxu0
    %v887 = vadd.f32 0.0, %v886
    %v888 = vpop.f32.mrb[0].mxu0
    %889 = vmatprep.mubr.f32.mxu0 0.0
    %890 = vmatmul.mubr.f32.gmra.mrb[0].mxu0 %v141
    %v891 = vpop.f32.mrb[0].mxu0
    %v892 = vadd.f32 0.0, %v891
    %v893 = vpop.f32.mrb[0].mxu0
    %894 = vmatprep.mubr.f32.mxu0 0.0
    %895 = vmatmul.mubr.f32.gmra.mrb[0].mxu0 %v144
    %v896 = vpop.f32.mrb[0].mxu0
    %v897 = vadd.f32 0.0, %v896
    %v898 = vpop.f32.mrb[0].mxu0
    %899 = vmatprep.mubr.f32.mxu0 0.0
    %900 = vmatmul.mubr.f32.gmra.mrb[0].mxu0 %v147
    %v901 = vpop.f32.mrb[0].mxu0
    %v902 = vadd.f32 0.0, %v901
    %v903 = vpop.f32.mrb[0].mxu0
    %904 = vmatprep.mubr.f32.mxu0 0.0
    %905 = vmatmul.mubr.f32.gmra.mrb[0].mxu0 %v150
    %v906 = vpop.f32.mrb[0].mxu0
    %v907 = vadd.f32 0.0, %v906
    %v908 = vpop.f32.mrb[0].mxu0
    %909 = vmatprep.mubr.f32.mxu0 0.0
    %910 = vmatmul.mubr.f32.gmra.mrb[0].mxu0 %v153
    %v911 = vpop.f32.mrb[0].mxu0
    %v912 = vadd.f32 0.0, %v911
    %v913 = vpop.f32.mrb[0].mxu0
    %914 = vmatprep.mubr.f32.mxu0 0.0
    %915 = vmatmul.mubr.f32.gmra.mrb[0].mxu0 %v156
    %v916 = vpop.f32.mrb[0].mxu0
    %v917 = vadd.f32 0.0, %v916
    %v918 = vpop.f32.mrb[0].mxu0
    %919 = vmatprep.mubr.f32.mxu0 0.0
    %920 = vmatmul.mubr.f32.gmra.mrb[0].mxu0 %v159
    %v921 = vpop.f32.mrb[0].mxu0
    %v922 = vadd.f32 0.0, %v921
    %v923 = vpop.f32.mrb[0].mxu0
    %924 = vmatprep.mubr.f32.mxu0 0.0
    %925 = vmatmul.mubr.f32.gmra.mrb[0].mxu0 %v162
    %v926 = vpop.f32.mrb[0].mxu0
    %v927 = vadd.f32 0.0, %v926
    %v928 = vpop.f32.mrb[0].mxu0
    %929 = vmatprep.mubr.f32.mxu0 0.0
    %930 = vmatmul.mubr.f32.gmra.mrb[0].mxu0 %v165
    %v931 = vpop.f32.mrb[0].mxu0
    %v932 = vadd.f32 0.0, %v931
    %v933 = vpop.f32.mrb[0].mxu0
    %934 = vmatprep.mubr.f32.mxu0 0.0
    %935 = vmatmul.mubr.f32.gmra.mrb[0].mxu0 %v168
    %v936 = vpop.f32.mrb[0].mxu0
    %v937 = vadd.f32 0.0, %v936
    %v938 = vpop.f32.mrb[0].mxu0
    %939 = vmatprep.mubr.f32.mxu0 0.0
    %940 = vmatmul.mubr.f32.gmra.mrb[0].mxu0 %v171
    %v941 = vpop.f32.mrb[0].mxu0
    %v942 = vadd.f32 0.0, %v941
    %v943 = vpop.f32.mrb[0].mxu0
    %944 = vmatprep.mubr.f32.mxu0 0.0
    %945 = vmatmul.mubr.f32.gmra.mrb[0].mxu0 %v174
    %v946 = vpop.f32.mrb[0].mxu0
    %v947 = vadd.f32 0.0, %v946
    %v948 = vpop.f32.mrb[0].mxu0
    %949 = vmatprep.mubr.f32.mxu0 0.0
    %950 = vmatmul.mubr.f32.gmra.mrb[0].mxu0 %v177
    %v951 = vpop.f32.mrb[0].mxu0
    %v952 = vadd.f32 0.0, %v951
    %v953 = vpop.f32.mrb[0].mxu0
    %954 = vmatprep.mubr.f32.mxu0 0.0
    %955 = vmatmul.mubr.f32.gmra.mrb[0].mxu0 %v180
    %v956 = vpop.f32.mrb[0].mxu0
    %v957 = vadd.f32 0.0, %v956
    %v958 = vpop.f32.mrb[0].mxu0
    %959 = vmatprep.mubr.f32.mxu0 0.0
    %960 = vmatmul.mubr.f32.gmra.mrb[0].mxu0 %v183
    %v961 = vpop.f32.mrb[0].mxu0
    %v962 = vadd.f32 0.0, %v961
    %v963 = vpop.f32.mrb[0].mxu0
    %964 = vdwg.mxu0
    %s965 = scalar_lea.vmem %s2, 416
    %v966 = vld [vmem:[%s965] sm:$0xff]
    %v967 = vld [vmem:[%s965 + $0x8] sm:$0xff]
    %v968 = vld [vmem:[%s965 + $0x10] sm:$0xff]
    %v969 = vld [vmem:[%s965 + $0x18] sm:$0xff]
    %v970 = vld [vmem:[%s965 + $0x20] sm:$0xff]
    %v971 = vld [vmem:[%s965 + $0x28] sm:$0xff]
    %v972 = vld [vmem:[%s965 + $0x30] sm:$0xff]
    %v973 = vld [vmem:[%s965 + $0x38] sm:$0xff]
    %v974 = vld [vmem:[%s965 + $0x40] sm:$0xff]
    %v975 = vld [vmem:[%s965 + $0x48] sm:$0xff]
    %v976 = vld [vmem:[%s965 + $0x50] sm:$0xff]
    %v977 = vld [vmem:[%s965 + $0x58] sm:$0xff]
    %v978 = vld [vmem:[%s965 + $0x60] sm:$0xff]
    %v979 = vld [vmem:[%s965 + $0x68] sm:$0xff]
    %v980 = vld [vmem:[%s965 + $0x70] sm:$0xff]
    %v981 = vld [vmem:[%s965 + $0x78] sm:$0xff]
    %v982 = vld [vmem:[%s965 + $0x80] sm:$0xff]
    %v983 = vld [vmem:[%s965 + $0x88] sm:$0xff]
    %v984 = vld [vmem:[%s965 + $0x90] sm:$0xff]
    %v985 = vld [vmem:[%s965 + $0x98] sm:$0xff]
    %v986 = vld [vmem:[%s965 + $0xa0] sm:$0xff]
    %v987 = vld [vmem:[%s965 + $0xa8] sm:$0xff]
    %v988 = vld [vmem:[%s965 + $0xb0] sm:$0xff]
    %v989 = vld [vmem:[%s965 + $0xb8] sm:$0xff]
    %v990 = vld [vmem:[%s965 + $0xc0] sm:$0xff]
    %v991 = vld [vmem:[%s965 + $0xc8] sm:$0xff]
    %v992 = vld [vmem:[%s965 + $0xd0] sm:$0xff]
    %v993 = vld [vmem:[%s965 + $0xd8] sm:$0xff]
    %v994 = vld [vmem:[%s965 + $0xe0] sm:$0xff]
    %v995 = vld [vmem:[%s965 + $0xe8] sm:$0xff]
    %v996 = vld [vmem:[%s965 + $0xf0] sm:$0xff]
    %v997 = vld [vmem:[%s965 + $0xf8] sm:$0xff]
    %v998 = vld [vmem:[%s965 + $0x100] sm:$0xff]
    %v999 = vld [vmem:[%s965 + $0x108] sm:$0xff]
    %v1000 = vld [vmem:[%s965 + $0x110] sm:$0xff]
    %v1001 = vld [vmem:[%s965 + $0x118] sm:$0xff]
    %v1002 = vld [vmem:[%s965 + $0x120] sm:$0xff]
    %v1003 = vld [vmem:[%s965 + $0x128] sm:$0xff]
    %v1004 = vld [vmem:[%s965 + $0x130] sm:$0xff]
    %v1005 = vld [vmem:[%s965 + $0x138] sm:$0xff]
    %v1006 = vld [vmem:[%s965 + $0x140] sm:$0xff]
    %v1007 = vld [vmem:[%s965 + $0x148] sm:$0xff]
    %v1008 = vld [vmem:[%s965 + $0x150] sm:$0xff]
    %v1009 = vld [vmem:[%s965 + $0x158] sm:$0xff]
    %v1010 = vld [vmem:[%s965 + $0x160] sm:$0xff]
    %v1011 = vld [vmem:[%s965 + $0x168] sm:$0xff]
    %v1012 = vld [vmem:[%s965 + $0x170] sm:$0xff]
    %v1013 = vld [vmem:[%s965 + $0x178] sm:$0xff]
    %v1014 = vld [vmem:[%s965 + $0x180] sm:$0xff]
    %v1015 = vld [vmem:[%s965 + $0x188] sm:$0xff]
    %v1016 = vld [vmem:[%s965 + $0x190] sm:$0xff]
    %v1017 = vld [vmem:[%s965 + $0x198] sm:$0xff]
    %v1019 = vsel %vm446, %v967, 0
    %v1022 = vsel %vm446, %v969, 0
    %v1025 = vsel %vm446, %v971, 0
    %v1028 = vsel %vm446, %v973, 0
    %v1031 = vsel %vm446, %v975, 0
    %v1034 = vsel %vm446, %v977, 0
    %v1037 = vsel %vm446, %v979, 0
    %v1040 = vsel %vm446, %v981, 0
    %v1043 = vsel %vm446, %v983, 0
    %v1046 = vsel %vm446, %v985, 0
    %v1049 = vsel %vm446, %v987, 0
    %v1052 = vsel %vm446, %v989, 0
    %v1055 = vsel %vm446, %v991, 0
    %v1058 = vsel %vm446, %v993, 0
    %v1061 = vsel %vm446, %v995, 0
    %v1064 = vsel %vm446, %v997, 0
    %v1067 = vsel %vm446, %v999, 0
    %v1070 = vsel %vm446, %v1001, 0
    %v1073 = vsel %vm446, %v1003, 0
    %v1076 = vsel %vm446, %v1005, 0
    %v1079 = vsel %vm446, %v1007, 0
    %v1082 = vsel %vm446, %v1009, 0
    %v1085 = vsel %vm446, %v1011, 0
    %v1088 = vsel %vm446, %v1013, 0
    %v1091 = vsel %vm446, %v1015, 0
    %v1094 = vsel %vm446, %v1017, 0
    %1096 = vmatprep.subr.mxu0 0.0
    %1097 = vmatpush1.msra.mxu0 %v827
    %1098 = vmatprep.subr.mxu0 0.0
    %1099 = vmatpush1.msra.mxu0 %v832
    %1100 = vmatprep.subr.mxu0 0.0
    %1101 = vmatpush1.msra.mxu0 %v837
    %1102 = vmatprep.subr.mxu0 0.0
    %1103 = vmatpush1.msra.mxu0 %v842
    %1104 = vmatprep.subr.mxu0 0.0
    %1105 = vmatpush1.msra.mxu0 %v847
    %1106 = vmatprep.subr.mxu0 0.0
    %1107 = vmatpush1.msra.mxu0 %v852
    %1108 = vmatprep.subr.mxu0 0.0
    %1109 = vmatpush1.msra.mxu0 %v857
    %1110 = vmatprep.subr.mxu0 0.0
    %1111 = vmatpush1.msra.mxu0 %v862
    %1112 = vmatprep.subr.mxu0 0.0
    %1113 = vmatpush1.msra.mxu0 %v867
    %1114 = vmatprep.subr.mxu0 0.0
    %1115 = vmatpush1.msra.mxu0 %v872
    %1116 = vmatprep.subr.mxu0 0.0
    %1117 = vmatpush1.msra.mxu0 %v877
    %1118 = vmatprep.subr.mxu0 0.0
    %1119 = vmatpush1.msra.mxu0 %v882
    %1120 = vmatprep.subr.mxu0 0.0
    %1121 = vmatpush1.msra.mxu0 %v887
    %1122 = vmatprep.subr.mxu0 0.0
    %1123 = vmatpush1.msra.mxu0 %v892
    %1124 = vmatprep.subr.mxu0 0.0
    %1125 = vmatpush1.msra.mxu0 %v897
    %1126 = vmatprep.subr.mxu0 0.0
    %1127 = vmatpush1.msra.mxu0 %v902
    %1128 = vmatprep.subr.mxu0 0.0
    %1129 = vmatpush1.msra.mxu0 %v907
    %1130 = vmatprep.subr.mxu0 0.0
    %1131 = vmatpush1.msra.mxu0 %v912
    %1132 = vmatprep.subr.mxu0 0.0
    %1133 = vmatpush1.msra.mxu0 %v917
    %1134 = vmatprep.subr.mxu0 0.0
    %1135 = vmatpush1.msra.mxu0 %v922
    %1136 = vmatprep.subr.mxu0 0.0
    %1137 = vmatpush1.msra.mxu0 %v927
    %1138 = vmatprep.subr.mxu0 0.0
    %1139 = vmatpush1.msra.mxu0 %v932
    %1140 = vmatprep.subr.mxu0 0.0
    %1141 = vmatpush1.msra.mxu0 %v937
    %1142 = vmatprep.subr.mxu0 0.0
    %1143 = vmatpush1.msra.mxu0 %v942
    %1144 = vmatprep.subr.mxu0 0.0
    %1145 = vmatpush1.msra.mxu0 %v947
    %1146 = vmatprep.subr.mxu0 0.0
    %1147 = vmatpush1.msra.mxu0 %v952
    %1148 = vmatprep.subr.mxu0 0.0
    %1149 = vmatpush1.msra.mxu0 %v957
    %1150 = vmatprep.subr.mxu0 0.0
    %1151 = vmatpush1.msra.mxu0 %v962
    %1152 = vmatprep.subr.mxu0 0.0
    %1153 = vmatpush1.msra.mxu0 0.0
    %1154 = vmatprep.subr.mxu0 0.0
    %1155 = vmatpush1.msra.mxu0 0.0
    %1156 = vmatprep.subr.mxu0 0.0
    %1157 = vmatpush1.msra.mxu0 0.0
    %1158 = vmatprep.subr.mxu0 0.0
    %1159 = vmatpush1.msra.mxu0 0.0
    %1160 = vmatprep.mubr.f32.mxu0 %v1019
    %1161 = vmatmul.mubr.f32.gmra.mrb[0].mxu0 %v966
    %v1162 = vpop.f32.mrb[0].mxu0
    %v1163 = vadd.f32 0.0, %v1162
    %v1164 = vpop.f32.mrb[0].mxu0
    %1165 = vmatprep.mubr.f32.mxu0 %v1022
    %1166 = vmatmul.mubr.f32.gmra.mrb[0].mxu0 %v968
    %v1167 = vpop.f32.mrb[0].mxu0
    %v1168 = vadd.f32 0.0, %v1167
    %v1169 = vpop.f32.mrb[0].mxu0
    %1170 = vmatprep.mubr.f32.mxu0 %v1025
    %1171 = vmatmul.mubr.f32.gmra.mrb[0].mxu0 %v970
    %v1172 = vpop.f32.mrb[0].mxu0
    %v1173 = vadd.f32 0.0, %v1172
    %v1174 = vpop.f32.mrb[0].mxu0
    %1175 = vmatprep.mubr.f32.mxu0 %v1028
    %1176 = vmatmul.mubr.f32.gmra.mrb[0].mxu0 %v972
    %v1177 = vpop.f32.mrb[0].mxu0
    %v1178 = vadd.f32 0.0, %v1177
    %v1179 = vpop.f32.mrb[0].mxu0
    %1180 = vmatprep.mubr.f32.mxu0 %v1031
    %1181 = vmatmul.mubr.f32.gmra.mrb[0].mxu0 %v974
    %v1182 = vpop.f32.mrb[0].mxu0
    %v1183 = vadd.f32 0.0, %v1182
    %v1184 = vpop.f32.mrb[0].mxu0
    %1185 = vmatprep.mubr.f32.mxu0 %v1034
    %1186 = vmatmul.mubr.f32.gmra.mrb[0].mxu0 %v976
    %v1187 = vpop.f32.mrb[0].mxu0
    %v1188 = vadd.f32 0.0, %v1187
    %v1189 = vpop.f32.mrb[0].mxu0
    %1190 = vmatprep.mubr.f32.mxu0 %v1037
    %1191 = vmatmul.mubr.f32.gmra.mrb[0].mxu0 %v978
    %v1192 = vpop.f32.mrb[0].mxu0
    %v1193 = vadd.f32 0.0, %v1192
    %v1194 = vpop.f32.mrb[0].mxu0
    %1195 = vmatprep.mubr.f32.mxu0 %v1040
    %1196 = vmatmul.mubr.f32.gmra.mrb[0].mxu0 %v980
    %v1197 = vpop.f32.mrb[0].mxu0
    %v1198 = vadd.f32 0.0, %v1197
    %v1199 = vpop.f32.mrb[0].mxu0
    %1200 = vmatprep.mubr.f32.mxu0 %v1043
    %1201 = vmatmul.mubr.f32.gmra.mrb[0].mxu0 %v982
    %v1202 = vpop.f32.mrb[0].mxu0
    %v1203 = vadd.f32 0.0, %v1202
    %v1204 = vpop.f32.mrb[0].mxu0
    %1205 = vmatprep.mubr.f32.mxu0 %v1046
    %1206 = vmatmul.mubr.f32.gmra.mrb[0].mxu0 %v984
    %v1207 = vpop.f32.mrb[0].mxu0
    %v1208 = vadd.f32 0.0, %v1207
    %v1209 = vpop.f32.mrb[0].mxu0
    %1210 = vmatprep.mubr.f32.mxu0 %v1049
    %1211 = vmatmul.mubr.f32.gmra.mrb[0].mxu0 %v986
    %v1212 = vpop.f32.mrb[0].mxu0
    %v1213 = vadd.f32 0.0, %v1212
    %v1214 = vpop.f32.mrb[0].mxu0
    %1215 = vmatprep.mubr.f32.mxu0 %v1052
    %1216 = vmatmul.mubr.f32.gmra.mrb[0].mxu0 %v988
    %v1217 = vpop.f32.mrb[0].mxu0
    %v1218 = vadd.f32 0.0, %v1217
    %v1219 = vpop.f32.mrb[0].mxu0
    %1220 = vmatprep.mubr.f32.mxu0 %v1055
    %1221 = vmatmul.mubr.f32.gmra.mrb[0].mxu0 %v990
    %v1222 = vpop.f32.mrb[0].mxu0
    %v1223 = vadd.f32 0.0, %v1222
    %v1224 = vpop.f32.mrb[0].mxu0
    %1225 = vmatprep.mubr.f32.mxu0 %v1058
    %1226 = vmatmul.mubr.f32.gmra.mrb[0].mxu0 %v992
    %v1227 = vpop.f32.mrb[0].mxu0
    %v1228 = vadd.f32 0.0, %v1227
    %v1229 = vpop.f32.mrb[0].mxu0
    %1230 = vmatprep.mubr.f32.mxu0 %v1061
    %1231 = vmatmul.mubr.f32.gmra.mrb[0].mxu0 %v994
    %v1232 = vpop.f32.mrb[0].mxu0
    %v1233 = vadd.f32 0.0, %v1232
    %v1234 = vpop.f32.mrb[0].mxu0
    %1235 = vmatprep.mubr.f32.mxu0 %v1064
    %1236 = vmatmul.mubr.f32.gmra.mrb[0].mxu0 %v996
    %v1237 = vpop.f32.mrb[0].mxu0
    %v1238 = vadd.f32 0.0, %v1237
    %v1239 = vpop.f32.mrb[0].mxu0
    %1240 = vmatprep.mubr.f32.mxu0 %v1067
    %1241 = vmatmul.mubr.f32.gmra.mrb[0].mxu0 %v998
    %v1242 = vpop.f32.mrb[0].mxu0
    %v1243 = vadd.f32 0.0, %v1242
    %v1244 = vpop.f32.mrb[0].mxu0
    %1245 = vmatprep.mubr.f32.mxu0 %v1070
    %1246 = vmatmul.mubr.f32.gmra.mrb[0].mxu0 %v1000
    %v1247 = vpop.f32.mrb[0].mxu0
    %v1248 = vadd.f32 0.0, %v1247
    %v1249 = vpop.f32.mrb[0].mxu0
    %1250 = vmatprep.mubr.f32.mxu0 %v1073
    %1251 = vmatmul.mubr.f32.gmra.mrb[0].mxu0 %v1002
    %v1252 = vpop.f32.mrb[0].mxu0
    %v1253 = vadd.f32 0.0, %v1252
    %v1254 = vpop.f32.mrb[0].mxu0
    %1255 = vmatprep.mubr.f32.mxu0 %v1076
    %1256 = vmatmul.mubr.f32.gmra.mrb[0].mxu0 %v1004
    %v1257 = vpop.f32.mrb[0].mxu0
    %v1258 = vadd.f32 0.0, %v1257
    %v1259 = vpop.f32.mrb[0].mxu0
    %1260 = vmatprep.mubr.f32.mxu0 %v1079
    %1261 = vmatmul.mubr.f32.gmra.mrb[0].mxu0 %v1006
    %v1262 = vpop.f32.mrb[0].mxu0
    %v1263 = vadd.f32 0.0, %v1262
    %v1264 = vpop.f32.mrb[0].mxu0
    %1265 = vmatprep.mubr.f32.mxu0 %v1082
    %1266 = vmatmul.mubr.f32.gmra.mrb[0].mxu0 %v1008
    %v1267 = vpop.f32.mrb[0].mxu0
    %v1268 = vadd.f32 0.0, %v1267
    %v1269 = vpop.f32.mrb[0].mxu0
    %1270 = vmatprep.mubr.f32.mxu0 %v1085
    %1271 = vmatmul.mubr.f32.gmra.mrb[0].mxu0 %v1010
    %v1272 = vpop.f32.mrb[0].mxu0
    %v1273 = vadd.f32 0.0, %v1272
    %v1274 = vpop.f32.mrb[0].mxu0
    %1275 = vmatprep.mubr.f32.mxu0 %v1088
    %1276 = vmatmul.mubr.f32.gmra.mrb[0].mxu0 %v1012
    %v1277 = vpop.f32.mrb[0].mxu0
    %v1278 = vadd.f32 0.0, %v1277
    %v1279 = vpop.f32.mrb[0].mxu0
    %1280 = vmatprep.mubr.f32.mxu0 %v1091
    %1281 = vmatmul.mubr.f32.gmra.mrb[0].mxu0 %v1014
    %v1282 = vpop.f32.mrb[0].mxu0
    %v1283 = vadd.f32 0.0, %v1282
    %v1284 = vpop.f32.mrb[0].mxu0
    %1285 = vmatprep.mubr.f32.mxu0 %v1094
    %1286 = vmatmul.mubr.f32.gmra.mrb[0].mxu0 %v1016
    %v1287 = vpop.f32.mrb[0].mxu0
    %v1288 = vadd.f32 0.0, %v1287
    %v1289 = vpop.f32.mrb[0].mxu0
    %1290 = vdwg.mxu0
    %v1291 = vadd.f32 %v726, %v1163
    %v1292 = vadd.f32 %v727, %v1168
    %v1293 = vadd.f32 %v728, %v1173
    %v1294 = vadd.f32 %v729, %v1178
    %v1295 = vadd.f32 %v730, %v1183
    %v1296 = vadd.f32 %v731, %v1188
    %v1297 = vadd.f32 %v732, %v1193
    %v1298 = vadd.f32 %v733, %v1198
    %v1299 = vadd.f32 %v734, %v1203
    %v1300 = vadd.f32 %v735, %v1208
    %v1301 = vadd.f32 %v736, %v1213
    %v1302 = vadd.f32 %v737, %v1218
    %v1303 = vadd.f32 %v738, %v1223
    %v1304 = vadd.f32 %v739, %v1228
    %v1305 = vadd.f32 %v740, %v1233
    %v1306 = vadd.f32 %v741, %v1238
    %v1307 = vadd.f32 %v742, %v1243
    %v1308 = vadd.f32 %v743, %v1248
    %v1309 = vadd.f32 %v744, %v1253
    %v1310 = vadd.f32 %v745, %v1258
    %v1311 = vadd.f32 %v746, %v1263
    %v1312 = vadd.f32 %v747, %v1268
    %v1313 = vadd.f32 %v748, %v1273
    %v1314 = vadd.f32 %v749, %v1278
    %v1315 = vadd.f32 %v750, %v1283
    %v1316 = vadd.f32 %v751, %v1288
    %s1317 = scalar_lea.vmem %s1, 64
    %v1318 = vld [vmem:[%s1317] sm:$0xff]
    %v1319 = vld [vmem:[%s1317 + $0x8] sm:$0xff]
    %v1320 = vld [vmem:[%s1317 + $0x10] sm:$0xff]
    %v1321 = vld [vmem:[%s1317 + $0x18] sm:$0xf]
    %v1323 = vsel %vm185, %v1321, 0
    %1325 = vmatprep.subr.mxu0 0.0
    %1326 = vmatpush1.msra.mxu0 %v1318
    %1327 = vmatprep.subr.mxu0 0.0
    %1328 = vmatpush1.msra.mxu0 %v1319
    %1329 = vmatprep.subr.mxu0 0.0
    %1330 = vmatpush1.msra.mxu0 %v1320
    %1331 = vmatprep.subr.mxu0 0.0
    %1332 = vmatpush1.msra.mxu0 %v1323
    %1333 = vmatprep.subr.mxu0 0.0
    %1334 = vmatpush1.msra.mxu0 0.0
    %1335 = vmatprep.subr.mxu0 0.0
    %1336 = vmatpush1.msra.mxu0 0.0
    %1337 = vmatprep.subr.mxu0 0.0
    %1338 = vmatpush1.msra.mxu0 0.0
    %1339 = vmatprep.subr.mxu0 0.0
    %1340 = vmatpush1.msra.mxu0 0.0
    %1341 = vmatprep.subr.mxu0 0.0
    %1342 = vmatpush1.msra.mxu0 0.0
    %1343 = vmatprep.subr.mxu0 0.0
    %1344 = vmatpush1.msra.mxu0 0.0
    %1345 = vmatprep.subr.mxu0 0.0
    %1346 = vmatpush1.msra.mxu0 0.0
    %1347 = vmatprep.subr.mxu0 0.0
    %1348 = vmatpush1.msra.mxu0 0.0
    %1349 = vmatprep.subr.mxu0 0.0
    %1350 = vmatpush1.msra.mxu0 0.0
    %1351 = vmatprep.subr.mxu0 0.0
    %1352 = vmatpush1.msra.mxu0 0.0
    %1353 = vmatprep.subr.mxu0 0.0
    %1354 = vmatpush1.msra.mxu0 0.0
    %1355 = vmatprep.subr.mxu0 0.0
    %1356 = vmatpush1.msra.mxu0 0.0
    %1357 = vmatprep.subr.mxu0 0.0
    %1358 = vmatpush1.msra.mxu0 0.0
    %1359 = vmatprep.subr.mxu0 0.0
    %1360 = vmatpush1.msra.mxu0 0.0
    %1361 = vmatprep.subr.mxu0 0.0
    %1362 = vmatpush1.msra.mxu0 0.0
    %1363 = vmatprep.subr.mxu0 0.0
    %1364 = vmatpush1.msra.mxu0 0.0
    %1365 = vmatprep.subr.mxu0 0.0
    %1366 = vmatpush1.msra.mxu0 0.0
    %1367 = vmatprep.subr.mxu0 0.0
    %1368 = vmatpush1.msra.mxu0 0.0
    %1369 = vmatprep.subr.mxu0 0.0
    %1370 = vmatpush1.msra.mxu0 0.0
    %1371 = vmatprep.subr.mxu0 0.0
    %1372 = vmatpush1.msra.mxu0 0.0
    %1373 = vmatprep.subr.mxu0 0.0
    %1374 = vmatpush1.msra.mxu0 0.0
    %1375 = vmatprep.subr.mxu0 0.0
    %1376 = vmatpush1.msra.mxu0 0.0
    %1377 = vmatprep.subr.mxu0 0.0
    %1378 = vmatpush1.msra.mxu0 0.0
    %1379 = vmatprep.subr.mxu0 0.0
    %1380 = vmatpush1.msra.mxu0 0.0
    %1381 = vmatprep.subr.mxu0 0.0
    %1382 = vmatpush1.msra.mxu0 0.0
    %1383 = vmatprep.subr.mxu0 0.0
    %1384 = vmatpush1.msra.mxu0 0.0
    %1385 = vmatprep.subr.mxu0 0.0
    %1386 = vmatpush1.msra.mxu0 0.0
    %1387 = vmatprep.subr.mxu0 0.0
    %1388 = vmatpush1.msra.mxu0 0.0
    %1389 = vmatprep.mubr.f32.mxu0 0.0
    %1390 = vmatmul.mubr.f32.gmra.mrb[0].mxu0 %v102
    %v1391 = vpop.f32.mrb[0].mxu0
    %v1392 = vadd.f32 0.0, %v1391
    %v1393 = vpop.f32.mrb[0].mxu0
    %1394 = vmatprep.mubr.f32.mxu0 0.0
    %1395 = vmatmul.mubr.f32.gmra.mrb[0].mxu0 %v105
    %v1396 = vpop.f32.mrb[0].mxu0
    %v1397 = vadd.f32 0.0, %v1396
    %v1398 = vpop.f32.mrb[0].mxu0
    %1399 = vmatprep.mubr.f32.mxu0 0.0
    %1400 = vmatmul.mubr.f32.gmra.mrb[0].mxu0 %v108
    %v1401 = vpop.f32.mrb[0].mxu0
    %v1402 = vadd.f32 0.0, %v1401
    %v1403 = vpop.f32.mrb[0].mxu0
    %1404 = vmatprep.mubr.f32.mxu0 0.0
    %1405 = vmatmul.mubr.f32.gmra.mrb[0].mxu0 %v111
    %v1406 = vpop.f32.mrb[0].mxu0
    %v1407 = vadd.f32 0.0, %v1406
    %v1408 = vpop.f32.mrb[0].mxu0
    %1409 = vmatprep.mubr.f32.mxu0 0.0
    %1410 = vmatmul.mubr.f32.gmra.mrb[0].mxu0 %v114
    %v1411 = vpop.f32.mrb[0].mxu0
    %v1412 = vadd.f32 0.0, %v1411
    %v1413 = vpop.f32.mrb[0].mxu0
    %1414 = vmatprep.mubr.f32.mxu0 0.0
    %1415 = vmatmul.mubr.f32.gmra.mrb[0].mxu0 %v117
    %v1416 = vpop.f32.mrb[0].mxu0
    %v1417 = vadd.f32 0.0, %v1416
    %v1418 = vpop.f32.mrb[0].mxu0
    %1419 = vmatprep.mubr.f32.mxu0 0.0
    %1420 = vmatmul.mubr.f32.gmra.mrb[0].mxu0 %v120
    %v1421 = vpop.f32.mrb[0].mxu0
    %v1422 = vadd.f32 0.0, %v1421
    %v1423 = vpop.f32.mrb[0].mxu0
    %1424 = vmatprep.mubr.f32.mxu0 0.0
    %1425 = vmatmul.mubr.f32.gmra.mrb[0].mxu0 %v123
    %v1426 = vpop.f32.mrb[0].mxu0
    %v1427 = vadd.f32 0.0, %v1426
    %v1428 = vpop.f32.mrb[0].mxu0
    %1429 = vmatprep.mubr.f32.mxu0 0.0
    %1430 = vmatmul.mubr.f32.gmra.mrb[0].mxu0 %v126
    %v1431 = vpop.f32.mrb[0].mxu0
    %v1432 = vadd.f32 0.0, %v1431
    %v1433 = vpop.f32.mrb[0].mxu0
    %1434 = vmatprep.mubr.f32.mxu0 0.0
    %1435 = vmatmul.mubr.f32.gmra.mrb[0].mxu0 %v129
    %v1436 = vpop.f32.mrb[0].mxu0
    %v1437 = vadd.f32 0.0, %v1436
    %v1438 = vpop.f32.mrb[0].mxu0
    %1439 = vmatprep.mubr.f32.mxu0 0.0
    %1440 = vmatmul.mubr.f32.gmra.mrb[0].mxu0 %v132
    %v1441 = vpop.f32.mrb[0].mxu0
    %v1442 = vadd.f32 0.0, %v1441
    %v1443 = vpop.f32.mrb[0].mxu0
    %1444 = vmatprep.mubr.f32.mxu0 0.0
    %1445 = vmatmul.mubr.f32.gmra.mrb[0].mxu0 %v135
    %v1446 = vpop.f32.mrb[0].mxu0
    %v1447 = vadd.f32 0.0, %v1446
    %v1448 = vpop.f32.mrb[0].mxu0
    %1449 = vmatprep.mubr.f32.mxu0 0.0
    %1450 = vmatmul.mubr.f32.gmra.mrb[0].mxu0 %v138
    %v1451 = vpop.f32.mrb[0].mxu0
    %v1452 = vadd.f32 0.0, %v1451
    %v1453 = vpop.f32.mrb[0].mxu0
    %1454 = vmatprep.mubr.f32.mxu0 0.0
    %1455 = vmatmul.mubr.f32.gmra.mrb[0].mxu0 %v141
    %v1456 = vpop.f32.mrb[0].mxu0
    %v1457 = vadd.f32 0.0, %v1456
    %v1458 = vpop.f32.mrb[0].mxu0
    %1459 = vmatprep.mubr.f32.mxu0 0.0
    %1460 = vmatmul.mubr.f32.gmra.mrb[0].mxu0 %v144
    %v1461 = vpop.f32.mrb[0].mxu0
    %v1462 = vadd.f32 0.0, %v1461
    %v1463 = vpop.f32.mrb[0].mxu0
    %1464 = vmatprep.mubr.f32.mxu0 0.0
    %1465 = vmatmul.mubr.f32.gmra.mrb[0].mxu0 %v147
    %v1466 = vpop.f32.mrb[0].mxu0
    %v1467 = vadd.f32 0.0, %v1466
    %v1468 = vpop.f32.mrb[0].mxu0
    %1469 = vmatprep.mubr.f32.mxu0 0.0
    %1470 = vmatmul.mubr.f32.gmra.mrb[0].mxu0 %v150
    %v1471 = vpop.f32.mrb[0].mxu0
    %v1472 = vadd.f32 0.0, %v1471
    %v1473 = vpop.f32.mrb[0].mxu0
    %1474 = vmatprep.mubr.f32.mxu0 0.0
    %1475 = vmatmul.mubr.f32.gmra.mrb[0].mxu0 %v153
    %v1476 = vpop.f32.mrb[0].mxu0
    %v1477 = vadd.f32 0.0, %v1476
    %v1478 = vpop.f32.mrb[0].mxu0
    %1479 = vmatprep.mubr.f32.mxu0 0.0
    %1480 = vmatmul.mubr.f32.gmra.mrb[0].mxu0 %v156
    %v1481 = vpop.f32.mrb[0].mxu0
    %v1482 = vadd.f32 0.0, %v1481
    %v1483 = vpop.f32.mrb[0].mxu0
    %1484 = vmatprep.mubr.f32.mxu0 0.0
    %1485 = vmatmul.mubr.f32.gmra.mrb[0].mxu0 %v159
    %v1486 = vpop.f32.mrb[0].mxu0
    %v1487 = vadd.f32 0.0, %v1486
    %v1488 = vpop.f32.mrb[0].mxu0
    %1489 = vmatprep.mubr.f32.mxu0 0.0
    %1490 = vmatmul.mubr.f32.gmra.mrb[0].mxu0 %v162
    %v1491 = vpop.f32.mrb[0].mxu0
    %v1492 = vadd.f32 0.0, %v1491
    %v1493 = vpop.f32.mrb[0].mxu0
    %1494 = vmatprep.mubr.f32.mxu0 0.0
    %1495 = vmatmul.mubr.f32.gmra.mrb[0].mxu0 %v165
    %v1496 = vpop.f32.mrb[0].mxu0
    %v1497 = vadd.f32 0.0, %v1496
    %v1498 = vpop.f32.mrb[0].mxu0
    %1499 = vmatprep.mubr.f32.mxu0 0.0
    %1500 = vmatmul.mubr.f32.gmra.mrb[0].mxu0 %v168
    %v1501 = vpop.f32.mrb[0].mxu0
    %v1502 = vadd.f32 0.0, %v1501
    %v1503 = vpop.f32.mrb[0].mxu0
    %1504 = vmatprep.mubr.f32.mxu0 0.0
    %1505 = vmatmul.mubr.f32.gmra.mrb[0].mxu0 %v171
    %v1506 = vpop.f32.mrb[0].mxu0
    %v1507 = vadd.f32 0.0, %v1506
    %v1508 = vpop.f32.mrb[0].mxu0
    %1509 = vmatprep.mubr.f32.mxu0 0.0
    %1510 = vmatmul.mubr.f32.gmra.mrb[0].mxu0 %v174
    %v1511 = vpop.f32.mrb[0].mxu0
    %v1512 = vadd.f32 0.0, %v1511
    %v1513 = vpop.f32.mrb[0].mxu0
    %1514 = vmatprep.mubr.f32.mxu0 0.0
    %1515 = vmatmul.mubr.f32.gmra.mrb[0].mxu0 %v177
    %v1516 = vpop.f32.mrb[0].mxu0
    %v1517 = vadd.f32 0.0, %v1516
    %v1518 = vpop.f32.mrb[0].mxu0
    %1519 = vmatprep.mubr.f32.mxu0 0.0
    %1520 = vmatmul.mubr.f32.gmra.mrb[0].mxu0 %v180
    %v1521 = vpop.f32.mrb[0].mxu0
    %v1522 = vadd.f32 0.0, %v1521
    %v1523 = vpop.f32.mrb[0].mxu0
    %1524 = vmatprep.mubr.f32.mxu0 0.0
    %1525 = vmatmul.mubr.f32.gmra.mrb[0].mxu0 %v183
    %v1526 = vpop.f32.mrb[0].mxu0
    %v1527 = vadd.f32 0.0, %v1526
    %v1528 = vpop.f32.mrb[0].mxu0
    %1529 = vdwg.mxu0
    %s1530 = scalar_lea.vmem %s2, 832
    %v1531 = vld [vmem:[%s1530] sm:$0xff]
    %v1532 = vld [vmem:[%s1530 + $0x8] sm:$0xff]
    %v1533 = vld [vmem:[%s1530 + $0x10] sm:$0xff]
    %v1534 = vld [vmem:[%s1530 + $0x18] sm:$0xff]
    %v1535 = vld [vmem:[%s1530 + $0x20] sm:$0xff]
    %v1536 = vld [vmem:[%s1530 + $0x28] sm:$0xff]
    %v1537 = vld [vmem:[%s1530 + $0x30] sm:$0xff]
    %v1538 = vld [vmem:[%s1530 + $0x38] sm:$0xff]
    %v1539 = vld [vmem:[%s1530 + $0x40] sm:$0xff]
    %v1540 = vld [vmem:[%s1530 + $0x48] sm:$0xff]
    %v1541 = vld [vmem:[%s1530 + $0x50] sm:$0xff]
    %v1542 = vld [vmem:[%s1530 + $0x58] sm:$0xff]
    %v1543 = vld [vmem:[%s1530 + $0x60] sm:$0xff]
    %v1544 = vld [vmem:[%s1530 + $0x68] sm:$0xff]
    %v1545 = vld [vmem:[%s1530 + $0x70] sm:$0xff]
    %v1546 = vld [vmem:[%s1530 + $0x78] sm:$0xff]
    %v1547 = vld [vmem:[%s1530 + $0x80] sm:$0xff]
    %v1548 = vld [vmem:[%s1530 + $0x88] sm:$0xff]
    %v1549 = vld [vmem:[%s1530 + $0x90] sm:$0xff]
    %v1550 = vld [vmem:[%s1530 + $0x98] sm:$0xff]
    %v1551 = vld [vmem:[%s1530 + $0xa0] sm:$0xff]
    %v1552 = vld [vmem:[%s1530 + $0xa8] sm:$0xff]
    %v1553 = vld [vmem:[%s1530 + $0xb0] sm:$0xff]
    %v1554 = vld [vmem:[%s1530 + $0xb8] sm:$0xff]
    %v1555 = vld [vmem:[%s1530 + $0xc0] sm:$0xff]
    %v1556 = vld [vmem:[%s1530 + $0xc8] sm:$0xff]
    %v1557 = vld [vmem:[%s1530 + $0xd0] sm:$0xff]
    %v1558 = vld [vmem:[%s1530 + $0xd8] sm:$0xff]
    %v1559 = vld [vmem:[%s1530 + $0xe0] sm:$0xff]
    %v1560 = vld [vmem:[%s1530 + $0xe8] sm:$0xff]
    %v1561 = vld [vmem:[%s1530 + $0xf0] sm:$0xff]
    %v1562 = vld [vmem:[%s1530 + $0xf8] sm:$0xff]
    %v1563 = vld [vmem:[%s1530 + $0x100] sm:$0xff]
    %v1564 = vld [vmem:[%s1530 + $0x108] sm:$0xff]
    %v1565 = vld [vmem:[%s1530 + $0x110] sm:$0xff]
    %v1566 = vld [vmem:[%s1530 + $0x118] sm:$0xff]
    %v1567 = vld [vmem:[%s1530 + $0x120] sm:$0xff]
    %v1568 = vld [vmem:[%s1530 + $0x128] sm:$0xff]
    %v1569 = vld [vmem:[%s1530 + $0x130] sm:$0xff]
    %v1570 = vld [vmem:[%s1530 + $0x138] sm:$0xff]
    %v1571 = vld [vmem:[%s1530 + $0x140] sm:$0xff]
    %v1572 = vld [vmem:[%s1530 + $0x148] sm:$0xff]
    %v1573 = vld [vmem:[%s1530 + $0x150] sm:$0xff]
    %v1574 = vld [vmem:[%s1530 + $0x158] sm:$0xff]
    %v1575 = vld [vmem:[%s1530 + $0x160] sm:$0xff]
    %v1576 = vld [vmem:[%s1530 + $0x168] sm:$0xff]
    %v1577 = vld [vmem:[%s1530 + $0x170] sm:$0xff]
    %v1578 = vld [vmem:[%s1530 + $0x178] sm:$0xff]
    %v1579 = vld [vmem:[%s1530 + $0x180] sm:$0xff]
    %v1580 = vld [vmem:[%s1530 + $0x188] sm:$0xff]
    %v1581 = vld [vmem:[%s1530 + $0x190] sm:$0xff]
    %v1582 = vld [vmem:[%s1530 + $0x198] sm:$0xff]
    %v1584 = vsel %vm446, %v1532, 0
    %v1587 = vsel %vm446, %v1534, 0
    %v1590 = vsel %vm446, %v1536, 0
    %v1593 = vsel %vm446, %v1538, 0
    %v1596 = vsel %vm446, %v1540, 0
    %v1599 = vsel %vm446, %v1542, 0
    %v1602 = vsel %vm446, %v1544, 0
    %v1605 = vsel %vm446, %v1546, 0
    %v1608 = vsel %vm446, %v1548, 0
    %v1611 = vsel %vm446, %v1550, 0
    %v1614 = vsel %vm446, %v1552, 0
    %v1617 = vsel %vm446, %v1554, 0
    %v1620 = vsel %vm446, %v1556, 0
    %v1623 = vsel %vm446, %v1558, 0
    %v1626 = vsel %vm446, %v1560, 0
    %v1629 = vsel %vm446, %v1562, 0
    %v1632 = vsel %vm446, %v1564, 0
    %v1635 = vsel %vm446, %v1566, 0
    %v1638 = vsel %vm446, %v1568, 0
    %v1641 = vsel %vm446, %v1570, 0
    %v1644 = vsel %vm446, %v1572, 0
    %v1647 = vsel %vm446, %v1574, 0
    %v1650 = vsel %vm446, %v1576, 0
    %v1653 = vsel %vm446, %v1578, 0
    %v1656 = vsel %vm446, %v1580, 0
    %v1659 = vsel %vm446, %v1582, 0
    %1661 = vmatprep.subr.mxu0 0.0
    %1662 = vmatpush1.msra.mxu0 %v1392
    %1663 = vmatprep.subr.mxu0 0.0
    %1664 = vmatpush1.msra.mxu0 %v1397
    %1665 = vmatprep.subr.mxu0 0.0
    %1666 = vmatpush1.msra.mxu0 %v1402
    %1667 = vmatprep.subr.mxu0 0.0
    %1668 = vmatpush1.msra.mxu0 %v1407
    %1669 = vmatprep.subr.mxu0 0.0
    %1670 = vmatpush1.msra.mxu0 %v1412
    %1671 = vmatprep.subr.mxu0 0.0
    %1672 = vmatpush1.msra.mxu0 %v1417
    %1673 = vmatprep.subr.mxu0 0.0
    %1674 = vmatpush1.msra.mxu0 %v1422
    %1675 = vmatprep.subr.mxu0 0.0
    %1676 = vmatpush1.msra.mxu0 %v1427
    %1677 = vmatprep.subr.mxu0 0.0
    %1678 = vmatpush1.msra.mxu0 %v1432
    %1679 = vmatprep.subr.mxu0 0.0
    %1680 = vmatpush1.msra.mxu0 %v1437
    %1681 = vmatprep.subr.mxu0 0.0
    %1682 = vmatpush1.msra.mxu0 %v1442
    %1683 = vmatprep.subr.mxu0 0.0
    %1684 = vmatpush1.msra.mxu0 %v1447
    %1685 = vmatprep.subr.mxu0 0.0
    %1686 = vmatpush1.msra.mxu0 %v1452
    %1687 = vmatprep.subr.mxu0 0.0
    %1688 = vmatpush1.msra.mxu0 %v1457
    %1689 = vmatprep.subr.mxu0 0.0
    %1690 = vmatpush1.msra.mxu0 %v1462
    %1691 = vmatprep.subr.mxu0 0.0
    %1692 = vmatpush1.msra.mxu0 %v1467
    %1693 = vmatprep.subr.mxu0 0.0
    %1694 = vmatpush1.msra.mxu0 %v1472
    %1695 = vmatprep.subr.mxu0 0.0
    %1696 = vmatpush1.msra.mxu0 %v1477
    %1697 = vmatprep.subr.mxu0 0.0
    %1698 = vmatpush1.msra.mxu0 %v1482
    %1699 = vmatprep.subr.mxu0 0.0
    %1700 = vmatpush1.msra.mxu0 %v1487
    %1701 = vmatprep.subr.mxu0 0.0
    %1702 = vmatpush1.msra.mxu0 %v1492
    %1703 = vmatprep.subr.mxu0 0.0
    %1704 = vmatpush1.msra.mxu0 %v1497
    %1705 = vmatprep.subr.mxu0 0.0
    %1706 = vmatpush1.msra.mxu0 %v1502
    %1707 = vmatprep.subr.mxu0 0.0
    %1708 = vmatpush1.msra.mxu0 %v1507
    %1709 = vmatprep.subr.mxu0 0.0
    %1710 = vmatpush1.msra.mxu0 %v1512
    %1711 = vmatprep.subr.mxu0 0.0
    %1712 = vmatpush1.msra.mxu0 %v1517
    %1713 = vmatprep.subr.mxu0 0.0
    %1714 = vmatpush1.msra.mxu0 %v1522
    %1715 = vmatprep.subr.mxu0 0.0
    %1716 = vmatpush1.msra.mxu0 %v1527
    %1717 = vmatprep.subr.mxu0 0.0
    %1718 = vmatpush1.msra.mxu0 0.0
    %1719 = vmatprep.subr.mxu0 0.0
    %1720 = vmatpush1.msra.mxu0 0.0
    %1721 = vmatprep.subr.mxu0 0.0
    %1722 = vmatpush1.msra.mxu0 0.0
    %1723 = vmatprep.subr.mxu0 0.0
    %1724 = vmatpush1.msra.mxu0 0.0
    %1725 = vmatprep.mubr.f32.mxu0 %v1584
    %1726 = vmatmul.mubr.f32.gmra.mrb[0].mxu0 %v1531
    %v1727 = vpop.f32.mrb[0].mxu0
    %v1728 = vadd.f32 0.0, %v1727
    %v1729 = vpop.f32.mrb[0].mxu0
    %1730 = vmatprep.mubr.f32.mxu0 %v1587
    %1731 = vmatmul.mubr.f32.gmra.mrb[0].mxu0 %v1533
    %v1732 = vpop.f32.mrb[0].mxu0
    %v1733 = vadd.f32 0.0, %v1732
    %v1734 = vpop.f32.mrb[0].mxu0
    %1735 = vmatprep.mubr.f32.mxu0 %v1590
    %1736 = vmatmul.mubr.f32.gmra.mrb[0].mxu0 %v1535
    %v1737 = vpop.f32.mrb[0].mxu0
    %v1738 = vadd.f32 0.0, %v1737
    %v1739 = vpop.f32.mrb[0].mxu0
    %1740 = vmatprep.mubr.f32.mxu0 %v1593
    %1741 = vmatmul.mubr.f32.gmra.mrb[0].mxu0 %v1537
    %v1742 = vpop.f32.mrb[0].mxu0
    %v1743 = vadd.f32 0.0, %v1742
    %v1744 = vpop.f32.mrb[0].mxu0
    %1745 = vmatprep.mubr.f32.mxu0 %v1596
    %1746 = vmatmul.mubr.f32.gmra.mrb[0].mxu0 %v1539
    %v1747 = vpop.f32.mrb[0].mxu0
    %v1748 = vadd.f32 0.0, %v1747
    %v1749 = vpop.f32.mrb[0].mxu0
    %1750 = vmatprep.mubr.f32.mxu0 %v1599
    %1751 = vmatmul.mubr.f32.gmra.mrb[0].mxu0 %v1541
    %v1752 = vpop.f32.mrb[0].mxu0
    %v1753 = vadd.f32 0.0, %v1752
    %v1754 = vpop.f32.mrb[0].mxu0
    %1755 = vmatprep.mubr.f32.mxu0 %v1602
    %1756 = vmatmul.mubr.f32.gmra.mrb[0].mxu0 %v1543
    %v1757 = vpop.f32.mrb[0].mxu0
    %v1758 = vadd.f32 0.0, %v1757
    %v1759 = vpop.f32.mrb[0].mxu0
    %1760 = vmatprep.mubr.f32.mxu0 %v1605
    %1761 = vmatmul.mubr.f32.gmra.mrb[0].mxu0 %v1545
    %v1762 = vpop.f32.mrb[0].mxu0
    %v1763 = vadd.f32 0.0, %v1762
    %v1764 = vpop.f32.mrb[0].mxu0
    %1765 = vmatprep.mubr.f32.mxu0 %v1608
    %1766 = vmatmul.mubr.f32.gmra.mrb[0].mxu0 %v1547
    %v1767 = vpop.f32.mrb[0].mxu0
    %v1768 = vadd.f32 0.0, %v1767
    %v1769 = vpop.f32.mrb[0].mxu0
    %1770 = vmatprep.mubr.f32.mxu0 %v1611
    %1771 = vmatmul.mubr.f32.gmra.mrb[0].mxu0 %v1549
    %v1772 = vpop.f32.mrb[0].mxu0
    %v1773 = vadd.f32 0.0, %v1772
    %v1774 = vpop.f32.mrb[0].mxu0
    %1775 = vmatprep.mubr.f32.mxu0 %v1614
    %1776 = vmatmul.mubr.f32.gmra.mrb[0].mxu0 %v1551
    %v1777 = vpop.f32.mrb[0].mxu0
    %v1778 = vadd.f32 0.0, %v1777
    %v1779 = vpop.f32.mrb[0].mxu0
    %1780 = vmatprep.mubr.f32.mxu0 %v1617
    %1781 = vmatmul.mubr.f32.gmra.mrb[0].mxu0 %v1553
    %v1782 = vpop.f32.mrb[0].mxu0
    %v1783 = vadd.f32 0.0, %v1782
    %v1784 = vpop.f32.mrb[0].mxu0
    %1785 = vmatprep.mubr.f32.mxu0 %v1620
    %1786 = vmatmul.mubr.f32.gmra.mrb[0].mxu0 %v1555
    %v1787 = vpop.f32.mrb[0].mxu0
    %v1788 = vadd.f32 0.0, %v1787
    %v1789 = vpop.f32.mrb[0].mxu0
    %1790 = vmatprep.mubr.f32.mxu0 %v1623
    %1791 = vmatmul.mubr.f32.gmra.mrb[0].mxu0 %v1557
    %v1792 = vpop.f32.mrb[0].mxu0
    %v1793 = vadd.f32 0.0, %v1792
    %v1794 = vpop.f32.mrb[0].mxu0
    %1795 = vmatprep.mubr.f32.mxu0 %v1626
    %1796 = vmatmul.mubr.f32.gmra.mrb[0].mxu0 %v1559
    %v1797 = vpop.f32.mrb[0].mxu0
    %v1798 = vadd.f32 0.0, %v1797
    %v1799 = vpop.f32.mrb[0].mxu0
    %1800 = vmatprep.mubr.f32.mxu0 %v1629
    %1801 = vmatmul.mubr.f32.gmra.mrb[0].mxu0 %v1561
    %v1802 = vpop.f32.mrb[0].mxu0
    %v1803 = vadd.f32 0.0, %v1802
    %v1804 = vpop.f32.mrb[0].mxu0
    %1805 = vmatprep.mubr.f32.mxu0 %v1632
    %1806 = vmatmul.mubr.f32.gmra.mrb[0].mxu0 %v1563
    %v1807 = vpop.f32.mrb[0].mxu0
    %v1808 = vadd.f32 0.0, %v1807
    %v1809 = vpop.f32.mrb[0].mxu0
    %1810 = vmatprep.mubr.f32.mxu0 %v1635
    %1811 = vmatmul.mubr.f32.gmra.mrb[0].mxu0 %v1565
    %v1812 = vpop.f32.mrb[0].mxu0
    %v1813 = vadd.f32 0.0, %v1812
    %v1814 = vpop.f32.mrb[0].mxu0
    %1815 = vmatprep.mubr.f32.mxu0 %v1638
    %1816 = vmatmul.mubr.f32.gmra.mrb[0].mxu0 %v1567
    %v1817 = vpop.f32.mrb[0].mxu0
    %v1818 = vadd.f32 0.0, %v1817
    %v1819 = vpop.f32.mrb[0].mxu0
    %1820 = vmatprep.mubr.f32.mxu0 %v1641
    %1821 = vmatmul.mubr.f32.gmra.mrb[0].mxu0 %v1569
    %v1822 = vpop.f32.mrb[0].mxu0
    %v1823 = vadd.f32 0.0, %v1822
    %v1824 = vpop.f32.mrb[0].mxu0
    %1825 = vmatprep.mubr.f32.mxu0 %v1644
    %1826 = vmatmul.mubr.f32.gmra.mrb[0].mxu0 %v1571
    %v1827 = vpop.f32.mrb[0].mxu0
    %v1828 = vadd.f32 0.0, %v1827
    %v1829 = vpop.f32.mrb[0].mxu0
    %1830 = vmatprep.mubr.f32.mxu0 %v1647
    %1831 = vmatmul.mubr.f32.gmra.mrb[0].mxu0 %v1573
    %v1832 = vpop.f32.mrb[0].mxu0
    %v1833 = vadd.f32 0.0, %v1832
    %v1834 = vpop.f32.mrb[0].mxu0
    %1835 = vmatprep.mubr.f32.mxu0 %v1650
    %1836 = vmatmul.mubr.f32.gmra.mrb[0].mxu0 %v1575
    %v1837 = vpop.f32.mrb[0].mxu0
    %v1838 = vadd.f32 0.0, %v1837
    %v1839 = vpop.f32.mrb[0].mxu0
    %1840 = vmatprep.mubr.f32.mxu0 %v1653
    %1841 = vmatmul.mubr.f32.gmra.mrb[0].mxu0 %v1577
    %v1842 = vpop.f32.mrb[0].mxu0
    %v1843 = vadd.f32 0.0, %v1842
    %v1844 = vpop.f32.mrb[0].mxu0
    %1845 = vmatprep.mubr.f32.mxu0 %v1656
    %1846 = vmatmul.mubr.f32.gmra.mrb[0].mxu0 %v1579
    %v1847 = vpop.f32.mrb[0].mxu0
    %v1848 = vadd.f32 0.0, %v1847
    %v1849 = vpop.f32.mrb[0].mxu0
    %1850 = vmatprep.mubr.f32.mxu0 %v1659
    %1851 = vmatmul.mubr.f32.gmra.mrb[0].mxu0 %v1581
    %v1852 = vpop.f32.mrb[0].mxu0
    %v1853 = vadd.f32 0.0, %v1852
    %v1854 = vpop.f32.mrb[0].mxu0
    %1855 = vdwg.mxu0
    %v1856 = vadd.f32 %v1291, %v1728
    %v1857 = vadd.f32 %v1292, %v1733
    %v1858 = vadd.f32 %v1293, %v1738
    %v1859 = vadd.f32 %v1294, %v1743
    %v1860 = vadd.f32 %v1295, %v1748
    %v1861 = vadd.f32 %v1296, %v1753
    %v1862 = vadd.f32 %v1297, %v1758
    %v1863 = vadd.f32 %v1298, %v1763
    %v1864 = vadd.f32 %v1299, %v1768
    %v1865 = vadd.f32 %v1300, %v1773
    %v1866 = vadd.f32 %v1301, %v1778
    %v1867 = vadd.f32 %v1302, %v1783
    %v1868 = vadd.f32 %v1303, %v1788
    %v1869 = vadd.f32 %v1304, %v1793
    %v1870 = vadd.f32 %v1305, %v1798
    %v1871 = vadd.f32 %v1306, %v1803
    %v1872 = vadd.f32 %v1307, %v1808
    %v1873 = vadd.f32 %v1308, %v1813
    %v1874 = vadd.f32 %v1309, %v1818
    %v1875 = vadd.f32 %v1310, %v1823
    %v1876 = vadd.f32 %v1311, %v1828
    %v1877 = vadd.f32 %v1312, %v1833
    %v1878 = vadd.f32 %v1313, %v1838
    %v1879 = vadd.f32 %v1314, %v1843
    %v1880 = vadd.f32 %v1315, %v1848
    %v1881 = vadd.f32 %v1316, %v1853
    %v1882 = vld [vmem:[%s6] sm:$0x3]
    %v1883 = vld [vmem:[%s4] sm:$0xff]
    %v1884 = vld [vmem:[%s4 + $0x8] sm:$0xff]
    %v1885 = vld [vmem:[%s4 + $0x10] sm:$0xff]
    %v1886 = vld [vmem:[%s4 + $0x18] sm:$0xff]
    %v1887 = vld [vmem:[%s4 + $0x20] sm:$0xff]
    %v1888 = vld [vmem:[%s4 + $0x28] sm:$0xff]
    %v1889 = vld [vmem:[%s4 + $0x30] sm:$0xff]
    %v1890 = vld [vmem:[%s4 + $0x38] sm:$0xff]
    %v1891 = vld [vmem:[%s4 + $0x40] sm:$0xff]
    %v1892 = vld [vmem:[%s4 + $0x48] sm:$0xff]
    %v1893 = vld [vmem:[%s4 + $0x50] sm:$0xff]
    %v1894 = vld [vmem:[%s4 + $0x58] sm:$0xff]
    %v1895 = vld [vmem:[%s4 + $0x60] sm:$0xff]
    %v1896 = vld [vmem:[%s4 + $0x68] sm:$0xff]
    %v1897 = vld [vmem:[%s4 + $0x70] sm:$0xff]
    %v1898 = vld [vmem:[%s4 + $0x78] sm:$0xff]
    %v1899 = vld [vmem:[%s4 + $0x80] sm:$0xff]
    %v1900 = vld [vmem:[%s4 + $0x88] sm:$0xff]
    %v1901 = vld [vmem:[%s4 + $0x90] sm:$0xff]
    %v1902 = vld [vmem:[%s4 + $0x98] sm:$0xff]
    %v1903 = vld [vmem:[%s4 + $0xa0] sm:$0xff]
    %v1904 = vld [vmem:[%s4 + $0xa8] sm:$0xff]
    %v1905 = vld [vmem:[%s4 + $0xb0] sm:$0xff]
    %v1906 = vld [vmem:[%s4 + $0xb8] sm:$0xff]
    %v1907 = vld [vmem:[%s4 + $0xc0] sm:$0xff]
    %v1908 = vld [vmem:[%s4 + $0xc8] sm:$0xff]
    %vm1909 = vcmask 850944
    %v1911 = vsel %vm1909, %v1856, 0
    %v1914 = vsel %vm1909, %v1857, 0
    %v1917 = vsel %vm1909, %v1858, 0
    %v1920 = vsel %vm1909, %v1859, 0
    %v1923 = vsel %vm1909, %v1860, 0
    %v1926 = vsel %vm1909, %v1861, 0
    %v1929 = vsel %vm1909, %v1862, 0
    %v1932 = vsel %vm1909, %v1863, 0
    %v1935 = vsel %vm1909, %v1864, 0
    %v1938 = vsel %vm1909, %v1865, 0
    %v1941 = vsel %vm1909, %v1866, 0
    %v1944 = vsel %vm1909, %v1867, 0
    %v1947 = vsel %vm1909, %v1868, 0
    %v1950 = vsel %vm1909, %v1869, 0
    %v1953 = vsel %vm1909, %v1870, 0
    %v1956 = vsel %vm1909, %v1871, 0
    %v1959 = vsel %vm1909, %v1872, 0
    %v1962 = vsel %vm1909, %v1873, 0
    %v1965 = vsel %vm1909, %v1874, 0
    %v1968 = vsel %vm1909, %v1875, 0
    %v1971 = vsel %vm1909, %v1876, 0
    %v1974 = vsel %vm1909, %v1877, 0
    %v1977 = vsel %vm1909, %v1878, 0
    %v1980 = vsel %vm1909, %v1879, 0
    %v1983 = vsel %vm1909, %v1880, 0
    %v1986 = vsel %vm1909, %v1881, 0
    %1988 = vmatprep.subr.mxu0 %v1884
    %1989 = vmatpush1.msra.mxu0 %v1883
    %1990 = vmatprep.subr.mxu0 %v1886
    %1991 = vmatpush1.msra.mxu0 %v1885
    %1992 = vmatprep.subr.mxu0 %v1888
    %1993 = vmatpush1.msra.mxu0 %v1887
    %1994 = vmatprep.subr.mxu0 %v1890
    %1995 = vmatpush1.msra.mxu0 %v1889
    %1996 = vmatprep.subr.mxu0 %v1892
    %1997 = vmatpush1.msra.mxu0 %v1891
    %1998 = vmatprep.subr.mxu0 %v1894
    %1999 = vmatpush1.msra.mxu0 %v1893
    %2000 = vmatprep.subr.mxu0 %v1896
    %2001 = vmatpush1.msra.mxu0 %v1895
    %2002 = vmatprep.subr.mxu0 %v1898
    %2003 = vmatpush1.msra.mxu0 %v1897
    %2004 = vmatprep.subr.mxu0 %v1900
    %2005 = vmatpush1.msra.mxu0 %v1899
    %2006 = vmatprep.subr.mxu0 %v1902
    %2007 = vmatpush1.msra.mxu0 %v1901
    %2008 = vmatprep.subr.mxu0 %v1904
    %2009 = vmatpush1.msra.mxu0 %v1903
    %2010 = vmatprep.subr.mxu0 %v1906
    %2011 = vmatpush1.msra.mxu0 %v1905
    %2012 = vmatprep.subr.mxu0 %v1908
    %2013 = vmatpush1.msra.mxu0 %v1907
    %2014 = vmatprep.subr.mxu0 0.0
    %2015 = vmatpush1.msra.mxu0 0.0
    %2016 = vmatprep.subr.mxu0 0.0
    %2017 = vmatpush1.msra.mxu0 0.0
    %2018 = vmatprep.subr.mxu0 0.0
    %2019 = vmatpush1.msra.mxu0 0.0
    %2020 = vmatprep.subr.mxu0 0.0
    %2021 = vmatpush1.msra.mxu0 0.0
    %2022 = vmatprep.subr.mxu0 0.0
    %2023 = vmatpush1.msra.mxu0 0.0
    %2024 = vmatprep.subr.mxu0 0.0
    %2025 = vmatpush1.msra.mxu0 0.0
    %2026 = vmatprep.subr.mxu0 0.0
    %2027 = vmatpush1.msra.mxu0 0.0
    %2028 = vmatprep.subr.mxu0 0.0
    %2029 = vmatpush1.msra.mxu0 0.0
    %2030 = vmatprep.subr.mxu0 0.0
    %2031 = vmatpush1.msra.mxu0 0.0
    %2032 = vmatprep.subr.mxu0 0.0
    %2033 = vmatpush1.msra.mxu0 0.0
    %2034 = vmatprep.subr.mxu0 0.0
    %2035 = vmatpush1.msra.mxu0 0.0
    %2036 = vmatprep.subr.mxu0 0.0
    %2037 = vmatpush1.msra.mxu0 0.0
    %2038 = vmatprep.subr.mxu0 0.0
    %2039 = vmatpush1.msra.mxu0 0.0
    %2040 = vmatprep.subr.mxu0 0.0
    %2041 = vmatpush1.msra.mxu0 0.0
    %2042 = vmatprep.subr.mxu0 0.0
    %2043 = vmatpush1.msra.mxu0 0.0
    %2044 = vmatprep.subr.mxu0 0.0
    %2045 = vmatpush1.msra.mxu0 0.0
    %2046 = vmatprep.subr.mxu0 0.0
    %2047 = vmatpush1.msra.mxu0 0.0
    %2048 = vmatprep.subr.mxu0 0.0
    %2049 = vmatpush1.msra.mxu0 0.0
    %2050 = vmatprep.subr.mxu0 0.0
    %2051 = vmatpush1.msra.mxu0 0.0
    %2052 = vmatprep.mubr.f32.mxu0 0.0
    %2053 = vmatmul.mubr.f32.gmra.mrb[0].mxu0 %v1911
    %v2054 = vpop.f32.mrb[0].mxu0
    %v2055 = vadd.f32 0.0, %v2054
    %v2056 = vpop.f32.mrb[0].mxu0
    %v2057 = vadd.f32 0.0, %v2056
    %2058 = vmatprep.mubr.f32.mxu0 0.0
    %2059 = vmatmul.mubr.f32.gmra.mrb[0].mxu0 %v1914
    %v2060 = vpop.f32.mrb[0].mxu0
    %v2061 = vadd.f32 0.0, %v2060
    %v2062 = vpop.f32.mrb[0].mxu0
    %v2063 = vadd.f32 0.0, %v2062
    %2064 = vmatprep.mubr.f32.mxu0 0.0
    %2065 = vmatmul.mubr.f32.gmra.mrb[0].mxu0 %v1917
    %v2066 = vpop.f32.mrb[0].mxu0
    %v2067 = vadd.f32 0.0, %v2066
    %v2068 = vpop.f32.mrb[0].mxu0
    %v2069 = vadd.f32 0.0, %v2068
    %2070 = vmatprep.mubr.f32.mxu0 0.0
    %2071 = vmatmul.mubr.f32.gmra.mrb[0].mxu0 %v1920
    %v2072 = vpop.f32.mrb[0].mxu0
    %v2073 = vadd.f32 0.0, %v2072
    %v2074 = vpop.f32.mrb[0].mxu0
    %v2075 = vadd.f32 0.0, %v2074
    %2076 = vmatprep.mubr.f32.mxu0 0.0
    %2077 = vmatmul.mubr.f32.gmra.mrb[0].mxu0 %v1923
    %v2078 = vpop.f32.mrb[0].mxu0
    %v2079 = vadd.f32 0.0, %v2078
    %v2080 = vpop.f32.mrb[0].mxu0
    %v2081 = vadd.f32 0.0, %v2080
    %2082 = vmatprep.mubr.f32.mxu0 0.0
    %2083 = vmatmul.mubr.f32.gmra.mrb[0].mxu0 %v1926
    %v2084 = vpop.f32.mrb[0].mxu0
    %v2085 = vadd.f32 0.0, %v2084
    %v2086 = vpop.f32.mrb[0].mxu0
    %v2087 = vadd.f32 0.0, %v2086
    %2088 = vmatprep.mubr.f32.mxu0 0.0
    %2089 = vmatmul.mubr.f32.gmra.mrb[0].mxu0 %v1929
    %v2090 = vpop.f32.mrb[0].mxu0
    %v2091 = vadd.f32 0.0, %v2090
    %v2092 = vpop.f32.mrb[0].mxu0
    %v2093 = vadd.f32 0.0, %v2092
    %2094 = vmatprep.mubr.f32.mxu0 0.0
    %2095 = vmatmul.mubr.f32.gmra.mrb[0].mxu0 %v1932
    %v2096 = vpop.f32.mrb[0].mxu0
    %v2097 = vadd.f32 0.0, %v2096
    %v2098 = vpop.f32.mrb[0].mxu0
    %v2099 = vadd.f32 0.0, %v2098
    %2100 = vmatprep.mubr.f32.mxu0 0.0
    %2101 = vmatmul.mubr.f32.gmra.mrb[0].mxu0 %v1935
    %v2102 = vpop.f32.mrb[0].mxu0
    %v2103 = vadd.f32 0.0, %v2102
    %v2104 = vpop.f32.mrb[0].mxu0
    %v2105 = vadd.f32 0.0, %v2104
    %2106 = vmatprep.mubr.f32.mxu0 0.0
    %2107 = vmatmul.mubr.f32.gmra.mrb[0].mxu0 %v1938
    %v2108 = vpop.f32.mrb[0].mxu0
    %v2109 = vadd.f32 0.0, %v2108
    %v2110 = vpop.f32.mrb[0].mxu0
    %v2111 = vadd.f32 0.0, %v2110
    %2112 = vmatprep.mubr.f32.mxu0 0.0
    %2113 = vmatmul.mubr.f32.gmra.mrb[0].mxu0 %v1941
    %v2114 = vpop.f32.mrb[0].mxu0
    %v2115 = vadd.f32 0.0, %v2114
    %v2116 = vpop.f32.mrb[0].mxu0
    %v2117 = vadd.f32 0.0, %v2116
    %2118 = vmatprep.mubr.f32.mxu0 0.0
    %2119 = vmatmul.mubr.f32.gmra.mrb[0].mxu0 %v1944
    %v2120 = vpop.f32.mrb[0].mxu0
    %v2121 = vadd.f32 0.0, %v2120
    %v2122 = vpop.f32.mrb[0].mxu0
    %v2123 = vadd.f32 0.0, %v2122
    %2124 = vmatprep.mubr.f32.mxu0 0.0
    %2125 = vmatmul.mubr.f32.gmra.mrb[0].mxu0 %v1947
    %v2126 = vpop.f32.mrb[0].mxu0
    %v2127 = vadd.f32 0.0, %v2126
    %v2128 = vpop.f32.mrb[0].mxu0
    %v2129 = vadd.f32 0.0, %v2128
    %2130 = vmatprep.mubr.f32.mxu0 0.0
    %2131 = vmatmul.mubr.f32.gmra.mrb[0].mxu0 %v1950
    %v2132 = vpop.f32.mrb[0].mxu0
    %v2133 = vadd.f32 0.0, %v2132
    %v2134 = vpop.f32.mrb[0].mxu0
    %v2135 = vadd.f32 0.0, %v2134
    %2136 = vmatprep.mubr.f32.mxu0 0.0
    %2137 = vmatmul.mubr.f32.gmra.mrb[0].mxu0 %v1953
    %v2138 = vpop.f32.mrb[0].mxu0
    %v2139 = vadd.f32 0.0, %v2138
    %v2140 = vpop.f32.mrb[0].mxu0
    %v2141 = vadd.f32 0.0, %v2140
    %2142 = vmatprep.mubr.f32.mxu0 0.0
    %2143 = vmatmul.mubr.f32.gmra.mrb[0].mxu0 %v1956
    %v2144 = vpop.f32.mrb[0].mxu0
    %v2145 = vadd.f32 0.0, %v2144
    %v2146 = vpop.f32.mrb[0].mxu0
    %v2147 = vadd.f32 0.0, %v2146
    %2148 = vmatprep.mubr.f32.mxu0 0.0
    %2149 = vmatmul.mubr.f32.gmra.mrb[0].mxu0 %v1959
    %v2150 = vpop.f32.mrb[0].mxu0
    %v2151 = vadd.f32 0.0, %v2150
    %v2152 = vpop.f32.mrb[0].mxu0
    %v2153 = vadd.f32 0.0, %v2152
    %2154 = vmatprep.mubr.f32.mxu0 0.0
    %2155 = vmatmul.mubr.f32.gmra.mrb[0].mxu0 %v1962
    %v2156 = vpop.f32.mrb[0].mxu0
    %v2157 = vadd.f32 0.0, %v2156
    %v2158 = vpop.f32.mrb[0].mxu0
    %v2159 = vadd.f32 0.0, %v2158
    %2160 = vmatprep.mubr.f32.mxu0 0.0
    %2161 = vmatmul.mubr.f32.gmra.mrb[0].mxu0 %v1965
    %v2162 = vpop.f32.mrb[0].mxu0
    %v2163 = vadd.f32 0.0, %v2162
    %v2164 = vpop.f32.mrb[0].mxu0
    %v2165 = vadd.f32 0.0, %v2164
    %2166 = vmatprep.mubr.f32.mxu0 0.0
    %2167 = vmatmul.mubr.f32.gmra.mrb[0].mxu0 %v1968
    %v2168 = vpop.f32.mrb[0].mxu0
    %v2169 = vadd.f32 0.0, %v2168
    %v2170 = vpop.f32.mrb[0].mxu0
    %v2171 = vadd.f32 0.0, %v2170
    %2172 = vmatprep.mubr.f32.mxu0 0.0
    %2173 = vmatmul.mubr.f32.gmra.mrb[0].mxu0 %v1971
    %v2174 = vpop.f32.mrb[0].mxu0
    %v2175 = vadd.f32 0.0, %v2174
    %v2176 = vpop.f32.mrb[0].mxu0
    %v2177 = vadd.f32 0.0, %v2176
    %2178 = vmatprep.mubr.f32.mxu0 0.0
    %2179 = vmatmul.mubr.f32.gmra.mrb[0].mxu0 %v1974
    %v2180 = vpop.f32.mrb[0].mxu0
    %v2181 = vadd.f32 0.0, %v2180
    %v2182 = vpop.f32.mrb[0].mxu0
    %v2183 = vadd.f32 0.0, %v2182
    %2184 = vmatprep.mubr.f32.mxu0 0.0
    %2185 = vmatmul.mubr.f32.gmra.mrb[0].mxu0 %v1977
    %v2186 = vpop.f32.mrb[0].mxu0
    %v2187 = vadd.f32 0.0, %v2186
    %v2188 = vpop.f32.mrb[0].mxu0
    %v2189 = vadd.f32 0.0, %v2188
    %2190 = vmatprep.mubr.f32.mxu0 0.0
    %2191 = vmatmul.mubr.f32.gmra.mrb[0].mxu0 %v1980
    %v2192 = vpop.f32.mrb[0].mxu0
    %v2193 = vadd.f32 0.0, %v2192
    %v2194 = vpop.f32.mrb[0].mxu0
    %v2195 = vadd.f32 0.0, %v2194
    %2196 = vmatprep.mubr.f32.mxu0 0.0
    %2197 = vmatmul.mubr.f32.gmra.mrb[0].mxu0 %v1983
    %v2198 = vpop.f32.mrb[0].mxu0
    %v2199 = vadd.f32 0.0, %v2198
    %v2200 = vpop.f32.mrb[0].mxu0
    %v2201 = vadd.f32 0.0, %v2200
    %2202 = vmatprep.mubr.f32.mxu0 0.0
    %2203 = vmatmul.mubr.f32.gmra.mrb[0].mxu0 %v1986
    %v2204 = vpop.f32.mrb[0].mxu0
    %v2205 = vadd.f32 0.0, %v2204
    %v2206 = vpop.f32.mrb[0].mxu0
    %v2207 = vadd.f32 0.0, %v2206
    %2208 = vdwg.mxu0
    %v2209 = vld [vmem:[#allocation2] sm:$0xff]
    %v2210 = vld [vmem:[#allocation2 + $0x8] sm:$0xff]
    %v2211 = vld [vmem:[#allocation2 + $0x10] sm:$0xff]
    %v2212 = vld [vmem:[#allocation2 + $0x18] sm:$0xff]
    %v2213 = vld [vmem:[#allocation2 + $0x20] sm:$0xff]
    %v2214 = vld [vmem:[#allocation2 + $0x28] sm:$0xff]
    %v2215 = vld [vmem:[#allocation2 + $0x30] sm:$0xff]
    %v2216 = vld [vmem:[#allocation2 + $0x38] sm:$0xff]
    %v2217 = vld [vmem:[#allocation2 + $0x40] sm:$0xff]
    %v2218 = vld [vmem:[#allocation2 + $0x48] sm:$0xff]
    %v2219 = vld [vmem:[#allocation2 + $0x50] sm:$0xff]
    %v2220 = vld [vmem:[#allocation2 + $0x58] sm:$0xff]
    %v2221 = vld [vmem:[#allocation2 + $0x60] sm:$0xff]
    %v2222 = vld [vmem:[#allocation2 + $0x68] sm:$0xff]
    %v2223 = vld [vmem:[#allocation2 + $0x70] sm:$0xff]
    %v2224 = vld [vmem:[#allocation2 + $0x78] sm:$0xff]
    %v2225 = vld [vmem:[#allocation2 + $0x80] sm:$0xff]
    %v2226 = vld [vmem:[#allocation2 + $0x88] sm:$0xff]
    %v2227 = vld [vmem:[#allocation2 + $0x90] sm:$0xff]
    %v2228 = vld [vmem:[#allocation2 + $0x98] sm:$0xff]
    %v2229 = vld [vmem:[#allocation2 + $0xa0] sm:$0xff]
    %v2230 = vld [vmem:[#allocation2 + $0xa8] sm:$0xff]
    %v2231 = vld [vmem:[#allocation2 + $0xb0] sm:$0xff]
    %v2232 = vld [vmem:[#allocation2 + $0xb8] sm:$0xff]
    %vm2233 = vcmask 654336
    %v2235 = vsel %vm2233, %v2210, 0
    %v2238 = vsel %vm2233, %v2212, 0
    %v2241 = vsel %vm2233, %v2214, 0
    %v2244 = vsel %vm2233, %v2216, 0
    %v2247 = vsel %vm2233, %v2218, 0
    %v2250 = vsel %vm2233, %v2220, 0
    %v2253 = vsel %vm2233, %v2222, 0
    %v2256 = vsel %vm2233, %v2224, 0
    %v2259 = vsel %vm2233, %v2226, 0
    %v2262 = vsel %vm2233, %v2228, 0
    %v2265 = vsel %vm2233, %v2230, 0
    %v2268 = vsel %vm2233, %v2232, 0
    %2270 = vmatprep.subr.mxu0 %v2057
    %2271 = vmatpush1.msra.mxu0 %v2055
    %2272 = vmatprep.subr.mxu0 %v2063
    %2273 = vmatpush1.msra.mxu0 %v2061
    %2274 = vmatprep.subr.mxu0 %v2069
    %2275 = vmatpush1.msra.mxu0 %v2067
    %2276 = vmatprep.subr.mxu0 %v2075
    %2277 = vmatpush1.msra.mxu0 %v2073
    %2278 = vmatprep.subr.mxu0 %v2081
    %2279 = vmatpush1.msra.mxu0 %v2079
    %2280 = vmatprep.subr.mxu0 %v2087
    %2281 = vmatpush1.msra.mxu0 %v2085
    %2282 = vmatprep.subr.mxu0 %v2093
    %2283 = vmatpush1.msra.mxu0 %v2091
    %2284 = vmatprep.subr.mxu0 %v2099
    %2285 = vmatpush1.msra.mxu0 %v2097
    %2286 = vmatprep.subr.mxu0 %v2105
    %2287 = vmatpush1.msra.mxu0 %v2103
    %2288 = vmatprep.subr.mxu0 %v2111
    %2289 = vmatpush1.msra.mxu0 %v2109
    %2290 = vmatprep.subr.mxu0 %v2117
    %2291 = vmatpush1.msra.mxu0 %v2115
    %2292 = vmatprep.subr.mxu0 %v2123
    %2293 = vmatpush1.msra.mxu0 %v2121
    %2294 = vmatprep.subr.mxu0 %v2129
    %2295 = vmatpush1.msra.mxu0 %v2127
    %2296 = vmatprep.subr.mxu0 %v2135
    %2297 = vmatpush1.msra.mxu0 %v2133
    %2298 = vmatprep.subr.mxu0 %v2141
    %2299 = vmatpush1.msra.mxu0 %v2139
    %2300 = vmatprep.subr.mxu0 %v2147
    %2301 = vmatpush1.msra.mxu0 %v2145
    %2302 = vmatprep.subr.mxu0 %v2153
    %2303 = vmatpush1.msra.mxu0 %v2151
    %2304 = vmatprep.subr.mxu0 %v2159
    %2305 = vmatpush1.msra.mxu0 %v2157
    %2306 = vmatprep.subr.mxu0 %v2165
    %2307 = vmatpush1.msra.mxu0 %v2163
    %2308 = vmatprep.subr.mxu0 %v2171
    %2309 = vmatpush1.msra.mxu0 %v2169
    %2310 = vmatprep.subr.mxu0 %v2177
    %2311 = vmatpush1.msra.mxu0 %v2175
    %2312 = vmatprep.subr.mxu0 %v2183
    %2313 = vmatpush1.msra.mxu0 %v2181
    %2314 = vmatprep.subr.mxu0 %v2189
    %2315 = vmatpush1.msra.mxu0 %v2187
    %2316 = vmatprep.subr.mxu0 %v2195
    %2317 = vmatpush1.msra.mxu0 %v2193
    %2318 = vmatprep.subr.mxu0 %v2201
    %2319 = vmatpush1.msra.mxu0 %v2199
    %2320 = vmatprep.subr.mxu0 %v2207
    %2321 = vmatpush1.msra.mxu0 %v2205
    %2322 = vmatprep.subr.mxu0 0.0
    %2323 = vmatpush1.msra.mxu0 0.0
    %2324 = vmatprep.subr.mxu0 0.0
    %2325 = vmatpush1.msra.mxu0 0.0
    %2326 = vmatprep.subr.mxu0 0.0
    %2327 = vmatpush1.msra.mxu0 0.0
    %2328 = vmatprep.subr.mxu0 0.0
    %2329 = vmatpush1.msra.mxu0 0.0
    %2330 = vmatprep.subr.mxu0 0.0
    %2331 = vmatpush1.msra.mxu0 0.0
    %2332 = vmatprep.subr.mxu0 0.0
    %2333 = vmatpush1.msra.mxu0 0.0
    %2334 = vmatprep.mubr.f32.mxu0 %v2235
    %2335 = vmatmul.mubr.f32.gmra.mrb[0].mxu0 %v2209
    %v2336 = vpop.f32.mrb[0].mxu0
    %v2337 = vadd.f32 0.0, %v2336
    %v2338 = vpop.f32.mrb[0].mxu0
    %v2339 = vadd.f32 0.0, %v2338
    %2340 = vmatprep.mubr.f32.mxu0 %v2238
    %2341 = vmatmul.mubr.f32.gmra.mrb[0].mxu0 %v2211
    %v2342 = vpop.f32.mrb[0].mxu0
    %v2343 = vadd.f32 0.0, %v2342
    %v2344 = vpop.f32.mrb[0].mxu0
    %v2345 = vadd.f32 0.0, %v2344
    %2346 = vmatprep.mubr.f32.mxu0 %v2241
    %2347 = vmatmul.mubr.f32.gmra.mrb[0].mxu0 %v2213
    %v2348 = vpop.f32.mrb[0].mxu0
    %v2349 = vadd.f32 0.0, %v2348
    %v2350 = vpop.f32.mrb[0].mxu0
    %v2351 = vadd.f32 0.0, %v2350
    %2352 = vmatprep.mubr.f32.mxu0 %v2244
    %2353 = vmatmul.mubr.f32.gmra.mrb[0].mxu0 %v2215
    %v2354 = vpop.f32.mrb[0].mxu0
    %v2355 = vadd.f32 0.0, %v2354
    %v2356 = vpop.f32.mrb[0].mxu0
    %v2357 = vadd.f32 0.0, %v2356
    %2358 = vmatprep.mubr.f32.mxu0 %v2247
    %2359 = vmatmul.mubr.f32.gmra.mrb[0].mxu0 %v2217
    %v2360 = vpop.f32.mrb[0].mxu0
    %v2361 = vadd.f32 0.0, %v2360
    %v2362 = vpop.f32.mrb[0].mxu0
    %v2363 = vadd.f32 0.0, %v2362
    %2364 = vmatprep.mubr.f32.mxu0 %v2250
    %2365 = vmatmul.mubr.f32.gmra.mrb[0].mxu0 %v2219
    %v2366 = vpop.f32.mrb[0].mxu0
    %v2367 = vadd.f32 0.0, %v2366
    %v2368 = vpop.f32.mrb[0].mxu0
    %v2369 = vadd.f32 0.0, %v2368
    %2370 = vmatprep.mubr.f32.mxu0 %v2253
    %2371 = vmatmul.mubr.f32.gmra.mrb[0].mxu0 %v2221
    %v2372 = vpop.f32.mrb[0].mxu0
    %v2373 = vadd.f32 0.0, %v2372
    %v2374 = vpop.f32.mrb[0].mxu0
    %v2375 = vadd.f32 0.0, %v2374
    %2376 = vmatprep.mubr.f32.mxu0 %v2256
    %2377 = vmatmul.mubr.f32.gmra.mrb[0].mxu0 %v2223
    %v2378 = vpop.f32.mrb[0].mxu0
    %v2379 = vadd.f32 0.0, %v2378
    %v2380 = vpop.f32.mrb[0].mxu0
    %v2381 = vadd.f32 0.0, %v2380
    %2382 = vmatprep.mubr.f32.mxu0 %v2259
    %2383 = vmatmul.mubr.f32.gmra.mrb[0].mxu0 %v2225
    %v2384 = vpop.f32.mrb[0].mxu0
    %v2385 = vadd.f32 0.0, %v2384
    %v2386 = vpop.f32.mrb[0].mxu0
    %v2387 = vadd.f32 0.0, %v2386
    %2388 = vmatprep.mubr.f32.mxu0 %v2262
    %2389 = vmatmul.mubr.f32.gmra.mrb[0].mxu0 %v2227
    %v2390 = vpop.f32.mrb[0].mxu0
    %v2391 = vadd.f32 0.0, %v2390
    %v2392 = vpop.f32.mrb[0].mxu0
    %v2393 = vadd.f32 0.0, %v2392
    %2394 = vmatprep.mubr.f32.mxu0 %v2265
    %2395 = vmatmul.mubr.f32.gmra.mrb[0].mxu0 %v2229
    %v2396 = vpop.f32.mrb[0].mxu0
    %v2397 = vadd.f32 0.0, %v2396
    %v2398 = vpop.f32.mrb[0].mxu0
    %v2399 = vadd.f32 0.0, %v2398
    %2400 = vmatprep.mubr.f32.mxu0 %v2268
    %2401 = vmatmul.mubr.f32.gmra.mrb[0].mxu0 %v2231
    %v2402 = vpop.f32.mrb[0].mxu0
    %v2403 = vadd.f32 0.0, %v2402
    %v2404 = vpop.f32.mrb[0].mxu0
    %v2405 = vadd.f32 0.0, %v2404
    %2406 = vdwg.mxu0
    %v2408 = vlaneseq
    %v2409 = vshrl.u32 %v2408, 7
    %v2410 = vsub.s32 0, %v2409
    %v2411 = vrot.slane %v1882, %v2410
    %v2412 = vlaneseq
    %v2413 = vshrl.u32 %v2412, 7
    %v2414 = vsub.s32 1, %v2413
    %v2415 = vrot.slane %v1882, %v2414
    %v2418 = vadd.f32 %v2411, %v2337
    %v2419 = vadd.f32 %v2415, %v2339
    %v2420 = vadd.f32 %v2411, %v2343
    %v2421 = vadd.f32 %v2415, %v2345
    %v2422 = vadd.f32 %v2411, %v2349
    %v2423 = vadd.f32 %v2415, %v2351
    %v2424 = vadd.f32 %v2411, %v2355
    %v2425 = vadd.f32 %v2415, %v2357
    %v2426 = vadd.f32 %v2411, %v2361
    %v2427 = vadd.f32 %v2415, %v2363
    %v2428 = vadd.f32 %v2411, %v2367
    %v2429 = vadd.f32 %v2415, %v2369
    %v2430 = vadd.f32 %v2411, %v2373
    %v2431 = vadd.f32 %v2415, %v2375
    %v2432 = vadd.f32 %v2411, %v2379
    %v2433 = vadd.f32 %v2415, %v2381
    %v2434 = vadd.f32 %v2411, %v2385
    %v2435 = vadd.f32 %v2415, %v2387
    %v2436 = vadd.f32 %v2411, %v2391
    %v2437 = vadd.f32 %v2415, %v2393
    %v2438 = vadd.f32 %v2411, %v2397
    %v2439 = vadd.f32 %v2415, %v2399
    %v2440 = vadd.f32 %v2411, %v2403
    %v2441 = vadd.f32 %v2415, %v2405
    %s2442 = scalar_lea.vmem %s4, 208
    %v2443 = vld [vmem:[%s2442] sm:$0xff]
    %v2444 = vld [vmem:[%s2442 + $0x8] sm:$0xff]
    %v2445 = vld [vmem:[%s2442 + $0x10] sm:$0xff]
    %v2446 = vld [vmem:[%s2442 + $0x18] sm:$0xff]
    %v2447 = vld [vmem:[%s2442 + $0x20] sm:$0xff]
    %v2448 = vld [vmem:[%s2442 + $0x28] sm:$0xff]
    %v2449 = vld [vmem:[%s2442 + $0x30] sm:$0xff]
    %v2450 = vld [vmem:[%s2442 + $0x38] sm:$0xff]
    %v2451 = vld [vmem:[%s2442 + $0x40] sm:$0xff]
    %v2452 = vld [vmem:[%s2442 + $0x48] sm:$0xff]
    %v2453 = vld [vmem:[%s2442 + $0x50] sm:$0xff]
    %v2454 = vld [vmem:[%s2442 + $0x58] sm:$0xff]
    %v2455 = vld [vmem:[%s2442 + $0x60] sm:$0xff]
    %v2456 = vld [vmem:[%s2442 + $0x68] sm:$0xff]
    %v2457 = vld [vmem:[%s2442 + $0x70] sm:$0xff]
    %v2458 = vld [vmem:[%s2442 + $0x78] sm:$0xff]
    %v2459 = vld [vmem:[%s2442 + $0x80] sm:$0xff]
    %v2460 = vld [vmem:[%s2442 + $0x88] sm:$0xff]
    %v2461 = vld [vmem:[%s2442 + $0x90] sm:$0xff]
    %v2462 = vld [vmem:[%s2442 + $0x98] sm:$0xff]
    %v2463 = vld [vmem:[%s2442 + $0xa0] sm:$0xff]
    %v2464 = vld [vmem:[%s2442 + $0xa8] sm:$0xff]
    %v2465 = vld [vmem:[%s2442 + $0xb0] sm:$0xff]
    %v2466 = vld [vmem:[%s2442 + $0xb8] sm:$0xff]
    %v2467 = vld [vmem:[%s2442 + $0xc0] sm:$0xff]
    %v2468 = vld [vmem:[%s2442 + $0xc8] sm:$0xff]
    %2469 = vmatprep.subr.mxu0 %v2444
    %2470 = vmatpush1.msra.mxu0 %v2443
    %2471 = vmatprep.subr.mxu0 %v2446
    %2472 = vmatpush1.msra.mxu0 %v2445
    %2473 = vmatprep.subr.mxu0 %v2448
    %2474 = vmatpush1.msra.mxu0 %v2447
    %2475 = vmatprep.subr.mxu0 %v2450
    %2476 = vmatpush1.msra.mxu0 %v2449
    %2477 = vmatprep.subr.mxu0 %v2452
    %2478 = vmatpush1.msra.mxu0 %v2451
    %2479 = vmatprep.subr.mxu0 %v2454
    %2480 = vmatpush1.msra.mxu0 %v2453
    %2481 = vmatprep.subr.mxu0 %v2456
    %2482 = vmatpush1.msra.mxu0 %v2455
    %2483 = vmatprep.subr.mxu0 %v2458
    %2484 = vmatpush1.msra.mxu0 %v2457
    %2485 = vmatprep.subr.mxu0 %v2460
    %2486 = vmatpush1.msra.mxu0 %v2459
    %2487 = vmatprep.subr.mxu0 %v2462
    %2488 = vmatpush1.msra.mxu0 %v2461
    %2489 = vmatprep.subr.mxu0 %v2464
    %2490 = vmatpush1.msra.mxu0 %v2463
    %2491 = vmatprep.subr.mxu0 %v2466
    %2492 = vmatpush1.msra.mxu0 %v2465
    %2493 = vmatprep.subr.mxu0 %v2468
    %2494 = vmatpush1.msra.mxu0 %v2467
    %2495 = vmatprep.subr.mxu0 0.0
    %2496 = vmatpush1.msra.mxu0 0.0
    %2497 = vmatprep.subr.mxu0 0.0
    %2498 = vmatpush1.msra.mxu0 0.0
    %2499 = vmatprep.subr.mxu0 0.0
    %2500 = vmatpush1.msra.mxu0 0.0
    %2501 = vmatprep.subr.mxu0 0.0
    %2502 = vmatpush1.msra.mxu0 0.0
    %2503 = vmatprep.subr.mxu0 0.0
    %2504 = vmatpush1.msra.mxu0 0.0
    %2505 = vmatprep.subr.mxu0 0.0
    %2506 = vmatpush1.msra.mxu0 0.0
    %2507 = vmatprep.subr.mxu0 0.0
    %2508 = vmatpush1.msra.mxu0 0.0
    %2509 = vmatprep.subr.mxu0 0.0
    %2510 = vmatpush1.msra.mxu0 0.0
    %2511 = vmatprep.subr.mxu0 0.0
    %2512 = vmatpush1.msra.mxu0 0.0
    %2513 = vmatprep.subr.mxu0 0.0
    %2514 = vmatpush1.msra.mxu0 0.0
    %2515 = vmatprep.subr.mxu0 0.0
    %2516 = vmatpush1.msra.mxu0 0.0
    %2517 = vmatprep.subr.mxu0 0.0
    %2518 = vmatpush1.msra.mxu0 0.0
    %2519 = vmatprep.subr.mxu0 0.0
    %2520 = vmatpush1.msra.mxu0 0.0
    %2521 = vmatprep.subr.mxu0 0.0
    %2522 = vmatpush1.msra.mxu0 0.0
    %2523 = vmatprep.subr.mxu0 0.0
    %2524 = vmatpush1.msra.mxu0 0.0
    %2525 = vmatprep.subr.mxu0 0.0
    %2526 = vmatpush1.msra.mxu0 0.0
    %2527 = vmatprep.subr.mxu0 0.0
    %2528 = vmatpush1.msra.mxu0 0.0
    %2529 = vmatprep.subr.mxu0 0.0
    %2530 = vmatpush1.msra.mxu0 0.0
    %2531 = vmatprep.subr.mxu0 0.0
    %2532 = vmatpush1.msra.mxu0 0.0
    %2533 = vmatprep.mubr.f32.mxu0 0.0
    %2534 = vmatmul.mubr.f32.gmra.mrb[0].mxu0 %v1911
    %v2535 = vpop.f32.mrb[0].mxu0
    %v2536 = vadd.f32 0.0, %v2535
    %v2537 = vpop.f32.mrb[0].mxu0
    %v2538 = vadd.f32 0.0, %v2537
    %2539 = vmatprep.mubr.f32.mxu0 0.0
    %2540 = vmatmul.mubr.f32.gmra.mrb[0].mxu0 %v1914
    %v2541 = vpop.f32.mrb[0].mxu0
    %v2542 = vadd.f32 0.0, %v2541
    %v2543 = vpop.f32.mrb[0].mxu0
    %v2544 = vadd.f32 0.0, %v2543
    %2545 = vmatprep.mubr.f32.mxu0 0.0
    %2546 = vmatmul.mubr.f32.gmra.mrb[0].mxu0 %v1917
    %v2547 = vpop.f32.mrb[0].mxu0
    %v2548 = vadd.f32 0.0, %v2547
    %v2549 = vpop.f32.mrb[0].mxu0
    %v2550 = vadd.f32 0.0, %v2549
    %2551 = vmatprep.mubr.f32.mxu0 0.0
    %2552 = vmatmul.mubr.f32.gmra.mrb[0].mxu0 %v1920
    %v2553 = vpop.f32.mrb[0].mxu0
    %v2554 = vadd.f32 0.0, %v2553
    %v2555 = vpop.f32.mrb[0].mxu0
    %v2556 = vadd.f32 0.0, %v2555
    %2557 = vmatprep.mubr.f32.mxu0 0.0
    %2558 = vmatmul.mubr.f32.gmra.mrb[0].mxu0 %v1923
    %v2559 = vpop.f32.mrb[0].mxu0
    %v2560 = vadd.f32 0.0, %v2559
    %v2561 = vpop.f32.mrb[0].mxu0
    %v2562 = vadd.f32 0.0, %v2561
    %2563 = vmatprep.mubr.f32.mxu0 0.0
    %2564 = vmatmul.mubr.f32.gmra.mrb[0].mxu0 %v1926
    %v2565 = vpop.f32.mrb[0].mxu0
    %v2566 = vadd.f32 0.0, %v2565
    %v2567 = vpop.f32.mrb[0].mxu0
    %v2568 = vadd.f32 0.0, %v2567
    %2569 = vmatprep.mubr.f32.mxu0 0.0
    %2570 = vmatmul.mubr.f32.gmra.mrb[0].mxu0 %v1929
    %v2571 = vpop.f32.mrb[0].mxu0
    %v2572 = vadd.f32 0.0, %v2571
    %v2573 = vpop.f32.mrb[0].mxu0
    %v2574 = vadd.f32 0.0, %v2573
    %2575 = vmatprep.mubr.f32.mxu0 0.0
    %2576 = vmatmul.mubr.f32.gmra.mrb[0].mxu0 %v1932
    %v2577 = vpop.f32.mrb[0].mxu0
    %v2578 = vadd.f32 0.0, %v2577
    %v2579 = vpop.f32.mrb[0].mxu0
    %v2580 = vadd.f32 0.0, %v2579
    %2581 = vmatprep.mubr.f32.mxu0 0.0
    %2582 = vmatmul.mubr.f32.gmra.mrb[0].mxu0 %v1935
    %v2583 = vpop.f32.mrb[0].mxu0
    %v2584 = vadd.f32 0.0, %v2583
    %v2585 = vpop.f32.mrb[0].mxu0
    %v2586 = vadd.f32 0.0, %v2585
    %2587 = vmatprep.mubr.f32.mxu0 0.0
    %2588 = vmatmul.mubr.f32.gmra.mrb[0].mxu0 %v1938
    %v2589 = vpop.f32.mrb[0].mxu0
    %v2590 = vadd.f32 0.0, %v2589
    %v2591 = vpop.f32.mrb[0].mxu0
    %v2592 = vadd.f32 0.0, %v2591
    %2593 = vmatprep.mubr.f32.mxu0 0.0
    %2594 = vmatmul.mubr.f32.gmra.mrb[0].mxu0 %v1941
    %v2595 = vpop.f32.mrb[0].mxu0
    %v2596 = vadd.f32 0.0, %v2595
    %v2597 = vpop.f32.mrb[0].mxu0
    %v2598 = vadd.f32 0.0, %v2597
    %2599 = vmatprep.mubr.f32.mxu0 0.0
    %2600 = vmatmul.mubr.f32.gmra.mrb[0].mxu0 %v1944
    %v2601 = vpop.f32.mrb[0].mxu0
    %v2602 = vadd.f32 0.0, %v2601
    %v2603 = vpop.f32.mrb[0].mxu0
    %v2604 = vadd.f32 0.0, %v2603
    %2605 = vmatprep.mubr.f32.mxu0 0.0
    %2606 = vmatmul.mubr.f32.gmra.mrb[0].mxu0 %v1947
    %v2607 = vpop.f32.mrb[0].mxu0
    %v2608 = vadd.f32 0.0, %v2607
    %v2609 = vpop.f32.mrb[0].mxu0
    %v2610 = vadd.f32 0.0, %v2609
    %2611 = vmatprep.mubr.f32.mxu0 0.0
    %2612 = vmatmul.mubr.f32.gmra.mrb[0].mxu0 %v1950
    %v2613 = vpop.f32.mrb[0].mxu0
    %v2614 = vadd.f32 0.0, %v2613
    %v2615 = vpop.f32.mrb[0].mxu0
    %v2616 = vadd.f32 0.0, %v2615
    %2617 = vmatprep.mubr.f32.mxu0 0.0
    %2618 = vmatmul.mubr.f32.gmra.mrb[0].mxu0 %v1953
    %v2619 = vpop.f32.mrb[0].mxu0
    %v2620 = vadd.f32 0.0, %v2619
    %v2621 = vpop.f32.mrb[0].mxu0
    %v2622 = vadd.f32 0.0, %v2621
    %2623 = vmatprep.mubr.f32.mxu0 0.0
    %2624 = vmatmul.mubr.f32.gmra.mrb[0].mxu0 %v1956
    %v2625 = vpop.f32.mrb[0].mxu0
    %v2626 = vadd.f32 0.0, %v2625
    %v2627 = vpop.f32.mrb[0].mxu0
    %v2628 = vadd.f32 0.0, %v2627
    %2629 = vmatprep.mubr.f32.mxu0 0.0
    %2630 = vmatmul.mubr.f32.gmra.mrb[0].mxu0 %v1959
    %v2631 = vpop.f32.mrb[0].mxu0
    %v2632 = vadd.f32 0.0, %v2631
    %v2633 = vpop.f32.mrb[0].mxu0
    %v2634 = vadd.f32 0.0, %v2633
    %2635 = vmatprep.mubr.f32.mxu0 0.0
    %2636 = vmatmul.mubr.f32.gmra.mrb[0].mxu0 %v1962
    %v2637 = vpop.f32.mrb[0].mxu0
    %v2638 = vadd.f32 0.0, %v2637
    %v2639 = vpop.f32.mrb[0].mxu0
    %v2640 = vadd.f32 0.0, %v2639
    %2641 = vmatprep.mubr.f32.mxu0 0.0
    %2642 = vmatmul.mubr.f32.gmra.mrb[0].mxu0 %v1965
    %v2643 = vpop.f32.mrb[0].mxu0
    %v2644 = vadd.f32 0.0, %v2643
    %v2645 = vpop.f32.mrb[0].mxu0
    %v2646 = vadd.f32 0.0, %v2645
    %2647 = vmatprep.mubr.f32.mxu0 0.0
    %2648 = vmatmul.mubr.f32.gmra.mrb[0].mxu0 %v1968
    %v2649 = vpop.f32.mrb[0].mxu0
    %v2650 = vadd.f32 0.0, %v2649
    %v2651 = vpop.f32.mrb[0].mxu0
    %v2652 = vadd.f32 0.0, %v2651
    %2653 = vmatprep.mubr.f32.mxu0 0.0
    %2654 = vmatmul.mubr.f32.gmra.mrb[0].mxu0 %v1971
    %v2655 = vpop.f32.mrb[0].mxu0
    %v2656 = vadd.f32 0.0, %v2655
    %v2657 = vpop.f32.mrb[0].mxu0
    %v2658 = vadd.f32 0.0, %v2657
    %2659 = vmatprep.mubr.f32.mxu0 0.0
    %2660 = vmatmul.mubr.f32.gmra.mrb[0].mxu0 %v1974
    %v2661 = vpop.f32.mrb[0].mxu0
    %v2662 = vadd.f32 0.0, %v2661
    %v2663 = vpop.f32.mrb[0].mxu0
    %v2664 = vadd.f32 0.0, %v2663
    %2665 = vmatprep.mubr.f32.mxu0 0.0
    %2666 = vmatmul.mubr.f32.gmra.mrb[0].mxu0 %v1977
    %v2667 = vpop.f32.mrb[0].mxu0
    %v2668 = vadd.f32 0.0, %v2667
    %v2669 = vpop.f32.mrb[0].mxu0
    %v2670 = vadd.f32 0.0, %v2669
    %2671 = vmatprep.mubr.f32.mxu0 0.0
    %2672 = vmatmul.mubr.f32.gmra.mrb[0].mxu0 %v1980
    %v2673 = vpop.f32.mrb[0].mxu0
    %v2674 = vadd.f32 0.0, %v2673
    %v2675 = vpop.f32.mrb[0].mxu0
    %v2676 = vadd.f32 0.0, %v2675
    %2677 = vmatprep.mubr.f32.mxu0 0.0
    %2678 = vmatmul.mubr.f32.gmra.mrb[0].mxu0 %v1983
    %v2679 = vpop.f32.mrb[0].mxu0
    %v2680 = vadd.f32 0.0, %v2679
    %v2681 = vpop.f32.mrb[0].mxu0
    %v2682 = vadd.f32 0.0, %v2681
    %2683 = vmatprep.mubr.f32.mxu0 0.0
    %2684 = vmatmul.mubr.f32.gmra.mrb[0].mxu0 %v1986
    %v2685 = vpop.f32.mrb[0].mxu0
    %v2686 = vadd.f32 0.0, %v2685
    %v2687 = vpop.f32.mrb[0].mxu0
    %v2688 = vadd.f32 0.0, %v2687
    %2689 = vdwg.mxu0
    %s2690 = scalar_lea.vmem [#allocation2], 192
    %v2691 = vld [vmem:[%s2690] sm:$0xff]
    %v2692 = vld [vmem:[%s2690 + $0x8] sm:$0xff]
    %v2693 = vld [vmem:[%s2690 + $0x10] sm:$0xff]
    %v2694 = vld [vmem:[%s2690 + $0x18] sm:$0xff]
    %v2695 = vld [vmem:[%s2690 + $0x20] sm:$0xff]
    %v2696 = vld [vmem:[%s2690 + $0x28] sm:$0xff]
    %v2697 = vld [vmem:[%s2690 + $0x30] sm:$0xff]
    %v2698 = vld [vmem:[%s2690 + $0x38] sm:$0xff]
    %v2699 = vld [vmem:[%s2690 + $0x40] sm:$0xff]
    %v2700 = vld [vmem:[%s2690 + $0x48] sm:$0xff]
    %v2701 = vld [vmem:[%s2690 + $0x50] sm:$0xff]
    %v2702 = vld [vmem:[%s2690 + $0x58] sm:$0xff]
    %v2703 = vld [vmem:[%s2690 + $0x60] sm:$0xff]
    %v2704 = vld [vmem:[%s2690 + $0x68] sm:$0xff]
    %v2705 = vld [vmem:[%s2690 + $0x70] sm:$0xff]
    %v2706 = vld [vmem:[%s2690 + $0x78] sm:$0xff]
    %v2707 = vld [vmem:[%s2690 + $0x80] sm:$0xff]
    %v2708 = vld [vmem:[%s2690 + $0x88] sm:$0xff]
    %v2709 = vld [vmem:[%s2690 + $0x90] sm:$0xff]
    %v2710 = vld [vmem:[%s2690 + $0x98] sm:$0xff]
    %v2711 = vld [vmem:[%s2690 + $0xa0] sm:$0xff]
    %v2712 = vld [vmem:[%s2690 + $0xa8] sm:$0xff]
    %v2713 = vld [vmem:[%s2690 + $0xb0] sm:$0xff]
    %v2714 = vld [vmem:[%s2690 + $0xb8] sm:$0xff]
    %v2716 = vsel %vm2233, %v2692, 0
    %v2719 = vsel %vm2233, %v2694, 0
    %v2722 = vsel %vm2233, %v2696, 0
    %v2725 = vsel %vm2233, %v2698, 0
    %v2728 = vsel %vm2233, %v2700, 0
    %v2731 = vsel %vm2233, %v2702, 0
    %v2734 = vsel %vm2233, %v2704, 0
    %v2737 = vsel %vm2233, %v2706, 0
    %v2740 = vsel %vm2233, %v2708, 0
    %v2743 = vsel %vm2233, %v2710, 0
    %v2746 = vsel %vm2233, %v2712, 0
    %v2749 = vsel %vm2233, %v2714, 0
    %2751 = vmatprep.subr.mxu0 %v2538
    %2752 = vmatpush1.msra.mxu0 %v2536
    %2753 = vmatprep.subr.mxu0 %v2544
    %2754 = vmatpush1.msra.mxu0 %v2542
    %2755 = vmatprep.subr.mxu0 %v2550
    %2756 = vmatpush1.msra.mxu0 %v2548
    %2757 = vmatprep.subr.mxu0 %v2556
    %2758 = vmatpush1.msra.mxu0 %v2554
    %2759 = vmatprep.subr.mxu0 %v2562
    %2760 = vmatpush1.msra.mxu0 %v2560
    %2761 = vmatprep.subr.mxu0 %v2568
    %2762 = vmatpush1.msra.mxu0 %v2566
    %2763 = vmatprep.subr.mxu0 %v2574
    %2764 = vmatpush1.msra.mxu0 %v2572
    %2765 = vmatprep.subr.mxu0 %v2580
    %2766 = vmatpush1.msra.mxu0 %v2578
    %2767 = vmatprep.subr.mxu0 %v2586
    %2768 = vmatpush1.msra.mxu0 %v2584
    %2769 = vmatprep.subr.mxu0 %v2592
    %2770 = vmatpush1.msra.mxu0 %v2590
    %2771 = vmatprep.subr.mxu0 %v2598
    %2772 = vmatpush1.msra.mxu0 %v2596
    %2773 = vmatprep.subr.mxu0 %v2604
    %2774 = vmatpush1.msra.mxu0 %v2602
    %2775 = vmatprep.subr.mxu0 %v2610
    %2776 = vmatpush1.msra.mxu0 %v2608
    %2777 = vmatprep.subr.mxu0 %v2616
    %2778 = vmatpush1.msra.mxu0 %v2614
    %2779 = vmatprep.subr.mxu0 %v2622
    %2780 = vmatpush1.msra.mxu0 %v2620
    %2781 = vmatprep.subr.mxu0 %v2628
    %2782 = vmatpush1.msra.mxu0 %v2626
    %2783 = vmatprep.subr.mxu0 %v2634
    %2784 = vmatpush1.msra.mxu0 %v2632
    %2785 = vmatprep.subr.mxu0 %v2640
    %2786 = vmatpush1.msra.mxu0 %v2638
    %2787 = vmatprep.subr.mxu0 %v2646
    %2788 = vmatpush1.msra.mxu0 %v2644
    %2789 = vmatprep.subr.mxu0 %v2652
    %2790 = vmatpush1.msra.mxu0 %v2650
    %2791 = vmatprep.subr.mxu0 %v2658
    %2792 = vmatpush1.msra.mxu0 %v2656
    %2793 = vmatprep.subr.mxu0 %v2664
    %2794 = vmatpush1.msra.mxu0 %v2662
    %2795 = vmatprep.subr.mxu0 %v2670
    %2796 = vmatpush1.msra.mxu0 %v2668
    %2797 = vmatprep.subr.mxu0 %v2676
    %2798 = vmatpush1.msra.mxu0 %v2674
    %2799 = vmatprep.subr.mxu0 %v2682
    %2800 = vmatpush1.msra.mxu0 %v2680
    %2801 = vmatprep.subr.mxu0 %v2688
    %2802 = vmatpush1.msra.mxu0 %v2686
    %2803 = vmatprep.subr.mxu0 0.0
    %2804 = vmatpush1.msra.mxu0 0.0
    %2805 = vmatprep.subr.mxu0 0.0
    %2806 = vmatpush1.msra.mxu0 0.0
    %2807 = vmatprep.subr.mxu0 0.0
    %2808 = vmatpush1.msra.mxu0 0.0
    %2809 = vmatprep.subr.mxu0 0.0
    %2810 = vmatpush1.msra.mxu0 0.0
    %2811 = vmatprep.subr.mxu0 0.0
    %2812 = vmatpush1.msra.mxu0 0.0
    %2813 = vmatprep.subr.mxu0 0.0
    %2814 = vmatpush1.msra.mxu0 0.0
    %2815 = vmatprep.mubr.f32.mxu0 %v2716
    %2816 = vmatmul.mubr.f32.gmra.mrb[0].mxu0 %v2691
    %v2817 = vpop.f32.mrb[0].mxu0
    %v2818 = vadd.f32 0.0, %v2817
    %v2819 = vpop.f32.mrb[0].mxu0
    %v2820 = vadd.f32 0.0, %v2819
    %2821 = vmatprep.mubr.f32.mxu0 %v2719
    %2822 = vmatmul.mubr.f32.gmra.mrb[0].mxu0 %v2693
    %v2823 = vpop.f32.mrb[0].mxu0
    %v2824 = vadd.f32 0.0, %v2823
    %v2825 = vpop.f32.mrb[0].mxu0
    %v2826 = vadd.f32 0.0, %v2825
    %2827 = vmatprep.mubr.f32.mxu0 %v2722
    %2828 = vmatmul.mubr.f32.gmra.mrb[0].mxu0 %v2695
    %v2829 = vpop.f32.mrb[0].mxu0
    %v2830 = vadd.f32 0.0, %v2829
    %v2831 = vpop.f32.mrb[0].mxu0
    %v2832 = vadd.f32 0.0, %v2831
    %2833 = vmatprep.mubr.f32.mxu0 %v2725
    %2834 = vmatmul.mubr.f32.gmra.mrb[0].mxu0 %v2697
    %v2835 = vpop.f32.mrb[0].mxu0
    %v2836 = vadd.f32 0.0, %v2835
    %v2837 = vpop.f32.mrb[0].mxu0
    %v2838 = vadd.f32 0.0, %v2837
    %2839 = vmatprep.mubr.f32.mxu0 %v2728
    %2840 = vmatmul.mubr.f32.gmra.mrb[0].mxu0 %v2699
    %v2841 = vpop.f32.mrb[0].mxu0
    %v2842 = vadd.f32 0.0, %v2841
    %v2843 = vpop.f32.mrb[0].mxu0
    %v2844 = vadd.f32 0.0, %v2843
    %2845 = vmatprep.mubr.f32.mxu0 %v2731
    %2846 = vmatmul.mubr.f32.gmra.mrb[0].mxu0 %v2701
    %v2847 = vpop.f32.mrb[0].mxu0
    %v2848 = vadd.f32 0.0, %v2847
    %v2849 = vpop.f32.mrb[0].mxu0
    %v2850 = vadd.f32 0.0, %v2849
    %2851 = vmatprep.mubr.f32.mxu0 %v2734
    %2852 = vmatmul.mubr.f32.gmra.mrb[0].mxu0 %v2703
    %v2853 = vpop.f32.mrb[0].mxu0
    %v2854 = vadd.f32 0.0, %v2853
    %v2855 = vpop.f32.mrb[0].mxu0
    %v2856 = vadd.f32 0.0, %v2855
    %2857 = vmatprep.mubr.f32.mxu0 %v2737
    %2858 = vmatmul.mubr.f32.gmra.mrb[0].mxu0 %v2705
    %v2859 = vpop.f32.mrb[0].mxu0
    %v2860 = vadd.f32 0.0, %v2859
    %v2861 = vpop.f32.mrb[0].mxu0
    %v2862 = vadd.f32 0.0, %v2861
    %2863 = vmatprep.mubr.f32.mxu0 %v2740
    %2864 = vmatmul.mubr.f32.gmra.mrb[0].mxu0 %v2707
    %v2865 = vpop.f32.mrb[0].mxu0
    %v2866 = vadd.f32 0.0, %v2865
    %v2867 = vpop.f32.mrb[0].mxu0
    %v2868 = vadd.f32 0.0, %v2867
    %2869 = vmatprep.mubr.f32.mxu0 %v2743
    %2870 = vmatmul.mubr.f32.gmra.mrb[0].mxu0 %v2709
    %v2871 = vpop.f32.mrb[0].mxu0
    %v2872 = vadd.f32 0.0, %v2871
    %v2873 = vpop.f32.mrb[0].mxu0
    %v2874 = vadd.f32 0.0, %v2873
    %2875 = vmatprep.mubr.f32.mxu0 %v2746
    %2876 = vmatmul.mubr.f32.gmra.mrb[0].mxu0 %v2711
    %v2877 = vpop.f32.mrb[0].mxu0
    %v2878 = vadd.f32 0.0, %v2877
    %v2879 = vpop.f32.mrb[0].mxu0
    %v2880 = vadd.f32 0.0, %v2879
    %2881 = vmatprep.mubr.f32.mxu0 %v2749
    %2882 = vmatmul.mubr.f32.gmra.mrb[0].mxu0 %v2713
    %v2883 = vpop.f32.mrb[0].mxu0
    %v2884 = vadd.f32 0.0, %v2883
    %v2885 = vpop.f32.mrb[0].mxu0
    %v2886 = vadd.f32 0.0, %v2885
    %2887 = vdwg.mxu0
    %v2888 = vadd.f32 %v2418, %v2818
    %v2889 = vadd.f32 %v2419, %v2820
    %v2890 = vadd.f32 %v2420, %v2824
    %v2891 = vadd.f32 %v2421, %v2826
    %v2892 = vadd.f32 %v2422, %v2830
    %v2893 = vadd.f32 %v2423, %v2832
    %v2894 = vadd.f32 %v2424, %v2836
    %v2895 = vadd.f32 %v2425, %v2838
    %v2896 = vadd.f32 %v2426, %v2842
    %v2897 = vadd.f32 %v2427, %v2844
    %v2898 = vadd.f32 %v2428, %v2848
    %v2899 = vadd.f32 %v2429, %v2850
    %v2900 = vadd.f32 %v2430, %v2854
    %v2901 = vadd.f32 %v2431, %v2856
    %v2902 = vadd.f32 %v2432, %v2860
    %v2903 = vadd.f32 %v2433, %v2862
    %v2904 = vadd.f32 %v2434, %v2866
    %v2905 = vadd.f32 %v2435, %v2868
    %v2906 = vadd.f32 %v2436, %v2872
    %v2907 = vadd.f32 %v2437, %v2874
    %v2908 = vadd.f32 %v2438, %v2878
    %v2909 = vadd.f32 %v2439, %v2880
    %v2910 = vadd.f32 %v2440, %v2884
    %v2911 = vadd.f32 %v2441, %v2886
    %s2912 = scalar_lea.vmem %s4, 416
    %v2913 = vld [vmem:[%s2912] sm:$0xff]
    %v2914 = vld [vmem:[%s2912 + $0x8] sm:$0xff]
    %v2915 = vld [vmem:[%s2912 + $0x10] sm:$0xff]
    %v2916 = vld [vmem:[%s2912 + $0x18] sm:$0xff]
    %v2917 = vld [vmem:[%s2912 + $0x20] sm:$0xff]
    %v2918 = vld [vmem:[%s2912 + $0x28] sm:$0xff]
    %v2919 = vld [vmem:[%s2912 + $0x30] sm:$0xff]
    %v2920 = vld [vmem:[%s2912 + $0x38] sm:$0xff]
    %v2921 = vld [vmem:[%s2912 + $0x40] sm:$0xff]
    %v2922 = vld [vmem:[%s2912 + $0x48] sm:$0xff]
    %v2923 = vld [vmem:[%s2912 + $0x50] sm:$0xff]
    %v2924 = vld [vmem:[%s2912 + $0x58] sm:$0xff]
    %v2925 = vld [vmem:[%s2912 + $0x60] sm:$0xff]
    %v2926 = vld [vmem:[%s2912 + $0x68] sm:$0xff]
    %v2927 = vld [vmem:[%s2912 + $0x70] sm:$0xff]
    %v2928 = vld [vmem:[%s2912 + $0x78] sm:$0xff]
    %v2929 = vld [vmem:[%s2912 + $0x80] sm:$0xff]
    %v2930 = vld [vmem:[%s2912 + $0x88] sm:$0xff]
    %v2931 = vld [vmem:[%s2912 + $0x90] sm:$0xff]
    %v2932 = vld [vmem:[%s2912 + $0x98] sm:$0xff]
    %v2933 = vld [vmem:[%s2912 + $0xa0] sm:$0xff]
    %v2934 = vld [vmem:[%s2912 + $0xa8] sm:$0xff]
    %v2935 = vld [vmem:[%s2912 + $0xb0] sm:$0xff]
    %v2936 = vld [vmem:[%s2912 + $0xb8] sm:$0xff]
    %v2937 = vld [vmem:[%s2912 + $0xc0] sm:$0xff]
    %v2938 = vld [vmem:[%s2912 + $0xc8] sm:$0xff]
    %2939 = vmatprep.subr.mxu0 %v2914
    %2940 = vmatpush1.msra.mxu0 %v2913
    %2941 = vmatprep.subr.mxu0 %v2916
    %2942 = vmatpush1.msra.mxu0 %v2915
    %2943 = vmatprep.subr.mxu0 %v2918
    %2944 = vmatpush1.msra.mxu0 %v2917
    %2945 = vmatprep.subr.mxu0 %v2920
    %2946 = vmatpush1.msra.mxu0 %v2919
    %2947 = vmatprep.subr.mxu0 %v2922
    %2948 = vmatpush1.msra.mxu0 %v2921
    %2949 = vmatprep.subr.mxu0 %v2924
    %2950 = vmatpush1.msra.mxu0 %v2923
    %2951 = vmatprep.subr.mxu0 %v2926
    %2952 = vmatpush1.msra.mxu0 %v2925
    %2953 = vmatprep.subr.mxu0 %v2928
    %2954 = vmatpush1.msra.mxu0 %v2927
    %2955 = vmatprep.subr.mxu0 %v2930
    %2956 = vmatpush1.msra.mxu0 %v2929
    %2957 = vmatprep.subr.mxu0 %v2932
    %2958 = vmatpush1.msra.mxu0 %v2931
    %2959 = vmatprep.subr.mxu0 %v2934
    %2960 = vmatpush1.msra.mxu0 %v2933
    %2961 = vmatprep.subr.mxu0 %v2936
    %2962 = vmatpush1.msra.mxu0 %v2935
    %2963 = vmatprep.subr.mxu0 %v2938
    %2964 = vmatpush1.msra.mxu0 %v2937
    %2965 = vmatprep.subr.mxu0 0.0
    %2966 = vmatpush1.msra.mxu0 0.0
    %2967 = vmatprep.subr.mxu0 0.0
    %2968 = vmatpush1.msra.mxu0 0.0
    %2969 = vmatprep.subr.mxu0 0.0
    %2970 = vmatpush1.msra.mxu0 0.0
    %2971 = vmatprep.subr.mxu0 0.0
    %2972 = vmatpush1.msra.mxu0 0.0
    %2973 = vmatprep.subr.mxu0 0.0
    %2974 = vmatpush1.msra.mxu0 0.0
    %2975 = vmatprep.subr.mxu0 0.0
    %2976 = vmatpush1.msra.mxu0 0.0
    %2977 = vmatprep.subr.mxu0 0.0
    %2978 = vmatpush1.msra.mxu0 0.0
    %2979 = vmatprep.subr.mxu0 0.0
    %2980 = vmatpush1.msra.mxu0 0.0
    %2981 = vmatprep.subr.mxu0 0.0
    %2982 = vmatpush1.msra.mxu0 0.0
    %2983 = vmatprep.subr.mxu0 0.0
    %2984 = vmatpush1.msra.mxu0 0.0
    %2985 = vmatprep.subr.mxu0 0.0
    %2986 = vmatpush1.msra.mxu0 0.0
    %2987 = vmatprep.subr.mxu0 0.0
    %2988 = vmatpush1.msra.mxu0 0.0
    %2989 = vmatprep.subr.mxu0 0.0
    %2990 = vmatpush1.msra.mxu0 0.0
    %2991 = vmatprep.subr.mxu0 0.0
    %2992 = vmatpush1.msra.mxu0 0.0
    %2993 = vmatprep.subr.mxu0 0.0
    %2994 = vmatpush1.msra.mxu0 0.0
    %2995 = vmatprep.subr.mxu0 0.0
    %2996 = vmatpush1.msra.mxu0 0.0
    %2997 = vmatprep.subr.mxu0 0.0
    %2998 = vmatpush1.msra.mxu0 0.0
    %2999 = vmatprep.subr.mxu0 0.0
    %3000 = vmatpush1.msra.mxu0 0.0
    %3001 = vmatprep.subr.mxu0 0.0
    %3002 = vmatpush1.msra.mxu0 0.0
    %3003 = vmatprep.mubr.f32.mxu0 0.0
    %3004 = vmatmul.mubr.f32.gmra.mrb[0].mxu0 %v1911
    %v3005 = vpop.f32.mrb[0].mxu0
    %v3006 = vadd.f32 0.0, %v3005
    %v3007 = vpop.f32.mrb[0].mxu0
    %v3008 = vadd.f32 0.0, %v3007
    %3009 = vmatprep.mubr.f32.mxu0 0.0
    %3010 = vmatmul.mubr.f32.gmra.mrb[0].mxu0 %v1914
    %v3011 = vpop.f32.mrb[0].mxu0
    %v3012 = vadd.f32 0.0, %v3011
    %v3013 = vpop.f32.mrb[0].mxu0
    %v3014 = vadd.f32 0.0, %v3013
    %3015 = vmatprep.mubr.f32.mxu0 0.0
    %3016 = vmatmul.mubr.f32.gmra.mrb[0].mxu0 %v1917
    %v3017 = vpop.f32.mrb[0].mxu0
    %v3018 = vadd.f32 0.0, %v3017
    %v3019 = vpop.f32.mrb[0].mxu0
    %v3020 = vadd.f32 0.0, %v3019
    %3021 = vmatprep.mubr.f32.mxu0 0.0
    %3022 = vmatmul.mubr.f32.gmra.mrb[0].mxu0 %v1920
    %v3023 = vpop.f32.mrb[0].mxu0
    %v3024 = vadd.f32 0.0, %v3023
    %v3025 = vpop.f32.mrb[0].mxu0
    %v3026 = vadd.f32 0.0, %v3025
    %3027 = vmatprep.mubr.f32.mxu0 0.0
    %3028 = vmatmul.mubr.f32.gmra.mrb[0].mxu0 %v1923
    %v3029 = vpop.f32.mrb[0].mxu0
    %v3030 = vadd.f32 0.0, %v3029
    %v3031 = vpop.f32.mrb[0].mxu0
    %v3032 = vadd.f32 0.0, %v3031
    %3033 = vmatprep.mubr.f32.mxu0 0.0
    %3034 = vmatmul.mubr.f32.gmra.mrb[0].mxu0 %v1926
    %v3035 = vpop.f32.mrb[0].mxu0
    %v3036 = vadd.f32 0.0, %v3035
    %v3037 = vpop.f32.mrb[0].mxu0
    %v3038 = vadd.f32 0.0, %v3037
    %3039 = vmatprep.mubr.f32.mxu0 0.0
    %3040 = vmatmul.mubr.f32.gmra.mrb[0].mxu0 %v1929
    %v3041 = vpop.f32.mrb[0].mxu0
    %v3042 = vadd.f32 0.0, %v3041
    %v3043 = vpop.f32.mrb[0].mxu0
    %v3044 = vadd.f32 0.0, %v3043
    %3045 = vmatprep.mubr.f32.mxu0 0.0
    %3046 = vmatmul.mubr.f32.gmra.mrb[0].mxu0 %v1932
    %v3047 = vpop.f32.mrb[0].mxu0
    %v3048 = vadd.f32 0.0, %v3047
    %v3049 = vpop.f32.mrb[0].mxu0
    %v3050 = vadd.f32 0.0, %v3049
    %3051 = vmatprep.mubr.f32.mxu0 0.0
    %3052 = vmatmul.mubr.f32.gmra.mrb[0].mxu0 %v1935
    %v3053 = vpop.f32.mrb[0].mxu0
    %v3054 = vadd.f32 0.0, %v3053
    %v3055 = vpop.f32.mrb[0].mxu0
    %v3056 = vadd.f32 0.0, %v3055
    %3057 = vmatprep.mubr.f32.mxu0 0.0
    %3058 = vmatmul.mubr.f32.gmra.mrb[0].mxu0 %v1938
    %v3059 = vpop.f32.mrb[0].mxu0
    %v3060 = vadd.f32 0.0, %v3059
    %v3061 = vpop.f32.mrb[0].mxu0
    %v3062 = vadd.f32 0.0, %v3061
    %3063 = vmatprep.mubr.f32.mxu0 0.0
    %3064 = vmatmul.mubr.f32.gmra.mrb[0].mxu0 %v1941
    %v3065 = vpop.f32.mrb[0].mxu0
    %v3066 = vadd.f32 0.0, %v3065
    %v3067 = vpop.f32.mrb[0].mxu0
    %v3068 = vadd.f32 0.0, %v3067
    %3069 = vmatprep.mubr.f32.mxu0 0.0
    %3070 = vmatmul.mubr.f32.gmra.mrb[0].mxu0 %v1944
    %v3071 = vpop.f32.mrb[0].mxu0
    %v3072 = vadd.f32 0.0, %v3071
    %v3073 = vpop.f32.mrb[0].mxu0
    %v3074 = vadd.f32 0.0, %v3073
    %3075 = vmatprep.mubr.f32.mxu0 0.0
    %3076 = vmatmul.mubr.f32.gmra.mrb[0].mxu0 %v1947
    %v3077 = vpop.f32.mrb[0].mxu0
    %v3078 = vadd.f32 0.0, %v3077
    %v3079 = vpop.f32.mrb[0].mxu0
    %v3080 = vadd.f32 0.0, %v3079
    %3081 = vmatprep.mubr.f32.mxu0 0.0
    %3082 = vmatmul.mubr.f32.gmra.mrb[0].mxu0 %v1950
    %v3083 = vpop.f32.mrb[0].mxu0
    %v3084 = vadd.f32 0.0, %v3083
    %v3085 = vpop.f32.mrb[0].mxu0
    %v3086 = vadd.f32 0.0, %v3085
    %3087 = vmatprep.mubr.f32.mxu0 0.0
    %3088 = vmatmul.mubr.f32.gmra.mrb[0].mxu0 %v1953
    %v3089 = vpop.f32.mrb[0].mxu0
    %v3090 = vadd.f32 0.0, %v3089
    %v3091 = vpop.f32.mrb[0].mxu0
    %v3092 = vadd.f32 0.0, %v3091
    %3093 = vmatprep.mubr.f32.mxu0 0.0
    %3094 = vmatmul.mubr.f32.gmra.mrb[0].mxu0 %v1956
    %v3095 = vpop.f32.mrb[0].mxu0
    %v3096 = vadd.f32 0.0, %v3095
    %v3097 = vpop.f32.mrb[0].mxu0
    %v3098 = vadd.f32 0.0, %v3097
    %3099 = vmatprep.mubr.f32.mxu0 0.0
    %3100 = vmatmul.mubr.f32.gmra.mrb[0].mxu0 %v1959
    %v3101 = vpop.f32.mrb[0].mxu0
    %v3102 = vadd.f32 0.0, %v3101
    %v3103 = vpop.f32.mrb[0].mxu0
    %v3104 = vadd.f32 0.0, %v3103
    %3105 = vmatprep.mubr.f32.mxu0 0.0
    %3106 = vmatmul.mubr.f32.gmra.mrb[0].mxu0 %v1962
    %v3107 = vpop.f32.mrb[0].mxu0
    %v3108 = vadd.f32 0.0, %v3107
    %v3109 = vpop.f32.mrb[0].mxu0
    %v3110 = vadd.f32 0.0, %v3109
    %3111 = vmatprep.mubr.f32.mxu0 0.0
    %3112 = vmatmul.mubr.f32.gmra.mrb[0].mxu0 %v1965
    %v3113 = vpop.f32.mrb[0].mxu0
    %v3114 = vadd.f32 0.0, %v3113
    %v3115 = vpop.f32.mrb[0].mxu0
    %v3116 = vadd.f32 0.0, %v3115
    %3117 = vmatprep.mubr.f32.mxu0 0.0
    %3118 = vmatmul.mubr.f32.gmra.mrb[0].mxu0 %v1968
    %v3119 = vpop.f32.mrb[0].mxu0
    %v3120 = vadd.f32 0.0, %v3119
    %v3121 = vpop.f32.mrb[0].mxu0
    %v3122 = vadd.f32 0.0, %v3121
    %3123 = vmatprep.mubr.f32.mxu0 0.0
    %3124 = vmatmul.mubr.f32.gmra.mrb[0].mxu0 %v1971
    %v3125 = vpop.f32.mrb[0].mxu0
    %v3126 = vadd.f32 0.0, %v3125
    %v3127 = vpop.f32.mrb[0].mxu0
    %v3128 = vadd.f32 0.0, %v3127
    %3129 = vmatprep.mubr.f32.mxu0 0.0
    %3130 = vmatmul.mubr.f32.gmra.mrb[0].mxu0 %v1974
    %v3131 = vpop.f32.mrb[0].mxu0
    %v3132 = vadd.f32 0.0, %v3131
    %v3133 = vpop.f32.mrb[0].mxu0
    %v3134 = vadd.f32 0.0, %v3133
    %3135 = vmatprep.mubr.f32.mxu0 0.0
    %3136 = vmatmul.mubr.f32.gmra.mrb[0].mxu0 %v1977
    %v3137 = vpop.f32.mrb[0].mxu0
    %v3138 = vadd.f32 0.0, %v3137
    %v3139 = vpop.f32.mrb[0].mxu0
    %v3140 = vadd.f32 0.0, %v3139
    %3141 = vmatprep.mubr.f32.mxu0 0.0
    %3142 = vmatmul.mubr.f32.gmra.mrb[0].mxu0 %v1980
    %v3143 = vpop.f32.mrb[0].mxu0
    %v3144 = vadd.f32 0.0, %v3143
    %v3145 = vpop.f32.mrb[0].mxu0
    %v3146 = vadd.f32 0.0, %v3145
    %3147 = vmatprep.mubr.f32.mxu0 0.0
    %3148 = vmatmul.mubr.f32.gmra.mrb[0].mxu0 %v1983
    %v3149 = vpop.f32.mrb[0].mxu0
    %v3150 = vadd.f32 0.0, %v3149
    %v3151 = vpop.f32.mrb[0].mxu0
    %v3152 = vadd.f32 0.0, %v3151
    %3153 = vmatprep.mubr.f32.mxu0 0.0
    %3154 = vmatmul.mubr.f32.gmra.mrb[0].mxu0 %v1986
    %v3155 = vpop.f32.mrb[0].mxu0
    %v3156 = vadd.f32 0.0, %v3155
    %v3157 = vpop.f32.mrb[0].mxu0
    %v3158 = vadd.f32 0.0, %v3157
    %3159 = vdwg.mxu0
    %s3160 = scalar_lea.vmem [#allocation2], 384
    %v3161 = vld [vmem:[%s3160] sm:$0xff]
    %v3162 = vld [vmem:[%s3160 + $0x8] sm:$0xff]
    %v3163 = vld [vmem:[%s3160 + $0x10] sm:$0xff]
    %v3164 = vld [vmem:[%s3160 + $0x18] sm:$0xff]
    %v3165 = vld [vmem:[%s3160 + $0x20] sm:$0xff]
    %v3166 = vld [vmem:[%s3160 + $0x28] sm:$0xff]
    %v3167 = vld [vmem:[%s3160 + $0x30] sm:$0xff]
    %v3168 = vld [vmem:[%s3160 + $0x38] sm:$0xff]
    %v3169 = vld [vmem:[%s3160 + $0x40] sm:$0xff]
    %v3170 = vld [vmem:[%s3160 + $0x48] sm:$0xff]
    %v3171 = vld [vmem:[%s3160 + $0x50] sm:$0xff]
    %v3172 = vld [vmem:[%s3160 + $0x58] sm:$0xff]
    %v3173 = vld [vmem:[%s3160 + $0x60] sm:$0xff]
    %v3174 = vld [vmem:[%s3160 + $0x68] sm:$0xff]
    %v3175 = vld [vmem:[%s3160 + $0x70] sm:$0xff]
    %v3176 = vld [vmem:[%s3160 + $0x78] sm:$0xff]
    %v3177 = vld [vmem:[%s3160 + $0x80] sm:$0xff]
    %v3178 = vld [vmem:[%s3160 + $0x88] sm:$0xff]
    %v3179 = vld [vmem:[%s3160 + $0x90] sm:$0xff]
    %v3180 = vld [vmem:[%s3160 + $0x98] sm:$0xff]
    %v3181 = vld [vmem:[%s3160 + $0xa0] sm:$0xff]
    %v3182 = vld [vmem:[%s3160 + $0xa8] sm:$0xff]
    %v3183 = vld [vmem:[%s3160 + $0xb0] sm:$0xff]
    %v3184 = vld [vmem:[%s3160 + $0xb8] sm:$0xff]
    %v3186 = vsel %vm2233, %v3162, 0
    %v3189 = vsel %vm2233, %v3164, 0
    %v3192 = vsel %vm2233, %v3166, 0
    %v3195 = vsel %vm2233, %v3168, 0
    %v3198 = vsel %vm2233, %v3170, 0
    %v3201 = vsel %vm2233, %v3172, 0
    %v3204 = vsel %vm2233, %v3174, 0
    %v3207 = vsel %vm2233, %v3176, 0
    %v3210 = vsel %vm2233, %v3178, 0
    %v3213 = vsel %vm2233, %v3180, 0
    %v3216 = vsel %vm2233, %v3182, 0
    %v3219 = vsel %vm2233, %v3184, 0
    %3221 = vmatprep.subr.mxu0 %v3008
    %3222 = vmatpush1.msra.mxu0 %v3006
    %3223 = vmatprep.subr.mxu0 %v3014
    %3224 = vmatpush1.msra.mxu0 %v3012
    %3225 = vmatprep.subr.mxu0 %v3020
    %3226 = vmatpush1.msra.mxu0 %v3018
    %3227 = vmatprep.subr.mxu0 %v3026
    %3228 = vmatpush1.msra.mxu0 %v3024
    %3229 = vmatprep.subr.mxu0 %v3032
    %3230 = vmatpush1.msra.mxu0 %v3030
    %3231 = vmatprep.subr.mxu0 %v3038
    %3232 = vmatpush1.msra.mxu0 %v3036
    %3233 = vmatprep.subr.mxu0 %v3044
    %3234 = vmatpush1.msra.mxu0 %v3042
    %3235 = vmatprep.subr.mxu0 %v3050
    %3236 = vmatpush1.msra.mxu0 %v3048
    %3237 = vmatprep.subr.mxu0 %v3056
    %3238 = vmatpush1.msra.mxu0 %v3054
    %3239 = vmatprep.subr.mxu0 %v3062
    %3240 = vmatpush1.msra.mxu0 %v3060
    %3241 = vmatprep.subr.mxu0 %v3068
    %3242 = vmatpush1.msra.mxu0 %v3066
    %3243 = vmatprep.subr.mxu0 %v3074
    %3244 = vmatpush1.msra.mxu0 %v3072
    %3245 = vmatprep.subr.mxu0 %v3080
    %3246 = vmatpush1.msra.mxu0 %v3078
    %3247 = vmatprep.subr.mxu0 %v3086
    %3248 = vmatpush1.msra.mxu0 %v3084
    %3249 = vmatprep.subr.mxu0 %v3092
    %3250 = vmatpush1.msra.mxu0 %v3090
    %3251 = vmatprep.subr.mxu0 %v3098
    %3252 = vmatpush1.msra.mxu0 %v3096
    %3253 = vmatprep.subr.mxu0 %v3104
    %3254 = vmatpush1.msra.mxu0 %v3102
    %3255 = vmatprep.subr.mxu0 %v3110
    %3256 = vmatpush1.msra.mxu0 %v3108
    %3257 = vmatprep.subr.mxu0 %v3116
    %3258 = vmatpush1.msra.mxu0 %v3114
    %3259 = vmatprep.subr.mxu0 %v3122
    %3260 = vmatpush1.msra.mxu0 %v3120
    %3261 = vmatprep.subr.mxu0 %v3128
    %3262 = vmatpush1.msra.mxu0 %v3126
    %3263 = vmatprep.subr.mxu0 %v3134
    %3264 = vmatpush1.msra.mxu0 %v3132
    %3265 = vmatprep.subr.mxu0 %v3140
    %3266 = vmatpush1.msra.mxu0 %v3138
    %3267 = vmatprep.subr.mxu0 %v3146
    %3268 = vmatpush1.msra.mxu0 %v3144
    %3269 = vmatprep.subr.mxu0 %v3152
    %3270 = vmatpush1.msra.mxu0 %v3150
    %3271 = vmatprep.subr.mxu0 %v3158
    %3272 = vmatpush1.msra.mxu0 %v3156
    %3273 = vmatprep.subr.mxu0 0.0
    %3274 = vmatpush1.msra.mxu0 0.0
    %3275 = vmatprep.subr.mxu0 0.0
    %3276 = vmatpush1.msra.mxu0 0.0
    %3277 = vmatprep.subr.mxu0 0.0
    %3278 = vmatpush1.msra.mxu0 0.0
    %3279 = vmatprep.subr.mxu0 0.0
    %3280 = vmatpush1.msra.mxu0 0.0
    %3281 = vmatprep.subr.mxu0 0.0
    %3282 = vmatpush1.msra.mxu0 0.0
    %3283 = vmatprep.subr.mxu0 0.0
    %3284 = vmatpush1.msra.mxu0 0.0
    %3285 = vmatprep.mubr.f32.mxu0 %v3186
    %3286 = vmatmul.mubr.f32.gmra.mrb[0].mxu0 %v3161
    %v3287 = vpop.f32.mrb[0].mxu0
    %v3288 = vadd.f32 0.0, %v3287
    %v3289 = vpop.f32.mrb[0].mxu0
    %v3290 = vadd.f32 0.0, %v3289
    %3291 = vmatprep.mubr.f32.mxu0 %v3189
    %3292 = vmatmul.mubr.f32.gmra.mrb[0].mxu0 %v3163
    %v3293 = vpop.f32.mrb[0].mxu0
    %v3294 = vadd.f32 0.0, %v3293
    %v3295 = vpop.f32.mrb[0].mxu0
    %v3296 = vadd.f32 0.0, %v3295
    %3297 = vmatprep.mubr.f32.mxu0 %v3192
    %3298 = vmatmul.mubr.f32.gmra.mrb[0].mxu0 %v3165
    %v3299 = vpop.f32.mrb[0].mxu0
    %v3300 = vadd.f32 0.0, %v3299
    %v3301 = vpop.f32.mrb[0].mxu0
    %v3302 = vadd.f32 0.0, %v3301
    %3303 = vmatprep.mubr.f32.mxu0 %v3195
    %3304 = vmatmul.mubr.f32.gmra.mrb[0].mxu0 %v3167
    %v3305 = vpop.f32.mrb[0].mxu0
    %v3306 = vadd.f32 0.0, %v3305
    %v3307 = vpop.f32.mrb[0].mxu0
    %v3308 = vadd.f32 0.0, %v3307
    %3309 = vmatprep.mubr.f32.mxu0 %v3198
    %3310 = vmatmul.mubr.f32.gmra.mrb[0].mxu0 %v3169
    %v3311 = vpop.f32.mrb[0].mxu0
    %v3312 = vadd.f32 0.0, %v3311
    %v3313 = vpop.f32.mrb[0].mxu0
    %v3314 = vadd.f32 0.0, %v3313
    %3315 = vmatprep.mubr.f32.mxu0 %v3201
    %3316 = vmatmul.mubr.f32.gmra.mrb[0].mxu0 %v3171
    %v3317 = vpop.f32.mrb[0].mxu0
    %v3318 = vadd.f32 0.0, %v3317
    %v3319 = vpop.f32.mrb[0].mxu0
    %v3320 = vadd.f32 0.0, %v3319
    %3321 = vmatprep.mubr.f32.mxu0 %v3204
    %3322 = vmatmul.mubr.f32.gmra.mrb[0].mxu0 %v3173
    %v3323 = vpop.f32.mrb[0].mxu0
    %v3324 = vadd.f32 0.0, %v3323
    %v3325 = vpop.f32.mrb[0].mxu0
    %v3326 = vadd.f32 0.0, %v3325
    %3327 = vmatprep.mubr.f32.mxu0 %v3207
    %3328 = vmatmul.mubr.f32.gmra.mrb[0].mxu0 %v3175
    %v3329 = vpop.f32.mrb[0].mxu0
    %v3330 = vadd.f32 0.0, %v3329
    %v3331 = vpop.f32.mrb[0].mxu0
    %v3332 = vadd.f32 0.0, %v3331
    %3333 = vmatprep.mubr.f32.mxu0 %v3210
    %3334 = vmatmul.mubr.f32.gmra.mrb[0].mxu0 %v3177
    %v3335 = vpop.f32.mrb[0].mxu0
    %v3336 = vadd.f32 0.0, %v3335
    %v3337 = vpop.f32.mrb[0].mxu0
    %v3338 = vadd.f32 0.0, %v3337
    %3339 = vmatprep.mubr.f32.mxu0 %v3213
    %3340 = vmatmul.mubr.f32.gmra.mrb[0].mxu0 %v3179
    %v3341 = vpop.f32.mrb[0].mxu0
    %v3342 = vadd.f32 0.0, %v3341
    %v3343 = vpop.f32.mrb[0].mxu0
    %v3344 = vadd.f32 0.0, %v3343
    %3345 = vmatprep.mubr.f32.mxu0 %v3216
    %3346 = vmatmul.mubr.f32.gmra.mrb[0].mxu0 %v3181
    %v3347 = vpop.f32.mrb[0].mxu0
    %v3348 = vadd.f32 0.0, %v3347
    %v3349 = vpop.f32.mrb[0].mxu0
    %v3350 = vadd.f32 0.0, %v3349
    %3351 = vmatprep.mubr.f32.mxu0 %v3219
    %3352 = vmatmul.mubr.f32.gmra.mrb[0].mxu0 %v3183
    %v3353 = vpop.f32.mrb[0].mxu0
    %v3354 = vadd.f32 0.0, %v3353
    %v3355 = vpop.f32.mrb[0].mxu0
    %v3356 = vadd.f32 0.0, %v3355
    %3357 = vdwg.mxu0
    %v3358 = vadd.f32 %v2888, %v3288
    %v3359 = vadd.f32 %v2889, %v3290
    %v3360 = vadd.f32 %v2890, %v3294
    %v3361 = vadd.f32 %v2891, %v3296
    %v3362 = vadd.f32 %v2892, %v3300
    %v3363 = vadd.f32 %v2893, %v3302
    %v3364 = vadd.f32 %v2894, %v3306
    %v3365 = vadd.f32 %v2895, %v3308
    %v3366 = vadd.f32 %v2896, %v3312
    %v3367 = vadd.f32 %v2897, %v3314
    %v3368 = vadd.f32 %v2898, %v3318
    %v3369 = vadd.f32 %v2899, %v3320
    %v3370 = vadd.f32 %v2900, %v3324
    %v3371 = vadd.f32 %v2901, %v3326
    %v3372 = vadd.f32 %v2902, %v3330
    %v3373 = vadd.f32 %v2903, %v3332
    %v3374 = vadd.f32 %v2904, %v3336
    %v3375 = vadd.f32 %v2905, %v3338
    %v3376 = vadd.f32 %v2906, %v3342
    %v3377 = vadd.f32 %v2907, %v3344
    %v3378 = vadd.f32 %v2908, %v3348
    %v3379 = vadd.f32 %v2909, %v3350
    %v3380 = vadd.f32 %v2910, %v3354
    %v3381 = vadd.f32 %v2911, %v3356
    %v3382 = vld [vmem:[%s9] sm:$0x3]
    %v3383 = vld [vmem:[%s7] sm:$0xff]
    %v3384 = vld [vmem:[%s7 + $0x8] sm:$0xff]
    %v3385 = vld [vmem:[%s7 + $0x10] sm:$0xff]
    %v3386 = vld [vmem:[%s7 + $0x18] sm:$0xff]
    %v3387 = vld [vmem:[%s7 + $0x20] sm:$0xff]
    %v3388 = vld [vmem:[%s7 + $0x28] sm:$0xff]
    %v3389 = vld [vmem:[%s7 + $0x30] sm:$0xff]
    %v3390 = vld [vmem:[%s7 + $0x38] sm:$0xff]
    %v3391 = vld [vmem:[%s7 + $0x40] sm:$0xff]
    %v3392 = vld [vmem:[%s7 + $0x48] sm:$0xff]
    %v3393 = vld [vmem:[%s7 + $0x50] sm:$0xff]
    %v3394 = vld [vmem:[%s7 + $0x58] sm:$0xff]
    %v3395 = vld [vmem:[%s7 + $0x60] sm:$0xff]
    %v3396 = vld [vmem:[%s7 + $0x68] sm:$0xff]
    %v3397 = vld [vmem:[%s7 + $0x70] sm:$0xff]
    %v3398 = vld [vmem:[%s7 + $0x78] sm:$0xff]
    %v3399 = vld [vmem:[%s7 + $0x80] sm:$0xff]
    %v3400 = vld [vmem:[%s7 + $0x88] sm:$0xff]
    %v3401 = vld [vmem:[%s7 + $0x90] sm:$0xff]
    %v3402 = vld [vmem:[%s7 + $0x98] sm:$0xff]
    %v3403 = vld [vmem:[%s7 + $0xa0] sm:$0xff]
    %v3404 = vld [vmem:[%s7 + $0xa8] sm:$0xff]
    %v3405 = vld [vmem:[%s7 + $0xb0] sm:$0xff]
    %v3406 = vld [vmem:[%s7 + $0xb8] sm:$0xff]
    %v3407 = vld [vmem:[%s7 + $0xc0] sm:$0xff]
    %v3408 = vld [vmem:[%s7 + $0xc8] sm:$0xff]
    %v3409 = vld [vmem:[%s7 + $0xd0] sm:$0xff]
    %v3410 = vld [vmem:[%s7 + $0xd8] sm:$0xff]
    %v3411 = vld [vmem:[%s7 + $0xe0] sm:$0xff]
    %v3412 = vld [vmem:[%s7 + $0xe8] sm:$0xff]
    %v3413 = vld [vmem:[%s7 + $0xf0] sm:$0xff]
    %v3414 = vld [vmem:[%s7 + $0xf8] sm:$0xff]
    %v3415 = vld [vmem:[%s7 + $0x100] sm:$0xff]
    %v3416 = vld [vmem:[%s7 + $0x108] sm:$0xff]
    %v3417 = vld [vmem:[%s7 + $0x110] sm:$0xff]
    %v3418 = vld [vmem:[%s7 + $0x118] sm:$0xff]
    %v3419 = vld [vmem:[%s7 + $0x120] sm:$0xff]
    %v3420 = vld [vmem:[%s7 + $0x128] sm:$0xff]
    %v3421 = vld [vmem:[%s7 + $0x130] sm:$0xff]
    %v3422 = vld [vmem:[%s7 + $0x138] sm:$0xff]
    %v3423 = vld [vmem:[%s7 + $0x140] sm:$0xff]
    %v3424 = vld [vmem:[%s7 + $0x148] sm:$0xff]
    %v3425 = vld [vmem:[%s7 + $0x150] sm:$0xff]
    %v3426 = vld [vmem:[%s7 + $0x158] sm:$0xff]
    %v3427 = vld [vmem:[%s7 + $0x160] sm:$0xff]
    %v3428 = vld [vmem:[%s7 + $0x168] sm:$0xff]
    %v3429 = vld [vmem:[%s7 + $0x170] sm:$0xff]
    %v3430 = vld [vmem:[%s7 + $0x178] sm:$0xff]
    %vm3431 = vcmask 523264
    %v3433 = vsel %vm3431, %v3359, 0
    %v3436 = vsel %vm3431, %v3361, 0
    %v3439 = vsel %vm3431, %v3363, 0
    %v3442 = vsel %vm3431, %v3365, 0
    %v3445 = vsel %vm3431, %v3367, 0
    %v3448 = vsel %vm3431, %v3369, 0
    %v3451 = vsel %vm3431, %v3371, 0
    %v3454 = vsel %vm3431, %v3373, 0
    %v3457 = vsel %vm3431, %v3375, 0
    %v3460 = vsel %vm3431, %v3377, 0
    %v3463 = vsel %vm3431, %v3379, 0
    %v3466 = vsel %vm3431, %v3381, 0
    %3468 = vmatprep.subr.mxu0 %v3384
    %3469 = vmatpush1.msra.mxu0 %v3383
    %3470 = vmatprep.subr.mxu0 %v3386
    %3471 = vmatpush1.msra.mxu0 %v3385
    %3472 = vmatprep.subr.mxu0 %v3388
    %3473 = vmatpush1.msra.mxu0 %v3387
    %3474 = vmatprep.subr.mxu0 %v3390
    %3475 = vmatpush1.msra.mxu0 %v3389
    %3476 = vmatprep.subr.mxu0 %v3392
    %3477 = vmatpush1.msra.mxu0 %v3391
    %3478 = vmatprep.subr.mxu0 %v3394
    %3479 = vmatpush1.msra.mxu0 %v3393
    %3480 = vmatprep.subr.mxu0 %v3396
    %3481 = vmatpush1.msra.mxu0 %v3395
    %3482 = vmatprep.subr.mxu0 %v3398
    %3483 = vmatpush1.msra.mxu0 %v3397
    %3484 = vmatprep.subr.mxu0 %v3400
    %3485 = vmatpush1.msra.mxu0 %v3399
    %3486 = vmatprep.subr.mxu0 %v3402
    %3487 = vmatpush1.msra.mxu0 %v3401
    %3488 = vmatprep.subr.mxu0 %v3404
    %3489 = vmatpush1.msra.mxu0 %v3403
    %3490 = vmatprep.subr.mxu0 %v3406
    %3491 = vmatpush1.msra.mxu0 %v3405
    %3492 = vmatprep.subr.mxu0 %v3408
    %3493 = vmatpush1.msra.mxu0 %v3407
    %3494 = vmatprep.subr.mxu0 %v3410
    %3495 = vmatpush1.msra.mxu0 %v3409
    %3496 = vmatprep.subr.mxu0 %v3412
    %3497 = vmatpush1.msra.mxu0 %v3411
    %3498 = vmatprep.subr.mxu0 %v3414
    %3499 = vmatpush1.msra.mxu0 %v3413
    %3500 = vmatprep.subr.mxu0 %v3416
    %3501 = vmatpush1.msra.mxu0 %v3415
    %3502 = vmatprep.subr.mxu0 %v3418
    %3503 = vmatpush1.msra.mxu0 %v3417
    %3504 = vmatprep.subr.mxu0 %v3420
    %3505 = vmatpush1.msra.mxu0 %v3419
    %3506 = vmatprep.subr.mxu0 %v3422
    %3507 = vmatpush1.msra.mxu0 %v3421
    %3508 = vmatprep.subr.mxu0 %v3424
    %3509 = vmatpush1.msra.mxu0 %v3423
    %3510 = vmatprep.subr.mxu0 %v3426
    %3511 = vmatpush1.msra.mxu0 %v3425
    %3512 = vmatprep.subr.mxu0 %v3428
    %3513 = vmatpush1.msra.mxu0 %v3427
    %3514 = vmatprep.subr.mxu0 %v3430
    %3515 = vmatpush1.msra.mxu0 %v3429
    %3516 = vmatprep.subr.mxu0 0.0
    %3517 = vmatpush1.msra.mxu0 0.0
    %3518 = vmatprep.subr.mxu0 0.0
    %3519 = vmatpush1.msra.mxu0 0.0
    %3520 = vmatprep.subr.mxu0 0.0
    %3521 = vmatpush1.msra.mxu0 0.0
    %3522 = vmatprep.subr.mxu0 0.0
    %3523 = vmatpush1.msra.mxu0 0.0
    %3524 = vmatprep.subr.mxu0 0.0
    %3525 = vmatpush1.msra.mxu0 0.0
    %3526 = vmatprep.subr.mxu0 0.0
    %3527 = vmatpush1.msra.mxu0 0.0
    %3528 = vmatprep.subr.mxu0 0.0
    %3529 = vmatpush1.msra.mxu0 0.0
    %3530 = vmatprep.subr.mxu0 0.0
    %3531 = vmatpush1.msra.mxu0 0.0
    %3532 = vmatprep.mubr.f32.mxu0 %v3433
    %3533 = vmatmul.mubr.f32.gmra.mrb[0].mxu0 %v3358
    %v3534 = vpop.f32.mrb[0].mxu0
    %v3535 = vadd.f32 0.0, %v3534
    %v3536 = vpop.f32.mrb[0].mxu0
    %v3537 = vadd.f32 0.0, %v3536
    %3538 = vmatprep.mubr.f32.mxu0 %v3436
    %3539 = vmatmul.mubr.f32.gmra.mrb[0].mxu0 %v3360
    %v3540 = vpop.f32.mrb[0].mxu0
    %v3541 = vadd.f32 0.0, %v3540
    %v3542 = vpop.f32.mrb[0].mxu0
    %v3543 = vadd.f32 0.0, %v3542
    %3544 = vmatprep.mubr.f32.mxu0 %v3439
    %3545 = vmatmul.mubr.f32.gmra.mrb[0].mxu0 %v3362
    %v3546 = vpop.f32.mrb[0].mxu0
    %v3547 = vadd.f32 0.0, %v3546
    %v3548 = vpop.f32.mrb[0].mxu0
    %v3549 = vadd.f32 0.0, %v3548
    %3550 = vmatprep.mubr.f32.mxu0 %v3442
    %3551 = vmatmul.mubr.f32.gmra.mrb[0].mxu0 %v3364
    %v3552 = vpop.f32.mrb[0].mxu0
    %v3553 = vadd.f32 0.0, %v3552
    %v3554 = vpop.f32.mrb[0].mxu0
    %v3555 = vadd.f32 0.0, %v3554
    %3556 = vmatprep.mubr.f32.mxu0 %v3445
    %3557 = vmatmul.mubr.f32.gmra.mrb[0].mxu0 %v3366
    %v3558 = vpop.f32.mrb[0].mxu0
    %v3559 = vadd.f32 0.0, %v3558
    %v3560 = vpop.f32.mrb[0].mxu0
    %v3561 = vadd.f32 0.0, %v3560
    %3562 = vmatprep.mubr.f32.mxu0 %v3448
    %3563 = vmatmul.mubr.f32.gmra.mrb[0].mxu0 %v3368
    %v3564 = vpop.f32.mrb[0].mxu0
    %v3565 = vadd.f32 0.0, %v3564
    %v3566 = vpop.f32.mrb[0].mxu0
    %v3567 = vadd.f32 0.0, %v3566
    %3568 = vmatprep.mubr.f32.mxu0 %v3451
    %3569 = vmatmul.mubr.f32.gmra.mrb[0].mxu0 %v3370
    %v3570 = vpop.f32.mrb[0].mxu0
    %v3571 = vadd.f32 0.0, %v3570
    %v3572 = vpop.f32.mrb[0].mxu0
    %v3573 = vadd.f32 0.0, %v3572
    %3574 = vmatprep.mubr.f32.mxu0 %v3454
    %3575 = vmatmul.mubr.f32.gmra.mrb[0].mxu0 %v3372
    %v3576 = vpop.f32.mrb[0].mxu0
    %v3577 = vadd.f32 0.0, %v3576
    %v3578 = vpop.f32.mrb[0].mxu0
    %v3579 = vadd.f32 0.0, %v3578
    %3580 = vmatprep.mubr.f32.mxu0 %v3457
    %3581 = vmatmul.mubr.f32.gmra.mrb[0].mxu0 %v3374
    %v3582 = vpop.f32.mrb[0].mxu0
    %v3583 = vadd.f32 0.0, %v3582
    %v3584 = vpop.f32.mrb[0].mxu0
    %v3585 = vadd.f32 0.0, %v3584
    %3586 = vmatprep.mubr.f32.mxu0 %v3460
    %3587 = vmatmul.mubr.f32.gmra.mrb[0].mxu0 %v3376
    %v3588 = vpop.f32.mrb[0].mxu0
    %v3589 = vadd.f32 0.0, %v3588
    %v3590 = vpop.f32.mrb[0].mxu0
    %v3591 = vadd.f32 0.0, %v3590
    %3592 = vmatprep.mubr.f32.mxu0 %v3463
    %3593 = vmatmul.mubr.f32.gmra.mrb[0].mxu0 %v3378
    %v3594 = vpop.f32.mrb[0].mxu0
    %v3595 = vadd.f32 0.0, %v3594
    %v3596 = vpop.f32.mrb[0].mxu0
    %v3597 = vadd.f32 0.0, %v3596
    %3598 = vmatprep.mubr.f32.mxu0 %v3466
    %3599 = vmatmul.mubr.f32.gmra.mrb[0].mxu0 %v3380
    %v3600 = vpop.f32.mrb[0].mxu0
    %v3601 = vadd.f32 0.0, %v3600
    %v3602 = vpop.f32.mrb[0].mxu0
    %v3603 = vadd.f32 0.0, %v3602
    %3604 = vdwg.mxu0
    %v3605 = vld [vmem:[%s8] sm:$0xff]
    %v3606 = vld [vmem:[%s8 + $0x8] sm:$0xff]
    %v3607 = vld [vmem:[%s8 + $0x10] sm:$0xff]
    %v3608 = vld [vmem:[%s8 + $0x18] sm:$0xff]
    %v3609 = vld [vmem:[%s8 + $0x20] sm:$0xff]
    %v3611 = vsel %vm446, %v3605, 0
    %v3614 = vsel %vm446, %v3606, 0
    %v3617 = vsel %vm446, %v3607, 0
    %v3620 = vsel %vm446, %v3608, 0
    %v3623 = vsel %vm446, %v3609, 0
    %3625 = vmatprep.subr.mxu0 %v3537
    %3626 = vmatpush1.msra.mxu0 %v3535
    %3627 = vmatprep.subr.mxu0 %v3543
    %3628 = vmatpush1.msra.mxu0 %v3541
    %3629 = vmatprep.subr.mxu0 %v3549
    %3630 = vmatpush1.msra.mxu0 %v3547
    %3631 = vmatprep.subr.mxu0 %v3555
    %3632 = vmatpush1.msra.mxu0 %v3553
    %3633 = vmatprep.subr.mxu0 %v3561
    %3634 = vmatpush1.msra.mxu0 %v3559
    %3635 = vmatprep.subr.mxu0 %v3567
    %3636 = vmatpush1.msra.mxu0 %v3565
    %3637 = vmatprep.subr.mxu0 %v3573
    %3638 = vmatpush1.msra.mxu0 %v3571
    %3639 = vmatprep.subr.mxu0 %v3579
    %3640 = vmatpush1.msra.mxu0 %v3577
    %3641 = vmatprep.subr.mxu0 %v3585
    %3642 = vmatpush1.msra.mxu0 %v3583
    %3643 = vmatprep.subr.mxu0 %v3591
    %3644 = vmatpush1.msra.mxu0 %v3589
    %3645 = vmatprep.subr.mxu0 %v3597
    %3646 = vmatpush1.msra.mxu0 %v3595
    %3647 = vmatprep.subr.mxu0 %v3603
    %3648 = vmatpush1.msra.mxu0 %v3601
    %3649 = vmatprep.subr.mxu0 0.0
    %3650 = vmatpush1.msra.mxu0 0.0
    %3651 = vmatprep.subr.mxu0 0.0
    %3652 = vmatpush1.msra.mxu0 0.0
    %3653 = vmatprep.subr.mxu0 0.0
    %3654 = vmatpush1.msra.mxu0 0.0
    %3655 = vmatprep.subr.mxu0 0.0
    %3656 = vmatpush1.msra.mxu0 0.0
    %3657 = vmatprep.subr.mxu0 0.0
    %3658 = vmatpush1.msra.mxu0 0.0
    %3659 = vmatprep.subr.mxu0 0.0
    %3660 = vmatpush1.msra.mxu0 0.0
    %3661 = vmatprep.subr.mxu0 0.0
    %3662 = vmatpush1.msra.mxu0 0.0
    %3663 = vmatprep.subr.mxu0 0.0
    %3664 = vmatpush1.msra.mxu0 0.0
    %3665 = vmatprep.subr.mxu0 0.0
    %3666 = vmatpush1.msra.mxu0 0.0
    %3667 = vmatprep.subr.mxu0 0.0
    %3668 = vmatpush1.msra.mxu0 0.0
    %3669 = vmatprep.subr.mxu0 0.0
    %3670 = vmatpush1.msra.mxu0 0.0
    %3671 = vmatprep.subr.mxu0 0.0
    %3672 = vmatpush1.msra.mxu0 0.0
    %3673 = vmatprep.subr.mxu0 0.0
    %3674 = vmatpush1.msra.mxu0 0.0
    %3675 = vmatprep.subr.mxu0 0.0
    %3676 = vmatpush1.msra.mxu0 0.0
    %3677 = vmatprep.subr.mxu0 0.0
    %3678 = vmatpush1.msra.mxu0 0.0
    %3679 = vmatprep.subr.mxu0 0.0
    %3680 = vmatpush1.msra.mxu0 0.0
    %3681 = vmatprep.subr.mxu0 0.0
    %3682 = vmatpush1.msra.mxu0 0.0
    %3683 = vmatprep.subr.mxu0 0.0
    %3684 = vmatpush1.msra.mxu0 0.0
    %3685 = vmatprep.subr.mxu0 0.0
    %3686 = vmatpush1.msra.mxu0 0.0
    %3687 = vmatprep.subr.mxu0 0.0
    %3688 = vmatpush1.msra.mxu0 0.0
    %3689 = vmatprep.mubr.f32.mxu0 0.0
    %3690 = vmatmul.mubr.f32.gmra.mrb[0].mxu0 %v3611
    %v3691 = vpop.f32.mrb[0].mxu0
    %v3692 = vadd.f32 0.0, %v3691
    %v3693 = vpop.f32.mrb[0].mxu0
    %v3694 = vadd.f32 0.0, %v3693
    %3695 = vmatprep.mubr.f32.mxu0 0.0
    %3696 = vmatmul.mubr.f32.gmra.mrb[0].mxu0 %v3614
    %v3697 = vpop.f32.mrb[0].mxu0
    %v3698 = vadd.f32 0.0, %v3697
    %v3699 = vpop.f32.mrb[0].mxu0
    %v3700 = vadd.f32 0.0, %v3699
    %3701 = vmatprep.mubr.f32.mxu0 0.0
    %3702 = vmatmul.mubr.f32.gmra.mrb[0].mxu0 %v3617
    %v3703 = vpop.f32.mrb[0].mxu0
    %v3704 = vadd.f32 0.0, %v3703
    %v3705 = vpop.f32.mrb[0].mxu0
    %v3706 = vadd.f32 0.0, %v3705
    %3707 = vmatprep.mubr.f32.mxu0 0.0
    %3708 = vmatmul.mubr.f32.gmra.mrb[0].mxu0 %v3620
    %v3709 = vpop.f32.mrb[0].mxu0
    %v3710 = vadd.f32 0.0, %v3709
    %v3711 = vpop.f32.mrb[0].mxu0
    %v3712 = vadd.f32 0.0, %v3711
    %3713 = vmatprep.mubr.f32.mxu0 0.0
    %3714 = vmatmul.mubr.f32.gmra.mrb[0].mxu0 %v3623
    %v3715 = vpop.f32.mrb[0].mxu0
    %v3716 = vadd.f32 0.0, %v3715
    %v3717 = vpop.f32.mrb[0].mxu0
    %v3718 = vadd.f32 0.0, %v3717
    %3719 = vdwg.mxu0
    %v3721 = vlaneseq
    %v3722 = vshrl.u32 %v3721, 7
    %v3723 = vsub.s32 0, %v3722
    %v3724 = vrot.slane %v3382, %v3723
    %v3725 = vlaneseq
    %v3726 = vshrl.u32 %v3725, 7
    %v3727 = vsub.s32 1, %v3726
    %v3728 = vrot.slane %v3382, %v3727
    %v3731 = vadd.f32 %v3724, %v3692
    %v3732 = vadd.f32 %v3728, %v3694
    %v3733 = vadd.f32 %v3724, %v3698
    %v3734 = vadd.f32 %v3728, %v3700
    %v3735 = vadd.f32 %v3724, %v3704
    %v3736 = vadd.f32 %v3728, %v3706
    %v3737 = vadd.f32 %v3724, %v3710
    %v3738 = vadd.f32 %v3728, %v3712
    %v3739 = vadd.f32 %v3724, %v3716
    %v3740 = vadd.f32 %v3728, %v3718
    %s3741 = scalar_lea.vmem %s7, 384
    %v3742 = vld [vmem:[%s3741] sm:$0xff]
    %v3743 = vld [vmem:[%s3741 + $0x8] sm:$0xff]
    %v3744 = vld [vmem:[%s3741 + $0x10] sm:$0xff]
    %v3745 = vld [vmem:[%s3741 + $0x18] sm:$0xff]
    %v3746 = vld [vmem:[%s3741 + $0x20] sm:$0xff]
    %v3747 = vld [vmem:[%s3741 + $0x28] sm:$0xff]
    %v3748 = vld [vmem:[%s3741 + $0x30] sm:$0xff]
    %v3749 = vld [vmem:[%s3741 + $0x38] sm:$0xff]
    %v3750 = vld [vmem:[%s3741 + $0x40] sm:$0xff]
    %v3751 = vld [vmem:[%s3741 + $0x48] sm:$0xff]
    %v3752 = vld [vmem:[%s3741 + $0x50] sm:$0xff]
    %v3753 = vld [vmem:[%s3741 + $0x58] sm:$0xff]
    %v3754 = vld [vmem:[%s3741 + $0x60] sm:$0xff]
    %v3755 = vld [vmem:[%s3741 + $0x68] sm:$0xff]
    %v3756 = vld [vmem:[%s3741 + $0x70] sm:$0xff]
    %v3757 = vld [vmem:[%s3741 + $0x78] sm:$0xff]
    %v3758 = vld [vmem:[%s3741 + $0x80] sm:$0xff]
    %v3759 = vld [vmem:[%s3741 + $0x88] sm:$0xff]
    %v3760 = vld [vmem:[%s3741 + $0x90] sm:$0xff]
    %v3761 = vld [vmem:[%s3741 + $0x98] sm:$0xff]
    %v3762 = vld [vmem:[%s3741 + $0xa0] sm:$0xff]
    %v3763 = vld [vmem:[%s3741 + $0xa8] sm:$0xff]
    %v3764 = vld [vmem:[%s3741 + $0xb0] sm:$0xff]
    %v3765 = vld [vmem:[%s3741 + $0xb8] sm:$0xff]
    %v3766 = vld [vmem:[%s3741 + $0xc0] sm:$0xff]
    %v3767 = vld [vmem:[%s3741 + $0xc8] sm:$0xff]
    %v3768 = vld [vmem:[%s3741 + $0xd0] sm:$0xff]
    %v3769 = vld [vmem:[%s3741 + $0xd8] sm:$0xff]
    %v3770 = vld [vmem:[%s3741 + $0xe0] sm:$0xff]
    %v3771 = vld [vmem:[%s3741 + $0xe8] sm:$0xff]
    %v3772 = vld [vmem:[%s3741 + $0xf0] sm:$0xff]
    %v3773 = vld [vmem:[%s3741 + $0xf8] sm:$0xff]
    %v3774 = vld [vmem:[%s3741 + $0x100] sm:$0xff]
    %v3775 = vld [vmem:[%s3741 + $0x108] sm:$0xff]
    %v3776 = vld [vmem:[%s3741 + $0x110] sm:$0xff]
    %v3777 = vld [vmem:[%s3741 + $0x118] sm:$0xff]
    %v3778 = vld [vmem:[%s3741 + $0x120] sm:$0xff]
    %v3779 = vld [vmem:[%s3741 + $0x128] sm:$0xff]
    %v3780 = vld [vmem:[%s3741 + $0x130] sm:$0xff]
    %v3781 = vld [vmem:[%s3741 + $0x138] sm:$0xff]
    %v3782 = vld [vmem:[%s3741 + $0x140] sm:$0xff]
    %v3783 = vld [vmem:[%s3741 + $0x148] sm:$0xff]
    %v3784 = vld [vmem:[%s3741 + $0x150] sm:$0xff]
    %v3785 = vld [vmem:[%s3741 + $0x158] sm:$0xff]
    %v3786 = vld [vmem:[%s3741 + $0x160] sm:$0xff]
    %v3787 = vld [vmem:[%s3741 + $0x168] sm:$0xff]
    %v3788 = vld [vmem:[%s3741 + $0x170] sm:$0xff]
    %v3789 = vld [vmem:[%s3741 + $0x178] sm:$0xff]
    %3790 = vmatprep.subr.mxu0 %v3743
    %3791 = vmatpush1.msra.mxu0 %v3742
    %3792 = vmatprep.subr.mxu0 %v3745
    %3793 = vmatpush1.msra.mxu0 %v3744
    %3794 = vmatprep.subr.mxu0 %v3747
    %3795 = vmatpush1.msra.mxu0 %v3746
    %3796 = vmatprep.subr.mxu0 %v3749
    %3797 = vmatpush1.msra.mxu0 %v3748
    %3798 = vmatprep.subr.mxu0 %v3751
    %3799 = vmatpush1.msra.mxu0 %v3750
    %3800 = vmatprep.subr.mxu0 %v3753
    %3801 = vmatpush1.msra.mxu0 %v3752
    %3802 = vmatprep.subr.mxu0 %v3755
    %3803 = vmatpush1.msra.mxu0 %v3754
    %3804 = vmatprep.subr.mxu0 %v3757
    %3805 = vmatpush1.msra.mxu0 %v3756
    %3806 = vmatprep.subr.mxu0 %v3759
    %3807 = vmatpush1.msra.mxu0 %v3758
    %3808 = vmatprep.subr.mxu0 %v3761
    %3809 = vmatpush1.msra.mxu0 %v3760
    %3810 = vmatprep.subr.mxu0 %v3763
    %3811 = vmatpush1.msra.mxu0 %v3762
    %3812 = vmatprep.subr.mxu0 %v3765
    %3813 = vmatpush1.msra.mxu0 %v3764
    %3814 = vmatprep.subr.mxu0 %v3767
    %3815 = vmatpush1.msra.mxu0 %v3766
    %3816 = vmatprep.subr.mxu0 %v3769
    %3817 = vmatpush1.msra.mxu0 %v3768
    %3818 = vmatprep.subr.mxu0 %v3771
    %3819 = vmatpush1.msra.mxu0 %v3770
    %3820 = vmatprep.subr.mxu0 %v3773
    %3821 = vmatpush1.msra.mxu0 %v3772
    %3822 = vmatprep.subr.mxu0 %v3775
    %3823 = vmatpush1.msra.mxu0 %v3774
    %3824 = vmatprep.subr.mxu0 %v3777
    %3825 = vmatpush1.msra.mxu0 %v3776
    %3826 = vmatprep.subr.mxu0 %v3779
    %3827 = vmatpush1.msra.mxu0 %v3778
    %3828 = vmatprep.subr.mxu0 %v3781
    %3829 = vmatpush1.msra.mxu0 %v3780
    %3830 = vmatprep.subr.mxu0 %v3783
    %3831 = vmatpush1.msra.mxu0 %v3782
    %3832 = vmatprep.subr.mxu0 %v3785
    %3833 = vmatpush1.msra.mxu0 %v3784
    %3834 = vmatprep.subr.mxu0 %v3787
    %3835 = vmatpush1.msra.mxu0 %v3786
    %3836 = vmatprep.subr.mxu0 %v3789
    %3837 = vmatpush1.msra.mxu0 %v3788
    %3838 = vmatprep.subr.mxu0 0.0
    %3839 = vmatpush1.msra.mxu0 0.0
    %3840 = vmatprep.subr.mxu0 0.0
    %3841 = vmatpush1.msra.mxu0 0.0
    %3842 = vmatprep.subr.mxu0 0.0
    %3843 = vmatpush1.msra.mxu0 0.0
    %3844 = vmatprep.subr.mxu0 0.0
    %3845 = vmatpush1.msra.mxu0 0.0
    %3846 = vmatprep.subr.mxu0 0.0
    %3847 = vmatpush1.msra.mxu0 0.0
    %3848 = vmatprep.subr.mxu0 0.0
    %3849 = vmatpush1.msra.mxu0 0.0
    %3850 = vmatprep.subr.mxu0 0.0
    %3851 = vmatpush1.msra.mxu0 0.0
    %3852 = vmatprep.subr.mxu0 0.0
    %3853 = vmatpush1.msra.mxu0 0.0
    %3854 = vmatprep.mubr.f32.mxu0 %v3433
    %3855 = vmatmul.mubr.f32.gmra.mrb[0].mxu0 %v3358
    %v3856 = vpop.f32.mrb[0].mxu0
    %v3857 = vadd.f32 0.0, %v3856
    %v3858 = vpop.f32.mrb[0].mxu0
    %v3859 = vadd.f32 0.0, %v3858
    %3860 = vmatprep.mubr.f32.mxu0 %v3436
    %3861 = vmatmul.mubr.f32.gmra.mrb[0].mxu0 %v3360
    %v3862 = vpop.f32.mrb[0].mxu0
    %v3863 = vadd.f32 0.0, %v3862
    %v3864 = vpop.f32.mrb[0].mxu0
    %v3865 = vadd.f32 0.0, %v3864
    %3866 = vmatprep.mubr.f32.mxu0 %v3439
    %3867 = vmatmul.mubr.f32.gmra.mrb[0].mxu0 %v3362
    %v3868 = vpop.f32.mrb[0].mxu0
    %v3869 = vadd.f32 0.0, %v3868
    %v3870 = vpop.f32.mrb[0].mxu0
    %v3871 = vadd.f32 0.0, %v3870
    %3872 = vmatprep.mubr.f32.mxu0 %v3442
    %3873 = vmatmul.mubr.f32.gmra.mrb[0].mxu0 %v3364
    %v3874 = vpop.f32.mrb[0].mxu0
    %v3875 = vadd.f32 0.0, %v3874
    %v3876 = vpop.f32.mrb[0].mxu0
    %v3877 = vadd.f32 0.0, %v3876
    %3878 = vmatprep.mubr.f32.mxu0 %v3445
    %3879 = vmatmul.mubr.f32.gmra.mrb[0].mxu0 %v3366
    %v3880 = vpop.f32.mrb[0].mxu0
    %v3881 = vadd.f32 0.0, %v3880
    %v3882 = vpop.f32.mrb[0].mxu0
    %v3883 = vadd.f32 0.0, %v3882
    %3884 = vmatprep.mubr.f32.mxu0 %v3448
    %3885 = vmatmul.mubr.f32.gmra.mrb[0].mxu0 %v3368
    %v3886 = vpop.f32.mrb[0].mxu0
    %v3887 = vadd.f32 0.0, %v3886
    %v3888 = vpop.f32.mrb[0].mxu0
    %v3889 = vadd.f32 0.0, %v3888
    %3890 = vmatprep.mubr.f32.mxu0 %v3451
    %3891 = vmatmul.mubr.f32.gmra.mrb[0].mxu0 %v3370
    %v3892 = vpop.f32.mrb[0].mxu0
    %v3893 = vadd.f32 0.0, %v3892
    %v3894 = vpop.f32.mrb[0].mxu0
    %v3895 = vadd.f32 0.0, %v3894
    %3896 = vmatprep.mubr.f32.mxu0 %v3454
    %3897 = vmatmul.mubr.f32.gmra.mrb[0].mxu0 %v3372
    %v3898 = vpop.f32.mrb[0].mxu0
    %v3899 = vadd.f32 0.0, %v3898
    %v3900 = vpop.f32.mrb[0].mxu0
    %v3901 = vadd.f32 0.0, %v3900
    %3902 = vmatprep.mubr.f32.mxu0 %v3457
    %3903 = vmatmul.mubr.f32.gmra.mrb[0].mxu0 %v3374
    %v3904 = vpop.f32.mrb[0].mxu0
    %v3905 = vadd.f32 0.0, %v3904
    %v3906 = vpop.f32.mrb[0].mxu0
    %v3907 = vadd.f32 0.0, %v3906
    %3908 = vmatprep.mubr.f32.mxu0 %v3460
    %3909 = vmatmul.mubr.f32.gmra.mrb[0].mxu0 %v3376
    %v3910 = vpop.f32.mrb[0].mxu0
    %v3911 = vadd.f32 0.0, %v3910
    %v3912 = vpop.f32.mrb[0].mxu0
    %v3913 = vadd.f32 0.0, %v3912
    %3914 = vmatprep.mubr.f32.mxu0 %v3463
    %3915 = vmatmul.mubr.f32.gmra.mrb[0].mxu0 %v3378
    %v3916 = vpop.f32.mrb[0].mxu0
    %v3917 = vadd.f32 0.0, %v3916
    %v3918 = vpop.f32.mrb[0].mxu0
    %v3919 = vadd.f32 0.0, %v3918
    %3920 = vmatprep.mubr.f32.mxu0 %v3466
    %3921 = vmatmul.mubr.f32.gmra.mrb[0].mxu0 %v3380
    %v3922 = vpop.f32.mrb[0].mxu0
    %v3923 = vadd.f32 0.0, %v3922
    %v3924 = vpop.f32.mrb[0].mxu0
    %v3925 = vadd.f32 0.0, %v3924
    %3926 = vdwg.mxu0
    %s3927 = scalar_lea.vmem %s8, 40
    %v3928 = vld [vmem:[%s3927] sm:$0xff]
    %v3929 = vld [vmem:[%s3927 + $0x8] sm:$0xff]
    %v3930 = vld [vmem:[%s3927 + $0x10] sm:$0xff]
    %v3931 = vld [vmem:[%s3927 + $0x18] sm:$0xff]
    %v3932 = vld [vmem:[%s3927 + $0x20] sm:$0xff]
    %v3934 = vsel %vm446, %v3928, 0
    %v3937 = vsel %vm446, %v3929, 0
    %v3940 = vsel %vm446, %v3930, 0
    %v3943 = vsel %vm446, %v3931, 0
    %v3946 = vsel %vm446, %v3932, 0
    %3948 = vmatprep.subr.mxu0 %v3859
    %3949 = vmatpush1.msra.mxu0 %v3857
    %3950 = vmatprep.subr.mxu0 %v3865
    %3951 = vmatpush1.msra.mxu0 %v3863
    %3952 = vmatprep.subr.mxu0 %v3871
    %3953 = vmatpush1.msra.mxu0 %v3869
    %3954 = vmatprep.subr.mxu0 %v3877
    %3955 = vmatpush1.msra.mxu0 %v3875
    %3956 = vmatprep.subr.mxu0 %v3883
    %3957 = vmatpush1.msra.mxu0 %v3881
    %3958 = vmatprep.subr.mxu0 %v3889
    %3959 = vmatpush1.msra.mxu0 %v3887
    %3960 = vmatprep.subr.mxu0 %v3895
    %3961 = vmatpush1.msra.mxu0 %v3893
    %3962 = vmatprep.subr.mxu0 %v3901
    %3963 = vmatpush1.msra.mxu0 %v3899
    %3964 = vmatprep.subr.mxu0 %v3907
    %3965 = vmatpush1.msra.mxu0 %v3905
    %3966 = vmatprep.subr.mxu0 %v3913
    %3967 = vmatpush1.msra.mxu0 %v3911
    %3968 = vmatprep.subr.mxu0 %v3919
    %3969 = vmatpush1.msra.mxu0 %v3917
    %3970 = vmatprep.subr.mxu0 %v3925
    %3971 = vmatpush1.msra.mxu0 %v3923
    %3972 = vmatprep.subr.mxu0 0.0
    %3973 = vmatpush1.msra.mxu0 0.0
    %3974 = vmatprep.subr.mxu0 0.0
    %3975 = vmatpush1.msra.mxu0 0.0
    %3976 = vmatprep.subr.mxu0 0.0
    %3977 = vmatpush1.msra.mxu0 0.0
    %3978 = vmatprep.subr.mxu0 0.0
    %3979 = vmatpush1.msra.mxu0 0.0
    %3980 = vmatprep.subr.mxu0 0.0
    %3981 = vmatpush1.msra.mxu0 0.0
    %3982 = vmatprep.subr.mxu0 0.0
    %3983 = vmatpush1.msra.mxu0 0.0
    %3984 = vmatprep.subr.mxu0 0.0
    %3985 = vmatpush1.msra.mxu0 0.0
    %3986 = vmatprep.subr.mxu0 0.0
    %3987 = vmatpush1.msra.mxu0 0.0
    %3988 = vmatprep.subr.mxu0 0.0
    %3989 = vmatpush1.msra.mxu0 0.0
    %3990 = vmatprep.subr.mxu0 0.0
    %3991 = vmatpush1.msra.mxu0 0.0
    %3992 = vmatprep.subr.mxu0 0.0
    %3993 = vmatpush1.msra.mxu0 0.0
    %3994 = vmatprep.subr.mxu0 0.0
    %3995 = vmatpush1.msra.mxu0 0.0
    %3996 = vmatprep.subr.mxu0 0.0
    %3997 = vmatpush1.msra.mxu0 0.0
    %3998 = vmatprep.subr.mxu0 0.0
    %3999 = vmatpush1.msra.mxu0 0.0
    %4000 = vmatprep.subr.mxu0 0.0
    %4001 = vmatpush1.msra.mxu0 0.0
    %4002 = vmatprep.subr.mxu0 0.0
    %4003 = vmatpush1.msra.mxu0 0.0
    %4004 = vmatprep.subr.mxu0 0.0
    %4005 = vmatpush1.msra.mxu0 0.0
    %4006 = vmatprep.subr.mxu0 0.0
    %4007 = vmatpush1.msra.mxu0 0.0
    %4008 = vmatprep.subr.mxu0 0.0
    %4009 = vmatpush1.msra.mxu0 0.0
    %4010 = vmatprep.subr.mxu0 0.0
    %4011 = vmatpush1.msra.mxu0 0.0
    %4012 = vmatprep.mubr.f32.mxu0 0.0
    %4013 = vmatmul.mubr.f32.gmra.mrb[0].mxu0 %v3934
    %v4014 = vpop.f32.mrb[0].mxu0
    %v4015 = vadd.f32 0.0, %v4014
    %v4016 = vpop.f32.mrb[0].mxu0
    %v4017 = vadd.f32 0.0, %v4016
    %4018 = vmatprep.mubr.f32.mxu0 0.0
    %4019 = vmatmul.mubr.f32.gmra.mrb[0].mxu0 %v3937
    %v4020 = vpop.f32.mrb[0].mxu0
    %v4021 = vadd.f32 0.0, %v4020
    %v4022 = vpop.f32.mrb[0].mxu0
    %v4023 = vadd.f32 0.0, %v4022
    %4024 = vmatprep.mubr.f32.mxu0 0.0
    %4025 = vmatmul.mubr.f32.gmra.mrb[0].mxu0 %v3940
    %v4026 = vpop.f32.mrb[0].mxu0
    %v4027 = vadd.f32 0.0, %v4026
    %v4028 = vpop.f32.mrb[0].mxu0
    %v4029 = vadd.f32 0.0, %v4028
    %4030 = vmatprep.mubr.f32.mxu0 0.0
    %4031 = vmatmul.mubr.f32.gmra.mrb[0].mxu0 %v3943
    %v4032 = vpop.f32.mrb[0].mxu0
    %v4033 = vadd.f32 0.0, %v4032
    %v4034 = vpop.f32.mrb[0].mxu0
    %v4035 = vadd.f32 0.0, %v4034
    %4036 = vmatprep.mubr.f32.mxu0 0.0
    %4037 = vmatmul.mubr.f32.gmra.mrb[0].mxu0 %v3946
    %v4038 = vpop.f32.mrb[0].mxu0
    %v4039 = vadd.f32 0.0, %v4038
    %v4040 = vpop.f32.mrb[0].mxu0
    %v4041 = vadd.f32 0.0, %v4040
    %4042 = vdwg.mxu0
    %v4043 = vadd.f32 %v3731, %v4015
    %v4044 = vadd.f32 %v3732, %v4017
    %v4045 = vadd.f32 %v3733, %v4021
    %v4046 = vadd.f32 %v3734, %v4023
    %v4047 = vadd.f32 %v3735, %v4027
    %v4048 = vadd.f32 %v3736, %v4029
    %v4049 = vadd.f32 %v3737, %v4033
    %v4050 = vadd.f32 %v3738, %v4035
    %v4051 = vadd.f32 %v3739, %v4039
    %v4052 = vadd.f32 %v3740, %v4041
    %s4053 = scalar_lea.vmem %s7, 768
    %v4054 = vld [vmem:[%s4053] sm:$0xff]
    %v4055 = vld [vmem:[%s4053 + $0x8] sm:$0xff]
    %v4056 = vld [vmem:[%s4053 + $0x10] sm:$0xff]
    %v4057 = vld [vmem:[%s4053 + $0x18] sm:$0xff]
    %v4058 = vld [vmem:[%s4053 + $0x20] sm:$0xff]
    %v4059 = vld [vmem:[%s4053 + $0x28] sm:$0xff]
    %v4060 = vld [vmem:[%s4053 + $0x30] sm:$0xff]
    %v4061 = vld [vmem:[%s4053 + $0x38] sm:$0xff]
    %v4062 = vld [vmem:[%s4053 + $0x40] sm:$0xff]
    %v4063 = vld [vmem:[%s4053 + $0x48] sm:$0xff]
    %v4064 = vld [vmem:[%s4053 + $0x50] sm:$0xff]
    %v4065 = vld [vmem:[%s4053 + $0x58] sm:$0xff]
    %v4066 = vld [vmem:[%s4053 + $0x60] sm:$0xff]
    %v4067 = vld [vmem:[%s4053 + $0x68] sm:$0xff]
    %v4068 = vld [vmem:[%s4053 + $0x70] sm:$0xff]
    %v4069 = vld [vmem:[%s4053 + $0x78] sm:$0xff]
    %v4070 = vld [vmem:[%s4053 + $0x80] sm:$0xff]
    %v4071 = vld [vmem:[%s4053 + $0x88] sm:$0xff]
    %v4072 = vld [vmem:[%s4053 + $0x90] sm:$0xff]
    %v4073 = vld [vmem:[%s4053 + $0x98] sm:$0xff]
    %v4074 = vld [vmem:[%s4053 + $0xa0] sm:$0xff]
    %v4075 = vld [vmem:[%s4053 + $0xa8] sm:$0xff]
    %v4076 = vld [vmem:[%s4053 + $0xb0] sm:$0xff]
    %v4077 = vld [vmem:[%s4053 + $0xb8] sm:$0xff]
    %v4078 = vld [vmem:[%s4053 + $0xc0] sm:$0xff]
    %v4079 = vld [vmem:[%s4053 + $0xc8] sm:$0xff]
    %v4080 = vld [vmem:[%s4053 + $0xd0] sm:$0xff]
    %v4081 = vld [vmem:[%s4053 + $0xd8] sm:$0xff]
    %v4082 = vld [vmem:[%s4053 + $0xe0] sm:$0xff]
    %v4083 = vld [vmem:[%s4053 + $0xe8] sm:$0xff]
    %v4084 = vld [vmem:[%s4053 + $0xf0] sm:$0xff]
    %v4085 = vld [vmem:[%s4053 + $0xf8] sm:$0xff]
    %v4086 = vld [vmem:[%s4053 + $0x100] sm:$0xff]
    %v4087 = vld [vmem:[%s4053 + $0x108] sm:$0xff]
    %v4088 = vld [vmem:[%s4053 + $0x110] sm:$0xff]
    %v4089 = vld [vmem:[%s4053 + $0x118] sm:$0xff]
    %v4090 = vld [vmem:[%s4053 + $0x120] sm:$0xff]
    %v4091 = vld [vmem:[%s4053 + $0x128] sm:$0xff]
    %v4092 = vld [vmem:[%s4053 + $0x130] sm:$0xff]
    %v4093 = vld [vmem:[%s4053 + $0x138] sm:$0xff]
    %v4094 = vld [vmem:[%s4053 + $0x140] sm:$0xff]
    %v4095 = vld [vmem:[%s4053 + $0x148] sm:$0xff]
    %v4096 = vld [vmem:[%s4053 + $0x150] sm:$0xff]
    %v4097 = vld [vmem:[%s4053 + $0x158] sm:$0xff]
    %v4098 = vld [vmem:[%s4053 + $0x160] sm:$0xff]
    %v4099 = vld [vmem:[%s4053 + $0x168] sm:$0xff]
    %v4100 = vld [vmem:[%s4053 + $0x170] sm:$0xff]
    %v4101 = vld [vmem:[%s4053 + $0x178] sm:$0xff]
    %4102 = vmatprep.subr.mxu0 %v4055
    %4103 = vmatpush1.msra.mxu0 %v4054
    %4104 = vmatprep.subr.mxu0 %v4057
    %4105 = vmatpush1.msra.mxu0 %v4056
    %4106 = vmatprep.subr.mxu0 %v4059
    %4107 = vmatpush1.msra.mxu0 %v4058
    %4108 = vmatprep.subr.mxu0 %v4061
    %4109 = vmatpush1.msra.mxu0 %v4060
    %4110 = vmatprep.subr.mxu0 %v4063
    %4111 = vmatpush1.msra.mxu0 %v4062
    %4112 = vmatprep.subr.mxu0 %v4065
    %4113 = vmatpush1.msra.mxu0 %v4064
    %4114 = vmatprep.subr.mxu0 %v4067
    %4115 = vmatpush1.msra.mxu0 %v4066
    %4116 = vmatprep.subr.mxu0 %v4069
    %4117 = vmatpush1.msra.mxu0 %v4068
    %4118 = vmatprep.subr.mxu0 %v4071
    %4119 = vmatpush1.msra.mxu0 %v4070
    %4120 = vmatprep.subr.mxu0 %v4073
    %4121 = vmatpush1.msra.mxu0 %v4072
    %4122 = vmatprep.subr.mxu0 %v4075
    %4123 = vmatpush1.msra.mxu0 %v4074
    %4124 = vmatprep.subr.mxu0 %v4077
    %4125 = vmatpush1.msra.mxu0 %v4076
    %4126 = vmatprep.subr.mxu0 %v4079
    %4127 = vmatpush1.msra.mxu0 %v4078
    %4128 = vmatprep.subr.mxu0 %v4081
    %4129 = vmatpush1.msra.mxu0 %v4080
    %4130 = vmatprep.subr.mxu0 %v4083
    %4131 = vmatpush1.msra.mxu0 %v4082
    %4132 = vmatprep.subr.mxu0 %v4085
    %4133 = vmatpush1.msra.mxu0 %v4084
    %4134 = vmatprep.subr.mxu0 %v4087
    %4135 = vmatpush1.msra.mxu0 %v4086
    %4136 = vmatprep.subr.mxu0 %v4089
    %4137 = vmatpush1.msra.mxu0 %v4088
    %4138 = vmatprep.subr.mxu0 %v4091
    %4139 = vmatpush1.msra.mxu0 %v4090
    %4140 = vmatprep.subr.mxu0 %v4093
    %4141 = vmatpush1.msra.mxu0 %v4092
    %4142 = vmatprep.subr.mxu0 %v4095
    %4143 = vmatpush1.msra.mxu0 %v4094
    %4144 = vmatprep.subr.mxu0 %v4097
    %4145 = vmatpush1.msra.mxu0 %v4096
    %4146 = vmatprep.subr.mxu0 %v4099
    %4147 = vmatpush1.msra.mxu0 %v4098
    %4148 = vmatprep.subr.mxu0 %v4101
    %4149 = vmatpush1.msra.mxu0 %v4100
    %4150 = vmatprep.subr.mxu0 0.0
    %4151 = vmatpush1.msra.mxu0 0.0
    %4152 = vmatprep.subr.mxu0 0.0
    %4153 = vmatpush1.msra.mxu0 0.0
    %4154 = vmatprep.subr.mxu0 0.0
    %4155 = vmatpush1.msra.mxu0 0.0
    %4156 = vmatprep.subr.mxu0 0.0
    %4157 = vmatpush1.msra.mxu0 0.0
    %4158 = vmatprep.subr.mxu0 0.0
    %4159 = vmatpush1.msra.mxu0 0.0
    %4160 = vmatprep.subr.mxu0 0.0
    %4161 = vmatpush1.msra.mxu0 0.0
    %4162 = vmatprep.subr.mxu0 0.0
    %4163 = vmatpush1.msra.mxu0 0.0
    %4164 = vmatprep.subr.mxu0 0.0
    %4165 = vmatpush1.msra.mxu0 0.0
    %4166 = vmatprep.mubr.f32.mxu0 %v3433
    %4167 = vmatmul.mubr.f32.gmra.mrb[0].mxu0 %v3358
    %v4168 = vpop.f32.mrb[0].mxu0
    %v4169 = vadd.f32 0.0, %v4168
    %v4170 = vpop.f32.mrb[0].mxu0
    %v4171 = vadd.f32 0.0, %v4170
    %4172 = vmatprep.mubr.f32.mxu0 %v3436
    %4173 = vmatmul.mubr.f32.gmra.mrb[0].mxu0 %v3360
    %v4174 = vpop.f32.mrb[0].mxu0
    %v4175 = vadd.f32 0.0, %v4174
    %v4176 = vpop.f32.mrb[0].mxu0
    %v4177 = vadd.f32 0.0, %v4176
    %4178 = vmatprep.mubr.f32.mxu0 %v3439
    %4179 = vmatmul.mubr.f32.gmra.mrb[0].mxu0 %v3362
    %v4180 = vpop.f32.mrb[0].mxu0
    %v4181 = vadd.f32 0.0, %v4180
    %v4182 = vpop.f32.mrb[0].mxu0
    %v4183 = vadd.f32 0.0, %v4182
    %4184 = vmatprep.mubr.f32.mxu0 %v3442
    %4185 = vmatmul.mubr.f32.gmra.mrb[0].mxu0 %v3364
    %v4186 = vpop.f32.mrb[0].mxu0
    %v4187 = vadd.f32 0.0, %v4186
    %v4188 = vpop.f32.mrb[0].mxu0
    %v4189 = vadd.f32 0.0, %v4188
    %4190 = vmatprep.mubr.f32.mxu0 %v3445
    %4191 = vmatmul.mubr.f32.gmra.mrb[0].mxu0 %v3366
    %v4192 = vpop.f32.mrb[0].mxu0
    %v4193 = vadd.f32 0.0, %v4192
    %v4194 = vpop.f32.mrb[0].mxu0
    %v4195 = vadd.f32 0.0, %v4194
    %4196 = vmatprep.mubr.f32.mxu0 %v3448
    %4197 = vmatmul.mubr.f32.gmra.mrb[0].mxu0 %v3368
    %v4198 = vpop.f32.mrb[0].mxu0
    %v4199 = vadd.f32 0.0, %v4198
    %v4200 = vpop.f32.mrb[0].mxu0
    %v4201 = vadd.f32 0.0, %v4200
    %4202 = vmatprep.mubr.f32.mxu0 %v3451
    %4203 = vmatmul.mubr.f32.gmra.mrb[0].mxu0 %v3370
    %v4204 = vpop.f32.mrb[0].mxu0
    %v4205 = vadd.f32 0.0, %v4204
    %v4206 = vpop.f32.mrb[0].mxu0
    %v4207 = vadd.f32 0.0, %v4206
    %4208 = vmatprep.mubr.f32.mxu0 %v3454
    %4209 = vmatmul.mubr.f32.gmra.mrb[0].mxu0 %v3372
    %v4210 = vpop.f32.mrb[0].mxu0
    %v4211 = vadd.f32 0.0, %v4210
    %v4212 = vpop.f32.mrb[0].mxu0
    %v4213 = vadd.f32 0.0, %v4212
    %4214 = vmatprep.mubr.f32.mxu0 %v3457
    %4215 = vmatmul.mubr.f32.gmra.mrb[0].mxu0 %v3374
    %v4216 = vpop.f32.mrb[0].mxu0
    %v4217 = vadd.f32 0.0, %v4216
    %v4218 = vpop.f32.mrb[0].mxu0
    %v4219 = vadd.f32 0.0, %v4218
    %4220 = vmatprep.mubr.f32.mxu0 %v3460
    %4221 = vmatmul.mubr.f32.gmra.mrb[0].mxu0 %v3376
    %v4222 = vpop.f32.mrb[0].mxu0
    %v4223 = vadd.f32 0.0, %v4222
    %v4224 = vpop.f32.mrb[0].mxu0
    %v4225 = vadd.f32 0.0, %v4224
    %4226 = vmatprep.mubr.f32.mxu0 %v3463
    %4227 = vmatmul.mubr.f32.gmra.mrb[0].mxu0 %v3378
    %v4228 = vpop.f32.mrb[0].mxu0
    %v4229 = vadd.f32 0.0, %v4228
    %v4230 = vpop.f32.mrb[0].mxu0
    %v4231 = vadd.f32 0.0, %v4230
    %4232 = vmatprep.mubr.f32.mxu0 %v3466
    %4233 = vmatmul.mubr.f32.gmra.mrb[0].mxu0 %v3380
    %v4234 = vpop.f32.mrb[0].mxu0
    %v4235 = vadd.f32 0.0, %v4234
    %v4236 = vpop.f32.mrb[0].mxu0
    %v4237 = vadd.f32 0.0, %v4236
    %4238 = vdwg.mxu0
    %s4239 = scalar_lea.vmem %s8, 80
    %v4240 = vld [vmem:[%s4239] sm:$0xff]
    %v4241 = vld [vmem:[%s4239 + $0x8] sm:$0xff]
    %v4242 = vld [vmem:[%s4239 + $0x10] sm:$0xff]
    %v4243 = vld [vmem:[%s4239 + $0x18] sm:$0xff]
    %v4244 = vld [vmem:[%s4239 + $0x20] sm:$0xff]
    %v4246 = vsel %vm446, %v4240, 0
    %v4249 = vsel %vm446, %v4241, 0
    %v4252 = vsel %vm446, %v4242, 0
    %v4255 = vsel %vm446, %v4243, 0
    %v4258 = vsel %vm446, %v4244, 0
    %4260 = vmatprep.subr.mxu0 %v4171
    %4261 = vmatpush1.msra.mxu0 %v4169
    %4262 = vmatprep.subr.mxu0 %v4177
    %4263 = vmatpush1.msra.mxu0 %v4175
    %4264 = vmatprep.subr.mxu0 %v4183
    %4265 = vmatpush1.msra.mxu0 %v4181
    %4266 = vmatprep.subr.mxu0 %v4189
    %4267 = vmatpush1.msra.mxu0 %v4187
    %4268 = vmatprep.subr.mxu0 %v4195
    %4269 = vmatpush1.msra.mxu0 %v4193
    %4270 = vmatprep.subr.mxu0 %v4201
    %4271 = vmatpush1.msra.mxu0 %v4199
    %4272 = vmatprep.subr.mxu0 %v4207
    %4273 = vmatpush1.msra.mxu0 %v4205
    %4274 = vmatprep.subr.mxu0 %v4213
    %4275 = vmatpush1.msra.mxu0 %v4211
    %4276 = vmatprep.subr.mxu0 %v4219
    %4277 = vmatpush1.msra.mxu0 %v4217
    %4278 = vmatprep.subr.mxu0 %v4225
    %4279 = vmatpush1.msra.mxu0 %v4223
    %4280 = vmatprep.subr.mxu0 %v4231
    %4281 = vmatpush1.msra.mxu0 %v4229
    %4282 = vmatprep.subr.mxu0 %v4237
    %4283 = vmatpush1.msra.mxu0 %v4235
    %4284 = vmatprep.subr.mxu0 0.0
    %4285 = vmatpush1.msra.mxu0 0.0
    %4286 = vmatprep.subr.mxu0 0.0
    %4287 = vmatpush1.msra.mxu0 0.0
    %4288 = vmatprep.subr.mxu0 0.0
    %4289 = vmatpush1.msra.mxu0 0.0
    %4290 = vmatprep.subr.mxu0 0.0
    %4291 = vmatpush1.msra.mxu0 0.0
    %4292 = vmatprep.subr.mxu0 0.0
    %4293 = vmatpush1.msra.mxu0 0.0
    %4294 = vmatprep.subr.mxu0 0.0
    %4295 = vmatpush1.msra.mxu0 0.0
    %4296 = vmatprep.subr.mxu0 0.0
    %4297 = vmatpush1.msra.mxu0 0.0
    %4298 = vmatprep.subr.mxu0 0.0
    %4299 = vmatpush1.msra.mxu0 0.0
    %4300 = vmatprep.subr.mxu0 0.0
    %4301 = vmatpush1.msra.mxu0 0.0
    %4302 = vmatprep.subr.mxu0 0.0
    %4303 = vmatpush1.msra.mxu0 0.0
    %4304 = vmatprep.subr.mxu0 0.0
    %4305 = vmatpush1.msra.mxu0 0.0
    %4306 = vmatprep.subr.mxu0 0.0
    %4307 = vmatpush1.msra.mxu0 0.0
    %4308 = vmatprep.subr.mxu0 0.0
    %4309 = vmatpush1.msra.mxu0 0.0
    %4310 = vmatprep.subr.mxu0 0.0
    %4311 = vmatpush1.msra.mxu0 0.0
    %4312 = vmatprep.subr.mxu0 0.0
    %4313 = vmatpush1.msra.mxu0 0.0
    %4314 = vmatprep.subr.mxu0 0.0
    %4315 = vmatpush1.msra.mxu0 0.0
    %4316 = vmatprep.subr.mxu0 0.0
    %4317 = vmatpush1.msra.mxu0 0.0
    %4318 = vmatprep.subr.mxu0 0.0
    %4319 = vmatpush1.msra.mxu0 0.0
    %4320 = vmatprep.subr.mxu0 0.0
    %4321 = vmatpush1.msra.mxu0 0.0
    %4322 = vmatprep.subr.mxu0 0.0
    %4323 = vmatpush1.msra.mxu0 0.0
    %4324 = vmatprep.mubr.f32.mxu0 0.0
    %4325 = vmatmul.mubr.f32.gmra.mrb[0].mxu0 %v4246
    %v4326 = vpop.f32.mrb[0].mxu0
    %v4327 = vadd.f32 0.0, %v4326
    %v4328 = vpop.f32.mrb[0].mxu0
    %v4329 = vadd.f32 0.0, %v4328
    %4330 = vmatprep.mubr.f32.mxu0 0.0
    %4331 = vmatmul.mubr.f32.gmra.mrb[0].mxu0 %v4249
    %v4332 = vpop.f32.mrb[0].mxu0
    %v4333 = vadd.f32 0.0, %v4332
    %v4334 = vpop.f32.mrb[0].mxu0
    %v4335 = vadd.f32 0.0, %v4334
    %4336 = vmatprep.mubr.f32.mxu0 0.0
    %4337 = vmatmul.mubr.f32.gmra.mrb[0].mxu0 %v4252
    %v4338 = vpop.f32.mrb[0].mxu0
    %v4339 = vadd.f32 0.0, %v4338
    %v4340 = vpop.f32.mrb[0].mxu0
    %v4341 = vadd.f32 0.0, %v4340
    %4342 = vmatprep.mubr.f32.mxu0 0.0
    %4343 = vmatmul.mubr.f32.gmra.mrb[0].mxu0 %v4255
    %v4344 = vpop.f32.mrb[0].mxu0
    %v4345 = vadd.f32 0.0, %v4344
    %v4346 = vpop.f32.mrb[0].mxu0
    %v4347 = vadd.f32 0.0, %v4346
    %4348 = vmatprep.mubr.f32.mxu0 0.0
    %4349 = vmatmul.mubr.f32.gmra.mrb[0].mxu0 %v4258
    %v4350 = vpop.f32.mrb[0].mxu0
    %v4351 = vadd.f32 0.0, %v4350
    %v4352 = vpop.f32.mrb[0].mxu0
    %v4353 = vadd.f32 0.0, %v4352
    %4354 = vdwg.mxu0
    %v4355 = vadd.f32 %v4043, %v4327
    %v4356 = vadd.f32 %v4044, %v4329
    %v4357 = vadd.f32 %v4045, %v4333
    %v4358 = vadd.f32 %v4046, %v4335
    %v4359 = vadd.f32 %v4047, %v4339
    %v4360 = vadd.f32 %v4048, %v4341
    %v4361 = vadd.f32 %v4049, %v4345
    %v4362 = vadd.f32 %v4050, %v4347
    %v4363 = vadd.f32 %v4051, %v4351
    %v4364 = vadd.f32 %v4052, %v4353
    %v4365 = vld [vmem:[%s12] sm:$0x3]
    %v4366 = vld [vmem:[%s10] sm:$0xff]
    %v4367 = vld [vmem:[%s10 + $0x8] sm:$0xff]
    %v4368 = vld [vmem:[%s10 + $0x10] sm:$0xff]
    %v4369 = vld [vmem:[%s10 + $0x18] sm:$0xff]
    %v4370 = vld [vmem:[%s10 + $0x20] sm:$0xff]
    %v4371 = vld [vmem:[%s10 + $0x28] sm:$0xff]
    %v4372 = vld [vmem:[%s10 + $0x30] sm:$0xff]
    %v4373 = vld [vmem:[%s10 + $0x38] sm:$0xff]
    %v4374 = vld [vmem:[%s10 + $0x40] sm:$0xff]
    %v4375 = vld [vmem:[%s10 + $0x48] sm:$0xff]
    %v4376 = vld [vmem:[%s10 + $0x50] sm:$0xff]
    %v4377 = vld [vmem:[%s10 + $0x58] sm:$0xff]
    %v4378 = vld [vmem:[%s10 + $0x60] sm:$0xff]
    %v4379 = vld [vmem:[%s10 + $0x68] sm:$0xff]
    %v4380 = vld [vmem:[%s10 + $0x70] sm:$0xff]
    %v4381 = vld [vmem:[%s10 + $0x78] sm:$0xff]
    %v4382 = vld [vmem:[%s10 + $0x80] sm:$0xff]
    %v4383 = vld [vmem:[%s10 + $0x88] sm:$0xff]
    %v4384 = vld [vmem:[%s10 + $0x90] sm:$0xff]
    %v4385 = vld [vmem:[%s10 + $0x98] sm:$0xff]
    %v4386 = vld [vmem:[%s10 + $0xa0] sm:$0xff]
    %v4387 = vld [vmem:[%s10 + $0xa8] sm:$0xff]
    %v4388 = vld [vmem:[%s10 + $0xb0] sm:$0xff]
    %v4389 = vld [vmem:[%s10 + $0xb8] sm:$0xff]
    %v4390 = vld [vmem:[%s10 + $0xc0] sm:$0xff]
    %v4391 = vld [vmem:[%s10 + $0xc8] sm:$0xff]
    %v4392 = vld [vmem:[%s10 + $0xd0] sm:$0xff]
    %v4393 = vld [vmem:[%s10 + $0xd8] sm:$0xff]
    %v4394 = vld [vmem:[%s10 + $0xe0] sm:$0xff]
    %v4395 = vld [vmem:[%s10 + $0xe8] sm:$0xff]
    %v4396 = vld [vmem:[%s10 + $0xf0] sm:$0xff]
    %v4397 = vld [vmem:[%s10 + $0xf8] sm:$0xff]
    %v4398 = vld [vmem:[%s10 + $0x100] sm:$0xff]
    %v4399 = vld [vmem:[%s10 + $0x108] sm:$0xff]
    %v4400 = vld [vmem:[%s10 + $0x110] sm:$0xff]
    %v4401 = vld [vmem:[%s10 + $0x118] sm:$0xff]
    %v4402 = vld [vmem:[%s10 + $0x120] sm:$0xff]
    %v4403 = vld [vmem:[%s10 + $0x128] sm:$0xff]
    %v4404 = vld [vmem:[%s10 + $0x130] sm:$0xff]
    %v4405 = vld [vmem:[%s10 + $0x138] sm:$0xff]
    %vm4406 = vcmask 261120
    %v4408 = vsel %vm4406, %v4356, 0
    %v4411 = vsel %vm4406, %v4358, 0
    %v4414 = vsel %vm4406, %v4360, 0
    %v4417 = vsel %vm4406, %v4362, 0
    %v4420 = vsel %vm4406, %v4364, 0
    %4422 = vmatprep.subr.mxu0 %v4367
    %4423 = vmatpush1.msra.mxu0 %v4366
    %4424 = vmatprep.subr.mxu0 %v4369
    %4425 = vmatpush1.msra.mxu0 %v4368
    %4426 = vmatprep.subr.mxu0 %v4371
    %4427 = vmatpush1.msra.mxu0 %v4370
    %4428 = vmatprep.subr.mxu0 %v4373
    %4429 = vmatpush1.msra.mxu0 %v4372
    %4430 = vmatprep.subr.mxu0 %v4375
    %4431 = vmatpush1.msra.mxu0 %v4374
    %4432 = vmatprep.subr.mxu0 %v4377
    %4433 = vmatpush1.msra.mxu0 %v4376
    %4434 = vmatprep.subr.mxu0 %v4379
    %4435 = vmatpush1.msra.mxu0 %v4378
    %4436 = vmatprep.subr.mxu0 %v4381
    %4437 = vmatpush1.msra.mxu0 %v4380
    %4438 = vmatprep.subr.mxu0 %v4383
    %4439 = vmatpush1.msra.mxu0 %v4382
    %4440 = vmatprep.subr.mxu0 %v4385
    %4441 = vmatpush1.msra.mxu0 %v4384
    %4442 = vmatprep.subr.mxu0 %v4387
    %4443 = vmatpush1.msra.mxu0 %v4386
    %4444 = vmatprep.subr.mxu0 %v4389
    %4445 = vmatpush1.msra.mxu0 %v4388
    %4446 = vmatprep.subr.mxu0 %v4391
    %4447 = vmatpush1.msra.mxu0 %v4390
    %4448 = vmatprep.subr.mxu0 %v4393
    %4449 = vmatpush1.msra.mxu0 %v4392
    %4450 = vmatprep.subr.mxu0 %v4395
    %4451 = vmatpush1.msra.mxu0 %v4394
    %4452 = vmatprep.subr.mxu0 %v4397
    %4453 = vmatpush1.msra.mxu0 %v4396
    %4454 = vmatprep.subr.mxu0 %v4399
    %4455 = vmatpush1.msra.mxu0 %v4398
    %4456 = vmatprep.subr.mxu0 %v4401
    %4457 = vmatpush1.msra.mxu0 %v4400
    %4458 = vmatprep.subr.mxu0 %v4403
    %4459 = vmatpush1.msra.mxu0 %v4402
    %4460 = vmatprep.subr.mxu0 %v4405
    %4461 = vmatpush1.msra.mxu0 %v4404
    %4462 = vmatprep.subr.mxu0 0.0
    %4463 = vmatpush1.msra.mxu0 0.0
    %4464 = vmatprep.subr.mxu0 0.0
    %4465 = vmatpush1.msra.mxu0 0.0
    %4466 = vmatprep.subr.mxu0 0.0
    %4467 = vmatpush1.msra.mxu0 0.0
    %4468 = vmatprep.subr.mxu0 0.0
    %4469 = vmatpush1.msra.mxu0 0.0
    %4470 = vmatprep.subr.mxu0 0.0
    %4471 = vmatpush1.msra.mxu0 0.0
    %4472 = vmatprep.subr.mxu0 0.0
    %4473 = vmatpush1.msra.mxu0 0.0
    %4474 = vmatprep.subr.mxu0 0.0
    %4475 = vmatpush1.msra.mxu0 0.0
    %4476 = vmatprep.subr.mxu0 0.0
    %4477 = vmatpush1.msra.mxu0 0.0
    %4478 = vmatprep.subr.mxu0 0.0
    %4479 = vmatpush1.msra.mxu0 0.0
    %4480 = vmatprep.subr.mxu0 0.0
    %4481 = vmatpush1.msra.mxu0 0.0
    %4482 = vmatprep.subr.mxu0 0.0
    %4483 = vmatpush1.msra.mxu0 0.0
    %4484 = vmatprep.subr.mxu0 0.0
    %4485 = vmatpush1.msra.mxu0 0.0
    %4486 = vmatprep.mubr.f32.mxu0 %v4408
    %4487 = vmatmul.mubr.f32.gmra.mrb[0].mxu0 %v4355
    %v4488 = vpop.f32.mrb[0].mxu0
    %v4489 = vadd.f32 0.0, %v4488
    %v4490 = vpop.f32.mrb[0].mxu0
    %v4491 = vadd.f32 0.0, %v4490
    %4492 = vmatprep.mubr.f32.mxu0 %v4411
    %4493 = vmatmul.mubr.f32.gmra.mrb[0].mxu0 %v4357
    %v4494 = vpop.f32.mrb[0].mxu0
    %v4495 = vadd.f32 0.0, %v4494
    %v4496 = vpop.f32.mrb[0].mxu0
    %v4497 = vadd.f32 0.0, %v4496
    %4498 = vmatprep.mubr.f32.mxu0 %v4414
    %4499 = vmatmul.mubr.f32.gmra.mrb[0].mxu0 %v4359
    %v4500 = vpop.f32.mrb[0].mxu0
    %v4501 = vadd.f32 0.0, %v4500
    %v4502 = vpop.f32.mrb[0].mxu0
    %v4503 = vadd.f32 0.0, %v4502
    %4504 = vmatprep.mubr.f32.mxu0 %v4417
    %4505 = vmatmul.mubr.f32.gmra.mrb[0].mxu0 %v4361
    %v4506 = vpop.f32.mrb[0].mxu0
    %v4507 = vadd.f32 0.0, %v4506
    %v4508 = vpop.f32.mrb[0].mxu0
    %v4509 = vadd.f32 0.0, %v4508
    %4510 = vmatprep.mubr.f32.mxu0 %v4420
    %4511 = vmatmul.mubr.f32.gmra.mrb[0].mxu0 %v4363
    %v4512 = vpop.f32.mrb[0].mxu0
    %v4513 = vadd.f32 0.0, %v4512
    %v4514 = vpop.f32.mrb[0].mxu0
    %v4515 = vadd.f32 0.0, %v4514
    %4516 = vdwg.mxu0
    %v4517 = vld [vmem:[%s11] sm:$0xff]
    %v4518 = vld [vmem:[%s11 + $0x8] sm:$0xff]
    %v4519 = vld [vmem:[%s11 + $0x10] sm:$0xff]
    %vm4520 = vcmask 326656
    %v4522 = vsel %vm4520, %v4517, 0
    %v4525 = vsel %vm4520, %v4518, 0
    %v4528 = vsel %vm4520, %v4519, 0
    %4530 = vmatprep.subr.mxu0 %v4491
    %4531 = vmatpush1.msra.mxu0 %v4489
    %4532 = vmatprep.subr.mxu0 %v4497
    %4533 = vmatpush1.msra.mxu0 %v4495
    %4534 = vmatprep.subr.mxu0 %v4503
    %4535 = vmatpush1.msra.mxu0 %v4501
    %4536 = vmatprep.subr.mxu0 %v4509
    %4537 = vmatpush1.msra.mxu0 %v4507
    %4538 = vmatprep.subr.mxu0 %v4515
    %4539 = vmatpush1.msra.mxu0 %v4513
    %4540 = vmatprep.subr.mxu0 0.0
    %4541 = vmatpush1.msra.mxu0 0.0
    %4542 = vmatprep.subr.mxu0 0.0
    %4543 = vmatpush1.msra.mxu0 0.0
    %4544 = vmatprep.subr.mxu0 0.0
    %4545 = vmatpush1.msra.mxu0 0.0
    %4546 = vmatprep.subr.mxu0 0.0
    %4547 = vmatpush1.msra.mxu0 0.0
    %4548 = vmatprep.subr.mxu0 0.0
    %4549 = vmatpush1.msra.mxu0 0.0
    %4550 = vmatprep.subr.mxu0 0.0
    %4551 = vmatpush1.msra.mxu0 0.0
    %4552 = vmatprep.subr.mxu0 0.0
    %4553 = vmatpush1.msra.mxu0 0.0
    %4554 = vmatprep.subr.mxu0 0.0
    %4555 = vmatpush1.msra.mxu0 0.0
    %4556 = vmatprep.subr.mxu0 0.0
    %4557 = vmatpush1.msra.mxu0 0.0
    %4558 = vmatprep.subr.mxu0 0.0
    %4559 = vmatpush1.msra.mxu0 0.0
    %4560 = vmatprep.subr.mxu0 0.0
    %4561 = vmatpush1.msra.mxu0 0.0
    %4562 = vmatprep.subr.mxu0 0.0
    %4563 = vmatpush1.msra.mxu0 0.0
    %4564 = vmatprep.subr.mxu0 0.0
    %4565 = vmatpush1.msra.mxu0 0.0
    %4566 = vmatprep.subr.mxu0 0.0
    %4567 = vmatpush1.msra.mxu0 0.0
    %4568 = vmatprep.subr.mxu0 0.0
    %4569 = vmatpush1.msra.mxu0 0.0
    %4570 = vmatprep.subr.mxu0 0.0
    %4571 = vmatpush1.msra.mxu0 0.0
    %4572 = vmatprep.subr.mxu0 0.0
    %4573 = vmatpush1.msra.mxu0 0.0
    %4574 = vmatprep.subr.mxu0 0.0
    %4575 = vmatpush1.msra.mxu0 0.0
    %4576 = vmatprep.subr.mxu0 0.0
    %4577 = vmatpush1.msra.mxu0 0.0
    %4578 = vmatprep.subr.mxu0 0.0
    %4579 = vmatpush1.msra.mxu0 0.0
    %4580 = vmatprep.subr.mxu0 0.0
    %4581 = vmatpush1.msra.mxu0 0.0
    %4582 = vmatprep.subr.mxu0 0.0
    %4583 = vmatpush1.msra.mxu0 0.0
    %4584 = vmatprep.subr.mxu0 0.0
    %4585 = vmatpush1.msra.mxu0 0.0
    %4586 = vmatprep.subr.mxu0 0.0
    %4587 = vmatpush1.msra.mxu0 0.0
    %4588 = vmatprep.subr.mxu0 0.0
    %4589 = vmatpush1.msra.mxu0 0.0
    %4590 = vmatprep.subr.mxu0 0.0
    %4591 = vmatpush1.msra.mxu0 0.0
    %4592 = vmatprep.subr.mxu0 0.0
    %4593 = vmatpush1.msra.mxu0 0.0
    %4594 = vmatprep.mubr.f32.mxu0 0.0
    %4595 = vmatmul.mubr.f32.gmra.mrb[0].mxu0 %v4522
    %v4596 = vpop.f32.mrb[0].mxu0
    %v4597 = vadd.f32 0.0, %v4596
    %v4598 = vpop.f32.mrb[0].mxu0
    %v4599 = vadd.f32 0.0, %v4598
    %4600 = vmatprep.mubr.f32.mxu0 0.0
    %4601 = vmatmul.mubr.f32.gmra.mrb[0].mxu0 %v4525
    %v4602 = vpop.f32.mrb[0].mxu0
    %v4603 = vadd.f32 0.0, %v4602
    %v4604 = vpop.f32.mrb[0].mxu0
    %v4605 = vadd.f32 0.0, %v4604
    %4606 = vmatprep.mubr.f32.mxu0 0.0
    %4607 = vmatmul.mubr.f32.gmra.mrb[0].mxu0 %v4528
    %v4608 = vpop.f32.mrb[0].mxu0
    %v4609 = vadd.f32 0.0, %v4608
    %v4610 = vpop.f32.mrb[0].mxu0
    %v4611 = vadd.f32 0.0, %v4610
    %4612 = vdwg.mxu0
    %v4614 = vlaneseq
    %v4615 = vshrl.u32 %v4614, 7
    %v4616 = vsub.s32 0, %v4615
    %v4617 = vrot.slane %v4365, %v4616
    %v4618 = vlaneseq
    %v4619 = vshrl.u32 %v4618, 7
    %v4620 = vsub.s32 1, %v4619
    %v4621 = vrot.slane %v4365, %v4620
    %v4624 = vadd.f32 %v4617, %v4597
    %v4625 = vadd.f32 %v4621, %v4599
    %v4626 = vadd.f32 %v4617, %v4603
    %v4627 = vadd.f32 %v4621, %v4605
    %v4628 = vadd.f32 %v4617, %v4609
    %v4629 = vadd.f32 %v4621, %v4611
    %s4630 = scalar_lea.vmem %s10, 320
    %v4631 = vld [vmem:[%s4630] sm:$0xff]
    %v4632 = vld [vmem:[%s4630 + $0x8] sm:$0xff]
    %v4633 = vld [vmem:[%s4630 + $0x10] sm:$0xff]
    %v4634 = vld [vmem:[%s4630 + $0x18] sm:$0xff]
    %v4635 = vld [vmem:[%s4630 + $0x20] sm:$0xff]
    %v4636 = vld [vmem:[%s4630 + $0x28] sm:$0xff]
    %v4637 = vld [vmem:[%s4630 + $0x30] sm:$0xff]
    %v4638 = vld [vmem:[%s4630 + $0x38] sm:$0xff]
    %v4639 = vld [vmem:[%s4630 + $0x40] sm:$0xff]
    %v4640 = vld [vmem:[%s4630 + $0x48] sm:$0xff]
    %v4641 = vld [vmem:[%s4630 + $0x50] sm:$0xff]
    %v4642 = vld [vmem:[%s4630 + $0x58] sm:$0xff]
    %v4643 = vld [vmem:[%s4630 + $0x60] sm:$0xff]
    %v4644 = vld [vmem:[%s4630 + $0x68] sm:$0xff]
    %v4645 = vld [vmem:[%s4630 + $0x70] sm:$0xff]
    %v4646 = vld [vmem:[%s4630 + $0x78] sm:$0xff]
    %v4647 = vld [vmem:[%s4630 + $0x80] sm:$0xff]
    %v4648 = vld [vmem:[%s4630 + $0x88] sm:$0xff]
    %v4649 = vld [vmem:[%s4630 + $0x90] sm:$0xff]
    %v4650 = vld [vmem:[%s4630 + $0x98] sm:$0xff]
    %v4651 = vld [vmem:[%s4630 + $0xa0] sm:$0xff]
    %v4652 = vld [vmem:[%s4630 + $0xa8] sm:$0xff]
    %v4653 = vld [vmem:[%s4630 + $0xb0] sm:$0xff]
    %v4654 = vld [vmem:[%s4630 + $0xb8] sm:$0xff]
    %v4655 = vld [vmem:[%s4630 + $0xc0] sm:$0xff]
    %v4656 = vld [vmem:[%s4630 + $0xc8] sm:$0xff]
    %v4657 = vld [vmem:[%s4630 + $0xd0] sm:$0xff]
    %v4658 = vld [vmem:[%s4630 + $0xd8] sm:$0xff]
    %v4659 = vld [vmem:[%s4630 + $0xe0] sm:$0xff]
    %v4660 = vld [vmem:[%s4630 + $0xe8] sm:$0xff]
    %v4661 = vld [vmem:[%s4630 + $0xf0] sm:$0xff]
    %v4662 = vld [vmem:[%s4630 + $0xf8] sm:$0xff]
    %v4663 = vld [vmem:[%s4630 + $0x100] sm:$0xff]
    %v4664 = vld [vmem:[%s4630 + $0x108] sm:$0xff]
    %v4665 = vld [vmem:[%s4630 + $0x110] sm:$0xff]
    %v4666 = vld [vmem:[%s4630 + $0x118] sm:$0xff]
    %v4667 = vld [vmem:[%s4630 + $0x120] sm:$0xff]
    %v4668 = vld [vmem:[%s4630 + $0x128] sm:$0xff]
    %v4669 = vld [vmem:[%s4630 + $0x130] sm:$0xff]
    %v4670 = vld [vmem:[%s4630 + $0x138] sm:$0xff]
    %4671 = vmatprep.subr.mxu0 %v4632
    %4672 = vmatpush1.msra.mxu0 %v4631
    %4673 = vmatprep.subr.mxu0 %v4634
    %4674 = vmatpush1.msra.mxu0 %v4633
    %4675 = vmatprep.subr.mxu0 %v4636
    %4676 = vmatpush1.msra.mxu0 %v4635
    %4677 = vmatprep.subr.mxu0 %v4638
    %4678 = vmatpush1.msra.mxu0 %v4637
    %4679 = vmatprep.subr.mxu0 %v4640
    %4680 = vmatpush1.msra.mxu0 %v4639
    %4681 = vmatprep.subr.mxu0 %v4642
    %4682 = vmatpush1.msra.mxu0 %v4641
    %4683 = vmatprep.subr.mxu0 %v4644
    %4684 = vmatpush1.msra.mxu0 %v4643
    %4685 = vmatprep.subr.mxu0 %v4646
    %4686 = vmatpush1.msra.mxu0 %v4645
    %4687 = vmatprep.subr.mxu0 %v4648
    %4688 = vmatpush1.msra.mxu0 %v4647
    %4689 = vmatprep.subr.mxu0 %v4650
    %4690 = vmatpush1.msra.mxu0 %v4649
    %4691 = vmatprep.subr.mxu0 %v4652
    %4692 = vmatpush1.msra.mxu0 %v4651
    %4693 = vmatprep.subr.mxu0 %v4654
    %4694 = vmatpush1.msra.mxu0 %v4653
    %4695 = vmatprep.subr.mxu0 %v4656
    %4696 = vmatpush1.msra.mxu0 %v4655
    %4697 = vmatprep.subr.mxu0 %v4658
    %4698 = vmatpush1.msra.mxu0 %v4657
    %4699 = vmatprep.subr.mxu0 %v4660
    %4700 = vmatpush1.msra.mxu0 %v4659
    %4701 = vmatprep.subr.mxu0 %v4662
    %4702 = vmatpush1.msra.mxu0 %v4661
    %4703 = vmatprep.subr.mxu0 %v4664
    %4704 = vmatpush1.msra.mxu0 %v4663
    %4705 = vmatprep.subr.mxu0 %v4666
    %4706 = vmatpush1.msra.mxu0 %v4665
    %4707 = vmatprep.subr.mxu0 %v4668
    %4708 = vmatpush1.msra.mxu0 %v4667
    %4709 = vmatprep.subr.mxu0 %v4670
    %4710 = vmatpush1.msra.mxu0 %v4669
    %4711 = vmatprep.subr.mxu0 0.0
    %4712 = vmatpush1.msra.mxu0 0.0
    %4713 = vmatprep.subr.mxu0 0.0
    %4714 = vmatpush1.msra.mxu0 0.0
    %4715 = vmatprep.subr.mxu0 0.0
    %4716 = vmatpush1.msra.mxu0 0.0
    %4717 = vmatprep.subr.mxu0 0.0
    %4718 = vmatpush1.msra.mxu0 0.0
    %4719 = vmatprep.subr.mxu0 0.0
    %4720 = vmatpush1.msra.mxu0 0.0
    %4721 = vmatprep.subr.mxu0 0.0
    %4722 = vmatpush1.msra.mxu0 0.0
    %4723 = vmatprep.subr.mxu0 0.0
    %4724 = vmatpush1.msra.mxu0 0.0
    %4725 = vmatprep.subr.mxu0 0.0
    %4726 = vmatpush1.msra.mxu0 0.0
    %4727 = vmatprep.subr.mxu0 0.0
    %4728 = vmatpush1.msra.mxu0 0.0
    %4729 = vmatprep.subr.mxu0 0.0
    %4730 = vmatpush1.msra.mxu0 0.0
    %4731 = vmatprep.subr.mxu0 0.0
    %4732 = vmatpush1.msra.mxu0 0.0
    %4733 = vmatprep.subr.mxu0 0.0
    %4734 = vmatpush1.msra.mxu0 0.0
    %4735 = vmatprep.mubr.f32.mxu0 %v4408
    %4736 = vmatmul.mubr.f32.gmra.mrb[0].mxu0 %v4355
    %v4737 = vpop.f32.mrb[0].mxu0
    %v4738 = vadd.f32 0.0, %v4737
    %v4739 = vpop.f32.mrb[0].mxu0
    %v4740 = vadd.f32 0.0, %v4739
    %4741 = vmatprep.mubr.f32.mxu0 %v4411
    %4742 = vmatmul.mubr.f32.gmra.mrb[0].mxu0 %v4357
    %v4743 = vpop.f32.mrb[0].mxu0
    %v4744 = vadd.f32 0.0, %v4743
    %v4745 = vpop.f32.mrb[0].mxu0
    %v4746 = vadd.f32 0.0, %v4745
    %4747 = vmatprep.mubr.f32.mxu0 %v4414
    %4748 = vmatmul.mubr.f32.gmra.mrb[0].mxu0 %v4359
    %v4749 = vpop.f32.mrb[0].mxu0
    %v4750 = vadd.f32 0.0, %v4749
    %v4751 = vpop.f32.mrb[0].mxu0
    %v4752 = vadd.f32 0.0, %v4751
    %4753 = vmatprep.mubr.f32.mxu0 %v4417
    %4754 = vmatmul.mubr.f32.gmra.mrb[0].mxu0 %v4361
    %v4755 = vpop.f32.mrb[0].mxu0
    %v4756 = vadd.f32 0.0, %v4755
    %v4757 = vpop.f32.mrb[0].mxu0
    %v4758 = vadd.f32 0.0, %v4757
    %4759 = vmatprep.mubr.f32.mxu0 %v4420
    %4760 = vmatmul.mubr.f32.gmra.mrb[0].mxu0 %v4363
    %v4761 = vpop.f32.mrb[0].mxu0
    %v4762 = vadd.f32 0.0, %v4761
    %v4763 = vpop.f32.mrb[0].mxu0
    %v4764 = vadd.f32 0.0, %v4763
    %4765 = vdwg.mxu0
    %s4766 = scalar_lea.vmem %s11, 24
    %v4767 = vld [vmem:[%s4766] sm:$0xff]
    %v4768 = vld [vmem:[%s4766 + $0x8] sm:$0xff]
    %v4769 = vld [vmem:[%s4766 + $0x10] sm:$0xff]
    %v4771 = vsel %vm4520, %v4767, 0
    %v4774 = vsel %vm4520, %v4768, 0
    %v4777 = vsel %vm4520, %v4769, 0
    %4779 = vmatprep.subr.mxu0 %v4740
    %4780 = vmatpush1.msra.mxu0 %v4738
    %4781 = vmatprep.subr.mxu0 %v4746
    %4782 = vmatpush1.msra.mxu0 %v4744
    %4783 = vmatprep.subr.mxu0 %v4752
    %4784 = vmatpush1.msra.mxu0 %v4750
    %4785 = vmatprep.subr.mxu0 %v4758
    %4786 = vmatpush1.msra.mxu0 %v4756
    %4787 = vmatprep.subr.mxu0 %v4764
    %4788 = vmatpush1.msra.mxu0 %v4762
    %4789 = vmatprep.subr.mxu0 0.0
    %4790 = vmatpush1.msra.mxu0 0.0
    %4791 = vmatprep.subr.mxu0 0.0
    %4792 = vmatpush1.msra.mxu0 0.0
    %4793 = vmatprep.subr.mxu0 0.0
    %4794 = vmatpush1.msra.mxu0 0.0
    %4795 = vmatprep.subr.mxu0 0.0
    %4796 = vmatpush1.msra.mxu0 0.0
    %4797 = vmatprep.subr.mxu0 0.0
    %4798 = vmatpush1.msra.mxu0 0.0
    %4799 = vmatprep.subr.mxu0 0.0
    %4800 = vmatpush1.msra.mxu0 0.0
    %4801 = vmatprep.subr.mxu0 0.0
    %4802 = vmatpush1.msra.mxu0 0.0
    %4803 = vmatprep.subr.mxu0 0.0
    %4804 = vmatpush1.msra.mxu0 0.0
    %4805 = vmatprep.subr.mxu0 0.0
    %4806 = vmatpush1.msra.mxu0 0.0
    %4807 = vmatprep.subr.mxu0 0.0
    %4808 = vmatpush1.msra.mxu0 0.0
    %4809 = vmatprep.subr.mxu0 0.0
    %4810 = vmatpush1.msra.mxu0 0.0
    %4811 = vmatprep.subr.mxu0 0.0
    %4812 = vmatpush1.msra.mxu0 0.0
    %4813 = vmatprep.subr.mxu0 0.0
    %4814 = vmatpush1.msra.mxu0 0.0
    %4815 = vmatprep.subr.mxu0 0.0
    %4816 = vmatpush1.msra.mxu0 0.0
    %4817 = vmatprep.subr.mxu0 0.0
    %4818 = vmatpush1.msra.mxu0 0.0
    %4819 = vmatprep.subr.mxu0 0.0
    %4820 = vmatpush1.msra.mxu0 0.0
    %4821 = vmatprep.subr.mxu0 0.0
    %4822 = vmatpush1.msra.mxu0 0.0
    %4823 = vmatprep.subr.mxu0 0.0
    %4824 = vmatpush1.msra.mxu0 0.0
    %4825 = vmatprep.subr.mxu0 0.0
    %4826 = vmatpush1.msra.mxu0 0.0
    %4827 = vmatprep.subr.mxu0 0.0
    %4828 = vmatpush1.msra.mxu0 0.0
    %4829 = vmatprep.subr.mxu0 0.0
    %4830 = vmatpush1.msra.mxu0 0.0
    %4831 = vmatprep.subr.mxu0 0.0
    %4832 = vmatpush1.msra.mxu0 0.0
    %4833 = vmatprep.subr.mxu0 0.0
    %4834 = vmatpush1.msra.mxu0 0.0
    %4835 = vmatprep.subr.mxu0 0.0
    %4836 = vmatpush1.msra.mxu0 0.0
    %4837 = vmatprep.subr.mxu0 0.0
    %4838 = vmatpush1.msra.mxu0 0.0
    %4839 = vmatprep.subr.mxu0 0.0
    %4840 = vmatpush1.msra.mxu0 0.0
    %4841 = vmatprep.subr.mxu0 0.0
    %4842 = vmatpush1.msra.mxu0 0.0
    %4843 = vmatprep.mubr.f32.mxu0 0.0
    %4844 = vmatmul.mubr.f32.gmra.mrb[0].mxu0 %v4771
    %v4845 = vpop.f32.mrb[0].mxu0
    %v4846 = vadd.f32 0.0, %v4845
    %v4847 = vpop.f32.mrb[0].mxu0
    %v4848 = vadd.f32 0.0, %v4847
    %4849 = vmatprep.mubr.f32.mxu0 0.0
    %4850 = vmatmul.mubr.f32.gmra.mrb[0].mxu0 %v4774
    %v4851 = vpop.f32.mrb[0].mxu0
    %v4852 = vadd.f32 0.0, %v4851
    %v4853 = vpop.f32.mrb[0].mxu0
    %v4854 = vadd.f32 0.0, %v4853
    %4855 = vmatprep.mubr.f32.mxu0 0.0
    %4856 = vmatmul.mubr.f32.gmra.mrb[0].mxu0 %v4777
    %v4857 = vpop.f32.mrb[0].mxu0
    %v4858 = vadd.f32 0.0, %v4857
    %v4859 = vpop.f32.mrb[0].mxu0
    %v4860 = vadd.f32 0.0, %v4859
    %4861 = vdwg.mxu0
    %v4862 = vadd.f32 %v4624, %v4846
    %v4863 = vadd.f32 %v4625, %v4848
    %v4864 = vadd.f32 %v4626, %v4852
    %v4865 = vadd.f32 %v4627, %v4854
    %v4866 = vadd.f32 %v4628, %v4858
    %v4867 = vadd.f32 %v4629, %v4860
    %s4868 = scalar_lea.vmem %s10, 640
    %v4869 = vld [vmem:[%s4868] sm:$0xff]
    %v4870 = vld [vmem:[%s4868 + $0x8] sm:$0xff]
    %v4871 = vld [vmem:[%s4868 + $0x10] sm:$0xff]
    %v4872 = vld [vmem:[%s4868 + $0x18] sm:$0xff]
    %v4873 = vld [vmem:[%s4868 + $0x20] sm:$0xff]
    %v4874 = vld [vmem:[%s4868 + $0x28] sm:$0xff]
    %v4875 = vld [vmem:[%s4868 + $0x30] sm:$0xff]
    %v4876 = vld [vmem:[%s4868 + $0x38] sm:$0xff]
    %v4877 = vld [vmem:[%s4868 + $0x40] sm:$0xff]
    %v4878 = vld [vmem:[%s4868 + $0x48] sm:$0xff]
    %v4879 = vld [vmem:[%s4868 + $0x50] sm:$0xff]
    %v4880 = vld [vmem:[%s4868 + $0x58] sm:$0xff]
    %v4881 = vld [vmem:[%s4868 + $0x60] sm:$0xff]
    %v4882 = vld [vmem:[%s4868 + $0x68] sm:$0xff]
    %v4883 = vld [vmem:[%s4868 + $0x70] sm:$0xff]
    %v4884 = vld [vmem:[%s4868 + $0x78] sm:$0xff]
    %v4885 = vld [vmem:[%s4868 + $0x80] sm:$0xff]
    %v4886 = vld [vmem:[%s4868 + $0x88] sm:$0xff]
    %v4887 = vld [vmem:[%s4868 + $0x90] sm:$0xff]
    %v4888 = vld [vmem:[%s4868 + $0x98] sm:$0xff]
    %v4889 = vld [vmem:[%s4868 + $0xa0] sm:$0xff]
    %v4890 = vld [vmem:[%s4868 + $0xa8] sm:$0xff]
    %v4891 = vld [vmem:[%s4868 + $0xb0] sm:$0xff]
    %v4892 = vld [vmem:[%s4868 + $0xb8] sm:$0xff]
    %v4893 = vld [vmem:[%s4868 + $0xc0] sm:$0xff]
    %v4894 = vld [vmem:[%s4868 + $0xc8] sm:$0xff]
    %v4895 = vld [vmem:[%s4868 + $0xd0] sm:$0xff]
    %v4896 = vld [vmem:[%s4868 + $0xd8] sm:$0xff]
    %v4897 = vld [vmem:[%s4868 + $0xe0] sm:$0xff]
    %v4898 = vld [vmem:[%s4868 + $0xe8] sm:$0xff]
    %v4899 = vld [vmem:[%s4868 + $0xf0] sm:$0xff]
    %v4900 = vld [vmem:[%s4868 + $0xf8] sm:$0xff]
    %v4901 = vld [vmem:[%s4868 + $0x100] sm:$0xff]
    %v4902 = vld [vmem:[%s4868 + $0x108] sm:$0xff]
    %v4903 = vld [vmem:[%s4868 + $0x110] sm:$0xff]
    %v4904 = vld [vmem:[%s4868 + $0x118] sm:$0xff]
    %v4905 = vld [vmem:[%s4868 + $0x120] sm:$0xff]
    %v4906 = vld [vmem:[%s4868 + $0x128] sm:$0xff]
    %v4907 = vld [vmem:[%s4868 + $0x130] sm:$0xff]
    %v4908 = vld [vmem:[%s4868 + $0x138] sm:$0xff]
    %4909 = vmatprep.subr.mxu0 %v4870
    %4910 = vmatpush1.msra.mxu0 %v4869
    %4911 = vmatprep.subr.mxu0 %v4872
    %4912 = vmatpush1.msra.mxu0 %v4871
    %4913 = vmatprep.subr.mxu0 %v4874
    %4914 = vmatpush1.msra.mxu0 %v4873
    %4915 = vmatprep.subr.mxu0 %v4876
    %4916 = vmatpush1.msra.mxu0 %v4875
    %4917 = vmatprep.subr.mxu0 %v4878
    %4918 = vmatpush1.msra.mxu0 %v4877
    %4919 = vmatprep.subr.mxu0 %v4880
    %4920 = vmatpush1.msra.mxu0 %v4879
    %4921 = vmatprep.subr.mxu0 %v4882
    %4922 = vmatpush1.msra.mxu0 %v4881
    %4923 = vmatprep.subr.mxu0 %v4884
    %4924 = vmatpush1.msra.mxu0 %v4883
    %4925 = vmatprep.subr.mxu0 %v4886
    %4926 = vmatpush1.msra.mxu0 %v4885
    %4927 = vmatprep.subr.mxu0 %v4888
    %4928 = vmatpush1.msra.mxu0 %v4887
    %4929 = vmatprep.subr.mxu0 %v4890
    %4930 = vmatpush1.msra.mxu0 %v4889
    %4931 = vmatprep.subr.mxu0 %v4892
    %4932 = vmatpush1.msra.mxu0 %v4891
    %4933 = vmatprep.subr.mxu0 %v4894
    %4934 = vmatpush1.msra.mxu0 %v4893
    %4935 = vmatprep.subr.mxu0 %v4896
    %4936 = vmatpush1.msra.mxu0 %v4895
    %4937 = vmatprep.subr.mxu0 %v4898
    %4938 = vmatpush1.msra.mxu0 %v4897
    %4939 = vmatprep.subr.mxu0 %v4900
    %4940 = vmatpush1.msra.mxu0 %v4899
    %4941 = vmatprep.subr.mxu0 %v4902
    %4942 = vmatpush1.msra.mxu0 %v4901
    %4943 = vmatprep.subr.mxu0 %v4904
    %4944 = vmatpush1.msra.mxu0 %v4903
    %4945 = vmatprep.subr.mxu0 %v4906
    %4946 = vmatpush1.msra.mxu0 %v4905
    %4947 = vmatprep.subr.mxu0 %v4908
    %4948 = vmatpush1.msra.mxu0 %v4907
    %4949 = vmatprep.subr.mxu0 0.0
    %4950 = vmatpush1.msra.mxu0 0.0
    %4951 = vmatprep.subr.mxu0 0.0
    %4952 = vmatpush1.msra.mxu0 0.0
    %4953 = vmatprep.subr.mxu0 0.0
    %4954 = vmatpush1.msra.mxu0 0.0
    %4955 = vmatprep.subr.mxu0 0.0
    %4956 = vmatpush1.msra.mxu0 0.0
    %4957 = vmatprep.subr.mxu0 0.0
    %4958 = vmatpush1.msra.mxu0 0.0
    %4959 = vmatprep.subr.mxu0 0.0
    %4960 = vmatpush1.msra.mxu0 0.0
    %4961 = vmatprep.subr.mxu0 0.0
    %4962 = vmatpush1.msra.mxu0 0.0
    %4963 = vmatprep.subr.mxu0 0.0
    %4964 = vmatpush1.msra.mxu0 0.0
    %4965 = vmatprep.subr.mxu0 0.0
    %4966 = vmatpush1.msra.mxu0 0.0
    %4967 = vmatprep.subr.mxu0 0.0
    %4968 = vmatpush1.msra.mxu0 0.0
    %4969 = vmatprep.subr.mxu0 0.0
    %4970 = vmatpush1.msra.mxu0 0.0
    %4971 = vmatprep.subr.mxu0 0.0
    %4972 = vmatpush1.msra.mxu0 0.0
    %4973 = vmatprep.mubr.f32.mxu0 %v4408
    %4974 = vmatmul.mubr.f32.gmra.mrb[0].mxu0 %v4355
    %v4975 = vpop.f32.mrb[0].mxu0
    %v4976 = vadd.f32 0.0, %v4975
    %v4977 = vpop.f32.mrb[0].mxu0
    %v4978 = vadd.f32 0.0, %v4977
    %4979 = vmatprep.mubr.f32.mxu0 %v4411
    %4980 = vmatmul.mubr.f32.gmra.mrb[0].mxu0 %v4357
    %v4981 = vpop.f32.mrb[0].mxu0
    %v4982 = vadd.f32 0.0, %v4981
    %v4983 = vpop.f32.mrb[0].mxu0
    %v4984 = vadd.f32 0.0, %v4983
    %4985 = vmatprep.mubr.f32.mxu0 %v4414
    %4986 = vmatmul.mubr.f32.gmra.mrb[0].mxu0 %v4359
    %v4987 = vpop.f32.mrb[0].mxu0
    %v4988 = vadd.f32 0.0, %v4987
    %v4989 = vpop.f32.mrb[0].mxu0
    %v4990 = vadd.f32 0.0, %v4989
    %4991 = vmatprep.mubr.f32.mxu0 %v4417
    %4992 = vmatmul.mubr.f32.gmra.mrb[0].mxu0 %v4361
    %v4993 = vpop.f32.mrb[0].mxu0
    %v4994 = vadd.f32 0.0, %v4993
    %v4995 = vpop.f32.mrb[0].mxu0
    %v4996 = vadd.f32 0.0, %v4995
    %4997 = vmatprep.mubr.f32.mxu0 %v4420
    %4998 = vmatmul.mubr.f32.gmra.mrb[0].mxu0 %v4363
    %v4999 = vpop.f32.mrb[0].mxu0
    %v5000 = vadd.f32 0.0, %v4999
    %v5001 = vpop.f32.mrb[0].mxu0
    %v5002 = vadd.f32 0.0, %v5001
    %5003 = vdwg.mxu0
    %s5004 = scalar_lea.vmem %s11, 48
    %v5005 = vld [vmem:[%s5004] sm:$0xff]
    %v5006 = vld [vmem:[%s5004 + $0x8] sm:$0xff]
    %v5007 = vld [vmem:[%s5004 + $0x10] sm:$0xff]
    %v5009 = vsel %vm4520, %v5005, 0
    %v5012 = vsel %vm4520, %v5006, 0
    %v5015 = vsel %vm4520, %v5007, 0
    %5017 = vmatprep.subr.mxu0 %v4978
    %5018 = vmatpush1.msra.mxu0 %v4976
    %5019 = vmatprep.subr.mxu0 %v4984
    %5020 = vmatpush1.msra.mxu0 %v4982
    %5021 = vmatprep.subr.mxu0 %v4990
    %5022 = vmatpush1.msra.mxu0 %v4988
    %5023 = vmatprep.subr.mxu0 %v4996
    %5024 = vmatpush1.msra.mxu0 %v4994
    %5025 = vmatprep.subr.mxu0 %v5002
    %5026 = vmatpush1.msra.mxu0 %v5000
    %5027 = vmatprep.subr.mxu0 0.0
    %5028 = vmatpush1.msra.mxu0 0.0
    %5029 = vmatprep.subr.mxu0 0.0
    %5030 = vmatpush1.msra.mxu0 0.0
    %5031 = vmatprep.subr.mxu0 0.0
    %5032 = vmatpush1.msra.mxu0 0.0
    %5033 = vmatprep.subr.mxu0 0.0
    %5034 = vmatpush1.msra.mxu0 0.0
    %5035 = vmatprep.subr.mxu0 0.0
    %5036 = vmatpush1.msra.mxu0 0.0
    %5037 = vmatprep.subr.mxu0 0.0
    %5038 = vmatpush1.msra.mxu0 0.0
    %5039 = vmatprep.subr.mxu0 0.0
    %5040 = vmatpush1.msra.mxu0 0.0
    %5041 = vmatprep.subr.mxu0 0.0
    %5042 = vmatpush1.msra.mxu0 0.0
    %5043 = vmatprep.subr.mxu0 0.0
    %5044 = vmatpush1.msra.mxu0 0.0
    %5045 = vmatprep.subr.mxu0 0.0
    %5046 = vmatpush1.msra.mxu0 0.0
    %5047 = vmatprep.subr.mxu0 0.0
    %5048 = vmatpush1.msra.mxu0 0.0
    %5049 = vmatprep.subr.mxu0 0.0
    %5050 = vmatpush1.msra.mxu0 0.0
    %5051 = vmatprep.subr.mxu0 0.0
    %5052 = vmatpush1.msra.mxu0 0.0
    %5053 = vmatprep.subr.mxu0 0.0
    %5054 = vmatpush1.msra.mxu0 0.0
    %5055 = vmatprep.subr.mxu0 0.0
    %5056 = vmatpush1.msra.mxu0 0.0
    %5057 = vmatprep.subr.mxu0 0.0
    %5058 = vmatpush1.msra.mxu0 0.0
    %5059 = vmatprep.subr.mxu0 0.0
    %5060 = vmatpush1.msra.mxu0 0.0
    %5061 = vmatprep.subr.mxu0 0.0
    %5062 = vmatpush1.msra.mxu0 0.0
    %5063 = vmatprep.subr.mxu0 0.0
    %5064 = vmatpush1.msra.mxu0 0.0
    %5065 = vmatprep.subr.mxu0 0.0
    %5066 = vmatpush1.msra.mxu0 0.0
    %5067 = vmatprep.subr.mxu0 0.0
    %5068 = vmatpush1.msra.mxu0 0.0
    %5069 = vmatprep.subr.mxu0 0.0
    %5070 = vmatpush1.msra.mxu0 0.0
    %5071 = vmatprep.subr.mxu0 0.0
    %5072 = vmatpush1.msra.mxu0 0.0
    %5073 = vmatprep.subr.mxu0 0.0
    %5074 = vmatpush1.msra.mxu0 0.0
    %5075 = vmatprep.subr.mxu0 0.0
    %5076 = vmatpush1.msra.mxu0 0.0
    %5077 = vmatprep.subr.mxu0 0.0
    %5078 = vmatpush1.msra.mxu0 0.0
    %5079 = vmatprep.subr.mxu0 0.0
    %5080 = vmatpush1.msra.mxu0 0.0
    %5081 = vmatprep.mubr.f32.mxu0 0.0
    %5082 = vmatmul.mubr.f32.gmra.mrb[0].mxu0 %v5009
    %v5083 = vpop.f32.mrb[0].mxu0
    %v5084 = vadd.f32 0.0, %v5083
    %v5085 = vpop.f32.mrb[0].mxu0
    %v5086 = vadd.f32 0.0, %v5085
    %5087 = vmatprep.mubr.f32.mxu0 0.0
    %5088 = vmatmul.mubr.f32.gmra.mrb[0].mxu0 %v5012
    %v5089 = vpop.f32.mrb[0].mxu0
    %v5090 = vadd.f32 0.0, %v5089
    %v5091 = vpop.f32.mrb[0].mxu0
    %v5092 = vadd.f32 0.0, %v5091
    %5093 = vmatprep.mubr.f32.mxu0 0.0
    %5094 = vmatmul.mubr.f32.gmra.mrb[0].mxu0 %v5015
    %v5095 = vpop.f32.mrb[0].mxu0
    %v5096 = vadd.f32 0.0, %v5095
    %v5097 = vpop.f32.mrb[0].mxu0
    %v5098 = vadd.f32 0.0, %v5097
    %5099 = vdwg.mxu0
    %v5100 = vadd.f32 %v4862, %v5084
    %v5101 = vadd.f32 %v4863, %v5086
    %v5102 = vadd.f32 %v4864, %v5090
    %v5103 = vadd.f32 %v4865, %v5092
    %v5104 = vadd.f32 %v4866, %v5096
    %v5105 = vadd.f32 %v4867, %v5098
    %v5106 = vld [vmem:[%s15] sm:$0x1]
    %v5107 = vld [vmem:[%s13] sm:$0xff]
    %v5108 = vld [vmem:[%s13 + $0x8] sm:$0xff]
    %v5109 = vld [vmem:[%s13 + $0x10] sm:$0xff]
    %v5110 = vld [vmem:[%s13 + $0x18] sm:$0xff]
    %v5111 = vld [vmem:[%s13 + $0x20] sm:$0xff]
    %v5112 = vld [vmem:[%s13 + $0x28] sm:$0xff]
    %v5113 = vld [vmem:[%s13 + $0x30] sm:$0xff]
    %v5114 = vld [vmem:[%s13 + $0x38] sm:$0xff]
    %v5115 = vld [vmem:[%s13 + $0x40] sm:$0xff]
    %v5116 = vld [vmem:[%s13 + $0x48] sm:$0xff]
    %v5117 = vld [vmem:[%s13 + $0x50] sm:$0xff]
    %v5118 = vld [vmem:[%s13 + $0x58] sm:$0xff]
    %v5119 = vld [vmem:[%s13 + $0x60] sm:$0xff]
    %v5120 = vld [vmem:[%s13 + $0x68] sm:$0xff]
    %v5121 = vld [vmem:[%s13 + $0x70] sm:$0xff]
    %v5122 = vld [vmem:[%s13 + $0x78] sm:$0xff]
    %v5123 = vld [vmem:[%s13 + $0x80] sm:$0xff]
    %v5124 = vld [vmem:[%s13 + $0x88] sm:$0xff]
    %v5125 = vld [vmem:[%s13 + $0x90] sm:$0xff]
    %v5126 = vld [vmem:[%s13 + $0x98] sm:$0xff]
    %v5127 = vld [vmem:[%s13 + $0xa0] sm:$0xff]
    %v5128 = vld [vmem:[%s13 + $0xa8] sm:$0xff]
    %v5129 = vld [vmem:[%s13 + $0xb0] sm:$0xff]
    %v5130 = vld [vmem:[%s13 + $0xb8] sm:$0xff]
    %v5132 = vsel %vm3431, %v5101, 0
    %v5135 = vsel %vm3431, %v5103, 0
    %v5138 = vsel %vm3431, %v5105, 0
    %5140 = vmatprep.subr.mxu0 0.0
    %5141 = vmatpush1.msra.mxu0 %v5107
    %5142 = vmatprep.subr.mxu0 0.0
    %5143 = vmatpush1.msra.mxu0 %v5108
    %5144 = vmatprep.subr.mxu0 0.0
    %5145 = vmatpush1.msra.mxu0 %v5109
    %5146 = vmatprep.subr.mxu0 0.0
    %5147 = vmatpush1.msra.mxu0 %v5110
    %5148 = vmatprep.subr.mxu0 0.0
    %5149 = vmatpush1.msra.mxu0 %v5111
    %5150 = vmatprep.subr.mxu0 0.0
    %5151 = vmatpush1.msra.mxu0 %v5112
    %5152 = vmatprep.subr.mxu0 0.0
    %5153 = vmatpush1.msra.mxu0 %v5113
    %5154 = vmatprep.subr.mxu0 0.0
    %5155 = vmatpush1.msra.mxu0 %v5114
    %5156 = vmatprep.subr.mxu0 0.0
    %5157 = vmatpush1.msra.mxu0 %v5115
    %5158 = vmatprep.subr.mxu0 0.0
    %5159 = vmatpush1.msra.mxu0 %v5116
    %5160 = vmatprep.subr.mxu0 0.0
    %5161 = vmatpush1.msra.mxu0 %v5117
    %5162 = vmatprep.subr.mxu0 0.0
    %5163 = vmatpush1.msra.mxu0 %v5118
    %5164 = vmatprep.subr.mxu0 0.0
    %5165 = vmatpush1.msra.mxu0 %v5119
    %5166 = vmatprep.subr.mxu0 0.0
    %5167 = vmatpush1.msra.mxu0 %v5120
    %5168 = vmatprep.subr.mxu0 0.0
    %5169 = vmatpush1.msra.mxu0 %v5121
    %5170 = vmatprep.subr.mxu0 0.0
    %5171 = vmatpush1.msra.mxu0 %v5122
    %5172 = vmatprep.subr.mxu0 0.0
    %5173 = vmatpush1.msra.mxu0 %v5123
    %5174 = vmatprep.subr.mxu0 0.0
    %5175 = vmatpush1.msra.mxu0 %v5124
    %5176 = vmatprep.subr.mxu0 0.0
    %5177 = vmatpush1.msra.mxu0 %v5125
    %5178 = vmatprep.subr.mxu0 0.0
    %5179 = vmatpush1.msra.mxu0 %v5126
    %5180 = vmatprep.subr.mxu0 0.0
    %5181 = vmatpush1.msra.mxu0 %v5127
    %5182 = vmatprep.subr.mxu0 0.0
    %5183 = vmatpush1.msra.mxu0 %v5128
    %5184 = vmatprep.subr.mxu0 0.0
    %5185 = vmatpush1.msra.mxu0 %v5129
    %5186 = vmatprep.subr.mxu0 0.0
    %5187 = vmatpush1.msra.mxu0 %v5130
    %5188 = vmatprep.subr.mxu0 0.0
    %5189 = vmatpush1.msra.mxu0 0.0
    %5190 = vmatprep.subr.mxu0 0.0
    %5191 = vmatpush1.msra.mxu0 0.0
    %5192 = vmatprep.subr.mxu0 0.0
    %5193 = vmatpush1.msra.mxu0 0.0
    %5194 = vmatprep.subr.mxu0 0.0
    %5195 = vmatpush1.msra.mxu0 0.0
    %5196 = vmatprep.subr.mxu0 0.0
    %5197 = vmatpush1.msra.mxu0 0.0
    %5198 = vmatprep.subr.mxu0 0.0
    %5199 = vmatpush1.msra.mxu0 0.0
    %5200 = vmatprep.subr.mxu0 0.0
    %5201 = vmatpush1.msra.mxu0 0.0
    %5202 = vmatprep.subr.mxu0 0.0
    %5203 = vmatpush1.msra.mxu0 0.0
    %5204 = vmatprep.mubr.f32.mxu0 %v5132
    %5205 = vmatmul.mubr.f32.gmra.mrb[0].mxu0 %v5100
    %v5206 = vpop.f32.mrb[0].mxu0
    %v5207 = vadd.f32 0.0, %v5206
    %v5208 = vpop.f32.mrb[0].mxu0
    %5209 = vmatprep.mubr.f32.mxu0 %v5135
    %5210 = vmatmul.mubr.f32.gmra.mrb[0].mxu0 %v5102
    %v5211 = vpop.f32.mrb[0].mxu0
    %v5212 = vadd.f32 0.0, %v5211
    %v5213 = vpop.f32.mrb[0].mxu0
    %5214 = vmatprep.mubr.f32.mxu0 %v5138
    %5215 = vmatmul.mubr.f32.gmra.mrb[0].mxu0 %v5104
    %v5216 = vpop.f32.mrb[0].mxu0
    %v5217 = vadd.f32 0.0, %v5216
    %v5218 = vpop.f32.mrb[0].mxu0
    %5219 = vdwg.mxu0
    %v5220 = vld [vmem:[%s14] sm:$0xff]
    %vm5221 = vcmask 195584
    %v5223 = vsel %vm5221, %v5220, 0
    %5225 = vmatprep.subr.mxu0 0.0
    %5226 = vmatpush1.msra.mxu0 %v5207
    %5227 = vmatprep.subr.mxu0 0.0
    %5228 = vmatpush1.msra.mxu0 %v5212
    %5229 = vmatprep.subr.mxu0 0.0
    %5230 = vmatpush1.msra.mxu0 %v5217
    %5231 = vmatprep.subr.mxu0 0.0
    %5232 = vmatpush1.msra.mxu0 0.0
    %5233 = vmatprep.subr.mxu0 0.0
    %5234 = vmatpush1.msra.mxu0 0.0
    %5235 = vmatprep.subr.mxu0 0.0
    %5236 = vmatpush1.msra.mxu0 0.0
    %5237 = vmatprep.subr.mxu0 0.0
    %5238 = vmatpush1.msra.mxu0 0.0
    %5239 = vmatprep.subr.mxu0 0.0
    %5240 = vmatpush1.msra.mxu0 0.0
    %5241 = vmatprep.subr.mxu0 0.0
    %5242 = vmatpush1.msra.mxu0 0.0
    %5243 = vmatprep.subr.mxu0 0.0
    %5244 = vmatpush1.msra.mxu0 0.0
    %5245 = vmatprep.subr.mxu0 0.0
    %5246 = vmatpush1.msra.mxu0 0.0
    %5247 = vmatprep.subr.mxu0 0.0
    %5248 = vmatpush1.msra.mxu0 0.0
    %5249 = vmatprep.subr.mxu0 0.0
    %5250 = vmatpush1.msra.mxu0 0.0
    %5251 = vmatprep.subr.mxu0 0.0
    %5252 = vmatpush1.msra.mxu0 0.0
    %5253 = vmatprep.subr.mxu0 0.0
    %5254 = vmatpush1.msra.mxu0 0.0
    %5255 = vmatprep.subr.mxu0 0.0
    %5256 = vmatpush1.msra.mxu0 0.0
    %5257 = vmatprep.subr.mxu0 0.0
    %5258 = vmatpush1.msra.mxu0 0.0
    %5259 = vmatprep.subr.mxu0 0.0
    %5260 = vmatpush1.msra.mxu0 0.0
    %5261 = vmatprep.subr.mxu0 0.0
    %5262 = vmatpush1.msra.mxu0 0.0
    %5263 = vmatprep.subr.mxu0 0.0
    %5264 = vmatpush1.msra.mxu0 0.0
    %5265 = vmatprep.subr.mxu0 0.0
    %5266 = vmatpush1.msra.mxu0 0.0
    %5267 = vmatprep.subr.mxu0 0.0
    %5268 = vmatpush1.msra.mxu0 0.0
    %5269 = vmatprep.subr.mxu0 0.0
    %5270 = vmatpush1.msra.mxu0 0.0
    %5271 = vmatprep.subr.mxu0 0.0
    %5272 = vmatpush1.msra.mxu0 0.0
    %5273 = vmatprep.subr.mxu0 0.0
    %5274 = vmatpush1.msra.mxu0 0.0
    %5275 = vmatprep.subr.mxu0 0.0
    %5276 = vmatpush1.msra.mxu0 0.0
    %5277 = vmatprep.subr.mxu0 0.0
    %5278 = vmatpush1.msra.mxu0 0.0
    %5279 = vmatprep.subr.mxu0 0.0
    %5280 = vmatpush1.msra.mxu0 0.0
    %5281 = vmatprep.subr.mxu0 0.0
    %5282 = vmatpush1.msra.mxu0 0.0
    %5283 = vmatprep.subr.mxu0 0.0
    %5284 = vmatpush1.msra.mxu0 0.0
    %5285 = vmatprep.subr.mxu0 0.0
    %5286 = vmatpush1.msra.mxu0 0.0
    %5287 = vmatprep.subr.mxu0 0.0
    %5288 = vmatpush1.msra.mxu0 0.0
    %5289 = vmatprep.mubr.f32.mxu0 0.0
    %5290 = vmatmul.mubr.f32.gmra.mrb[0].mxu0 %v5223
    %v5291 = vpop.f32.mrb[0].mxu0
    %v5292 = vadd.f32 0.0, %v5291
    %v5293 = vpop.f32.mrb[0].mxu0
    %5294 = vdwg.mxu0
    %v5296 = vlaneseq
    %v5297 = vshrl.u32 %v5296, 7
    %v5298 = vsub.s32 0, %v5297
    %v5299 = vrot.slane %v5106, %v5298
    %v5301 = vadd.f32 %v5299, %v5292
    %s5302 = scalar_lea.vmem %s13, 192
    %v5303 = vld [vmem:[%s5302] sm:$0xff]
    %v5304 = vld [vmem:[%s5302 + $0x8] sm:$0xff]
    %v5305 = vld [vmem:[%s5302 + $0x10] sm:$0xff]
    %v5306 = vld [vmem:[%s5302 + $0x18] sm:$0xff]
    %v5307 = vld [vmem:[%s5302 + $0x20] sm:$0xff]
    %v5308 = vld [vmem:[%s5302 + $0x28] sm:$0xff]
    %v5309 = vld [vmem:[%s5302 + $0x30] sm:$0xff]
    %v5310 = vld [vmem:[%s5302 + $0x38] sm:$0xff]
    %v5311 = vld [vmem:[%s5302 + $0x40] sm:$0xff]
    %v5312 = vld [vmem:[%s5302 + $0x48] sm:$0xff]
    %v5313 = vld [vmem:[%s5302 + $0x50] sm:$0xff]
    %v5314 = vld [vmem:[%s5302 + $0x58] sm:$0xff]
    %v5315 = vld [vmem:[%s5302 + $0x60] sm:$0xff]
    %v5316 = vld [vmem:[%s5302 + $0x68] sm:$0xff]
    %v5317 = vld [vmem:[%s5302 + $0x70] sm:$0xff]
    %v5318 = vld [vmem:[%s5302 + $0x78] sm:$0xff]
    %v5319 = vld [vmem:[%s5302 + $0x80] sm:$0xff]
    %v5320 = vld [vmem:[%s5302 + $0x88] sm:$0xff]
    %v5321 = vld [vmem:[%s5302 + $0x90] sm:$0xff]
    %v5322 = vld [vmem:[%s5302 + $0x98] sm:$0xff]
    %v5323 = vld [vmem:[%s5302 + $0xa0] sm:$0xff]
    %v5324 = vld [vmem:[%s5302 + $0xa8] sm:$0xff]
    %v5325 = vld [vmem:[%s5302 + $0xb0] sm:$0xff]
    %v5326 = vld [vmem:[%s5302 + $0xb8] sm:$0xff]
    %5327 = vmatprep.subr.mxu0 0.0
    %5328 = vmatpush1.msra.mxu0 %v5303
    %5329 = vmatprep.subr.mxu0 0.0
    %5330 = vmatpush1.msra.mxu0 %v5304
    %5331 = vmatprep.subr.mxu0 0.0
    %5332 = vmatpush1.msra.mxu0 %v5305
    %5333 = vmatprep.subr.mxu0 0.0
    %5334 = vmatpush1.msra.mxu0 %v5306
    %5335 = vmatprep.subr.mxu0 0.0
    %5336 = vmatpush1.msra.mxu0 %v5307
    %5337 = vmatprep.subr.mxu0 0.0
    %5338 = vmatpush1.msra.mxu0 %v5308
    %5339 = vmatprep.subr.mxu0 0.0
    %5340 = vmatpush1.msra.mxu0 %v5309
    %5341 = vmatprep.subr.mxu0 0.0
    %5342 = vmatpush1.msra.mxu0 %v5310
    %5343 = vmatprep.subr.mxu0 0.0
    %5344 = vmatpush1.msra.mxu0 %v5311
    %5345 = vmatprep.subr.mxu0 0.0
    %5346 = vmatpush1.msra.mxu0 %v5312
    %5347 = vmatprep.subr.mxu0 0.0
    %5348 = vmatpush1.msra.mxu0 %v5313
    %5349 = vmatprep.subr.mxu0 0.0
    %5350 = vmatpush1.msra.mxu0 %v5314
    %5351 = vmatprep.subr.mxu0 0.0
    %5352 = vmatpush1.msra.mxu0 %v5315
    %5353 = vmatprep.subr.mxu0 0.0
    %5354 = vmatpush1.msra.mxu0 %v5316
    %5355 = vmatprep.subr.mxu0 0.0
    %5356 = vmatpush1.msra.mxu0 %v5317
    %5357 = vmatprep.subr.mxu0 0.0
    %5358 = vmatpush1.msra.mxu0 %v5318
    %5359 = vmatprep.subr.mxu0 0.0
    %5360 = vmatpush1.msra.mxu0 %v5319
    %5361 = vmatprep.subr.mxu0 0.0
    %5362 = vmatpush1.msra.mxu0 %v5320
    %5363 = vmatprep.subr.mxu0 0.0
    %5364 = vmatpush1.msra.mxu0 %v5321
    %5365 = vmatprep.subr.mxu0 0.0
    %5366 = vmatpush1.msra.mxu0 %v5322
    %5367 = vmatprep.subr.mxu0 0.0
    %5368 = vmatpush1.msra.mxu0 %v5323
    %5369 = vmatprep.subr.mxu0 0.0
    %5370 = vmatpush1.msra.mxu0 %v5324
    %5371 = vmatprep.subr.mxu0 0.0
    %5372 = vmatpush1.msra.mxu0 %v5325
    %5373 = vmatprep.subr.mxu0 0.0
    %5374 = vmatpush1.msra.mxu0 %v5326
    %5375 = vmatprep.subr.mxu0 0.0
    %5376 = vmatpush1.msra.mxu0 0.0
    %5377 = vmatprep.subr.mxu0 0.0
    %5378 = vmatpush1.msra.mxu0 0.0
    %5379 = vmatprep.subr.mxu0 0.0
    %5380 = vmatpush1.msra.mxu0 0.0
    %5381 = vmatprep.subr.mxu0 0.0
    %5382 = vmatpush1.msra.mxu0 0.0
    %5383 = vmatprep.subr.mxu0 0.0
    %5384 = vmatpush1.msra.mxu0 0.0
    %5385 = vmatprep.subr.mxu0 0.0
    %5386 = vmatpush1.msra.mxu0 0.0
    %5387 = vmatprep.subr.mxu0 0.0
    %5388 = vmatpush1.msra.mxu0 0.0
    %5389 = vmatprep.subr.mxu0 0.0
    %5390 = vmatpush1.msra.mxu0 0.0
    %5391 = vmatprep.mubr.f32.mxu0 %v5132
    %5392 = vmatmul.mubr.f32.gmra.mrb[0].mxu0 %v5100
    %v5393 = vpop.f32.mrb[0].mxu0
    %v5394 = vadd.f32 0.0, %v5393
    %v5395 = vpop.f32.mrb[0].mxu0
    %5396 = vmatprep.mubr.f32.mxu0 %v5135
    %5397 = vmatmul.mubr.f32.gmra.mrb[0].mxu0 %v5102
    %v5398 = vpop.f32.mrb[0].mxu0
    %v5399 = vadd.f32 0.0, %v5398
    %v5400 = vpop.f32.mrb[0].mxu0
    %5401 = vmatprep.mubr.f32.mxu0 %v5138
    %5402 = vmatmul.mubr.f32.gmra.mrb[0].mxu0 %v5104
    %v5403 = vpop.f32.mrb[0].mxu0
    %v5404 = vadd.f32 0.0, %v5403
    %v5405 = vpop.f32.mrb[0].mxu0
    %5406 = vdwg.mxu0
    %s5407 = scalar_lea.vmem %s14, 8
    %v5408 = vld [vmem:[%s5407] sm:$0xff]
    %v5410 = vsel %vm5221, %v5408, 0
    %5412 = vmatprep.subr.mxu0 0.0
    %5413 = vmatpush1.msra.mxu0 %v5394
    %5414 = vmatprep.subr.mxu0 0.0
    %5415 = vmatpush1.msra.mxu0 %v5399
    %5416 = vmatprep.subr.mxu0 0.0
    %5417 = vmatpush1.msra.mxu0 %v5404
    %5418 = vmatprep.subr.mxu0 0.0
    %5419 = vmatpush1.msra.mxu0 0.0
    %5420 = vmatprep.subr.mxu0 0.0
    %5421 = vmatpush1.msra.mxu0 0.0
    %5422 = vmatprep.subr.mxu0 0.0
    %5423 = vmatpush1.msra.mxu0 0.0
    %5424 = vmatprep.subr.mxu0 0.0
    %5425 = vmatpush1.msra.mxu0 0.0
    %5426 = vmatprep.subr.mxu0 0.0
    %5427 = vmatpush1.msra.mxu0 0.0
    %5428 = vmatprep.subr.mxu0 0.0
    %5429 = vmatpush1.msra.mxu0 0.0
    %5430 = vmatprep.subr.mxu0 0.0
    %5431 = vmatpush1.msra.mxu0 0.0
    %5432 = vmatprep.subr.mxu0 0.0
    %5433 = vmatpush1.msra.mxu0 0.0
    %5434 = vmatprep.subr.mxu0 0.0
    %5435 = vmatpush1.msra.mxu0 0.0
    %5436 = vmatprep.subr.mxu0 0.0
    %5437 = vmatpush1.msra.mxu0 0.0
    %5438 = vmatprep.subr.mxu0 0.0
    %5439 = vmatpush1.msra.mxu0 0.0
    %5440 = vmatprep.subr.mxu0 0.0
    %5441 = vmatpush1.msra.mxu0 0.0
    %5442 = vmatprep.subr.mxu0 0.0
    %5443 = vmatpush1.msra.mxu0 0.0
    %5444 = vmatprep.subr.mxu0 0.0
    %5445 = vmatpush1.msra.mxu0 0.0
    %5446 = vmatprep.subr.mxu0 0.0
    %5447 = vmatpush1.msra.mxu0 0.0
    %5448 = vmatprep.subr.mxu0 0.0
    %5449 = vmatpush1.msra.mxu0 0.0
    %5450 = vmatprep.subr.mxu0 0.0
    %5451 = vmatpush1.msra.mxu0 0.0
    %5452 = vmatprep.subr.mxu0 0.0
    %5453 = vmatpush1.msra.mxu0 0.0
    %5454 = vmatprep.subr.mxu0 0.0
    %5455 = vmatpush1.msra.mxu0 0.0
    %5456 = vmatprep.subr.mxu0 0.0
    %5457 = vmatpush1.msra.mxu0 0.0
    %5458 = vmatprep.subr.mxu0 0.0
    %5459 = vmatpush1.msra.mxu0 0.0
    %5460 = vmatprep.subr.mxu0 0.0
    %5461 = vmatpush1.msra.mxu0 0.0
    %5462 = vmatprep.subr.mxu0 0.0
    %5463 = vmatpush1.msra.mxu0 0.0
    %5464 = vmatprep.subr.mxu0 0.0
    %5465 = vmatpush1.msra.mxu0 0.0
    %5466 = vmatprep.subr.mxu0 0.0
    %5467 = vmatpush1.msra.mxu0 0.0
    %5468 = vmatprep.subr.mxu0 0.0
    %5469 = vmatpush1.msra.mxu0 0.0
    %5470 = vmatprep.subr.mxu0 0.0
    %5471 = vmatpush1.msra.mxu0 0.0
    %5472 = vmatprep.subr.mxu0 0.0
    %5473 = vmatpush1.msra.mxu0 0.0
    %5474 = vmatprep.subr.mxu0 0.0
    %5475 = vmatpush1.msra.mxu0 0.0
    %5476 = vmatprep.mubr.f32.mxu0 0.0
    %5477 = vmatmul.mubr.f32.gmra.mrb[0].mxu0 %v5410
    %v5478 = vpop.f32.mrb[0].mxu0
    %v5479 = vadd.f32 0.0, %v5478
    %v5480 = vpop.f32.mrb[0].mxu0
    %5481 = vdwg.mxu0
    %v5482 = vadd.f32 %v5301, %v5479
    %s5483 = scalar_lea.vmem %s13, 384
    %v5484 = vld [vmem:[%s5483] sm:$0xff]
    %v5485 = vld [vmem:[%s5483 + $0x8] sm:$0xff]
    %v5486 = vld [vmem:[%s5483 + $0x10] sm:$0xff]
    %v5487 = vld [vmem:[%s5483 + $0x18] sm:$0xff]
    %v5488 = vld [vmem:[%s5483 + $0x20] sm:$0xff]
    %v5489 = vld [vmem:[%s5483 + $0x28] sm:$0xff]
    %v5490 = vld [vmem:[%s5483 + $0x30] sm:$0xff]
    %v5491 = vld [vmem:[%s5483 + $0x38] sm:$0xff]
    %v5492 = vld [vmem:[%s5483 + $0x40] sm:$0xff]
    %v5493 = vld [vmem:[%s5483 + $0x48] sm:$0xff]
    %v5494 = vld [vmem:[%s5483 + $0x50] sm:$0xff]
    %v5495 = vld [vmem:[%s5483 + $0x58] sm:$0xff]
    %v5496 = vld [vmem:[%s5483 + $0x60] sm:$0xff]
    %v5497 = vld [vmem:[%s5483 + $0x68] sm:$0xff]
    %v5498 = vld [vmem:[%s5483 + $0x70] sm:$0xff]
    %v5499 = vld [vmem:[%s5483 + $0x78] sm:$0xff]
    %v5500 = vld [vmem:[%s5483 + $0x80] sm:$0xff]
    %v5501 = vld [vmem:[%s5483 + $0x88] sm:$0xff]
    %v5502 = vld [vmem:[%s5483 + $0x90] sm:$0xff]
    %v5503 = vld [vmem:[%s5483 + $0x98] sm:$0xff]
    %v5504 = vld [vmem:[%s5483 + $0xa0] sm:$0xff]
    %v5505 = vld [vmem:[%s5483 + $0xa8] sm:$0xff]
    %v5506 = vld [vmem:[%s5483 + $0xb0] sm:$0xff]
    %v5507 = vld [vmem:[%s5483 + $0xb8] sm:$0xff]
    %5508 = vmatprep.subr.mxu0 0.0
    %5509 = vmatpush1.msra.mxu0 %v5484
    %5510 = vmatprep.subr.mxu0 0.0
    %5511 = vmatpush1.msra.mxu0 %v5485
    %5512 = vmatprep.subr.mxu0 0.0
    %5513 = vmatpush1.msra.mxu0 %v5486
    %5514 = vmatprep.subr.mxu0 0.0
    %5515 = vmatpush1.msra.mxu0 %v5487
    %5516 = vmatprep.subr.mxu0 0.0
    %5517 = vmatpush1.msra.mxu0 %v5488
    %5518 = vmatprep.subr.mxu0 0.0
    %5519 = vmatpush1.msra.mxu0 %v5489
    %5520 = vmatprep.subr.mxu0 0.0
    %5521 = vmatpush1.msra.mxu0 %v5490
    %5522 = vmatprep.subr.mxu0 0.0
    %5523 = vmatpush1.msra.mxu0 %v5491
    %5524 = vmatprep.subr.mxu0 0.0
    %5525 = vmatpush1.msra.mxu0 %v5492
    %5526 = vmatprep.subr.mxu0 0.0
    %5527 = vmatpush1.msra.mxu0 %v5493
    %5528 = vmatprep.subr.mxu0 0.0
    %5529 = vmatpush1.msra.mxu0 %v5494
    %5530 = vmatprep.subr.mxu0 0.0
    %5531 = vmatpush1.msra.mxu0 %v5495
    %5532 = vmatprep.subr.mxu0 0.0
    %5533 = vmatpush1.msra.mxu0 %v5496
    %5534 = vmatprep.subr.mxu0 0.0
    %5535 = vmatpush1.msra.mxu0 %v5497
    %5536 = vmatprep.subr.mxu0 0.0
    %5537 = vmatpush1.msra.mxu0 %v5498
    %5538 = vmatprep.subr.mxu0 0.0
    %5539 = vmatpush1.msra.mxu0 %v5499
    %5540 = vmatprep.subr.mxu0 0.0
    %5541 = vmatpush1.msra.mxu0 %v5500
    %5542 = vmatprep.subr.mxu0 0.0
    %5543 = vmatpush1.msra.mxu0 %v5501
    %5544 = vmatprep.subr.mxu0 0.0
    %5545 = vmatpush1.msra.mxu0 %v5502
    %5546 = vmatprep.subr.mxu0 0.0
    %5547 = vmatpush1.msra.mxu0 %v5503
    %5548 = vmatprep.subr.mxu0 0.0
    %5549 = vmatpush1.msra.mxu0 %v5504
    %5550 = vmatprep.subr.mxu0 0.0
    %5551 = vmatpush1.msra.mxu0 %v5505
    %5552 = vmatprep.subr.mxu0 0.0
    %5553 = vmatpush1.msra.mxu0 %v5506
    %5554 = vmatprep.subr.mxu0 0.0
    %5555 = vmatpush1.msra.mxu0 %v5507
    %5556 = vmatprep.subr.mxu0 0.0
    %5557 = vmatpush1.msra.mxu0 0.0
    %5558 = vmatprep.subr.mxu0 0.0
    %5559 = vmatpush1.msra.mxu0 0.0
    %5560 = vmatprep.subr.mxu0 0.0
    %5561 = vmatpush1.msra.mxu0 0.0
    %5562 = vmatprep.subr.mxu0 0.0
    %5563 = vmatpush1.msra.mxu0 0.0
    %5564 = vmatprep.subr.mxu0 0.0
    %5565 = vmatpush1.msra.mxu0 0.0
    %5566 = vmatprep.subr.mxu0 0.0
    %5567 = vmatpush1.msra.mxu0 0.0
    %5568 = vmatprep.subr.mxu0 0.0
    %5569 = vmatpush1.msra.mxu0 0.0
    %5570 = vmatprep.subr.mxu0 0.0
    %5571 = vmatpush1.msra.mxu0 0.0
    %5572 = vmatprep.mubr.f32.mxu0 %v5132
    %5573 = vmatmul.mubr.f32.gmra.mrb[0].mxu0 %v5100
    %v5574 = vpop.f32.mrb[0].mxu0
    %v5575 = vadd.f32 0.0, %v5574
    %v5576 = vpop.f32.mrb[0].mxu0
    %5577 = vmatprep.mubr.f32.mxu0 %v5135
    %5578 = vmatmul.mubr.f32.gmra.mrb[0].mxu0 %v5102
    %v5579 = vpop.f32.mrb[0].mxu0
    %v5580 = vadd.f32 0.0, %v5579
    %v5581 = vpop.f32.mrb[0].mxu0
    %5582 = vmatprep.mubr.f32.mxu0 %v5138
    %5583 = vmatmul.mubr.f32.gmra.mrb[0].mxu0 %v5104
    %v5584 = vpop.f32.mrb[0].mxu0
    %v5585 = vadd.f32 0.0, %v5584
    %v5586 = vpop.f32.mrb[0].mxu0
    %5587 = vdwg.mxu0
    %s5588 = scalar_lea.vmem %s14, 16
    %v5589 = vld [vmem:[%s5588] sm:$0xff]
    %v5591 = vsel %vm5221, %v5589, 0
    %5593 = vmatprep.subr.mxu0 0.0
    %5594 = vmatpush1.msra.mxu0 %v5575
    %5595 = vmatprep.subr.mxu0 0.0
    %5596 = vmatpush1.msra.mxu0 %v5580
    %5597 = vmatprep.subr.mxu0 0.0
    %5598 = vmatpush1.msra.mxu0 %v5585
    %5599 = vmatprep.subr.mxu0 0.0
    %5600 = vmatpush1.msra.mxu0 0.0
    %5601 = vmatprep.subr.mxu0 0.0
    %5602 = vmatpush1.msra.mxu0 0.0
    %5603 = vmatprep.subr.mxu0 0.0
    %5604 = vmatpush1.msra.mxu0 0.0
    %5605 = vmatprep.subr.mxu0 0.0
    %5606 = vmatpush1.msra.mxu0 0.0
    %5607 = vmatprep.subr.mxu0 0.0
    %5608 = vmatpush1.msra.mxu0 0.0
    %5609 = vmatprep.subr.mxu0 0.0
    %5610 = vmatpush1.msra.mxu0 0.0
    %5611 = vmatprep.subr.mxu0 0.0
    %5612 = vmatpush1.msra.mxu0 0.0
    %5613 = vmatprep.subr.mxu0 0.0
    %5614 = vmatpush1.msra.mxu0 0.0
    %5615 = vmatprep.subr.mxu0 0.0
    %5616 = vmatpush1.msra.mxu0 0.0
    %5617 = vmatprep.subr.mxu0 0.0
    %5618 = vmatpush1.msra.mxu0 0.0
    %5619 = vmatprep.subr.mxu0 0.0
    %5620 = vmatpush1.msra.mxu0 0.0
    %5621 = vmatprep.subr.mxu0 0.0
    %5622 = vmatpush1.msra.mxu0 0.0
    %5623 = vmatprep.subr.mxu0 0.0
    %5624 = vmatpush1.msra.mxu0 0.0
    %5625 = vmatprep.subr.mxu0 0.0
    %5626 = vmatpush1.msra.mxu0 0.0
    %5627 = vmatprep.subr.mxu0 0.0
    %5628 = vmatpush1.msra.mxu0 0.0
    %5629 = vmatprep.subr.mxu0 0.0
    %5630 = vmatpush1.msra.mxu0 0.0
    %5631 = vmatprep.subr.mxu0 0.0
    %5632 = vmatpush1.msra.mxu0 0.0
    %5633 = vmatprep.subr.mxu0 0.0
    %5634 = vmatpush1.msra.mxu0 0.0
    %5635 = vmatprep.subr.mxu0 0.0
    %5636 = vmatpush1.msra.mxu0 0.0
    %5637 = vmatprep.subr.mxu0 0.0
    %5638 = vmatpush1.msra.mxu0 0.0
    %5639 = vmatprep.subr.mxu0 0.0
    %5640 = vmatpush1.msra.mxu0 0.0
    %5641 = vmatprep.subr.mxu0 0.0
    %5642 = vmatpush1.msra.mxu0 0.0
    %5643 = vmatprep.subr.mxu0 0.0
    %5644 = vmatpush1.msra.mxu0 0.0
    %5645 = vmatprep.subr.mxu0 0.0
    %5646 = vmatpush1.msra.mxu0 0.0
    %5647 = vmatprep.subr.mxu0 0.0
    %5648 = vmatpush1.msra.mxu0 0.0
    %5649 = vmatprep.subr.mxu0 0.0
    %5650 = vmatpush1.msra.mxu0 0.0
    %5651 = vmatprep.subr.mxu0 0.0
    %5652 = vmatpush1.msra.mxu0 0.0
    %5653 = vmatprep.subr.mxu0 0.0
    %5654 = vmatpush1.msra.mxu0 0.0
    %5655 = vmatprep.subr.mxu0 0.0
    %5656 = vmatpush1.msra.mxu0 0.0
    %5657 = vmatprep.mubr.f32.mxu0 0.0
    %5658 = vmatmul.mubr.f32.gmra.mrb[0].mxu0 %v5591
    %v5659 = vpop.f32.mrb[0].mxu0
    %v5660 = vadd.f32 0.0, %v5659
    %v5661 = vpop.f32.mrb[0].mxu0
    %5662 = vdwg.mxu0
    %v5663 = vadd.f32 %v5482, %v5660
    %v5664 = vmul.f32 %v5663, 0.5
    %v5665 = vtanh.pop %v5664
    %v5666 = vadd.f32 %v5665, 1.0
    %v5667 = vmul.f32 %v5666, 0.5
    %vm5668 = vcmask 80896
    %5669 = vst.msk [vmem:[%s16] sm:$0xff] %vm5668, %v5667
    // Predicated region
    $region70: #{conv_stack_model.1} parent=1 // pred_check
      _
    $region71: #{conv_stack_model.1} parent=1 // pred_check_branch
      %5671 = sbr.rel (0) target = $region73
    $region72: #{conv_stack_model.1} parent=1 // pred_region
      _
    $region73: #{conv_stack_model.1} parent=1 // pred_fallthru
      _
    // Predicated region
    $region74: #{conv_stack_model.1} parent=1 // pred_check
      _
    $region75: #{conv_stack_model.1} parent=1 // pred_check_branch
      %5673 = sbr.rel (0) target = $region77
    $region76: #{conv_stack_model.1} parent=1 // pred_region
      _
    $region77: #{conv_stack_model.1} parent=1 // pred_fallthru
      _
    %5674 = vsyncpa [#allocation3], 1

</llo_original>
